<compile_context>
chip_gen: v6e
topology: v6e:2x2x1
jax: 0.10.0
libtpu: 0.0.40
codegen_flags: <defaults>
</compile_context>

<pallas_src>
import functools

import jax
import jax.numpy as jnp
import numpy as np
from jax import lax
from jax.experimental import pallas as pl
from jax.experimental.pallas import tpu as pltpu

# ----------------------------- model config ---------------------------------
VOCAB = 32
SEQ = 8              # sequence length
HID = 32             # real hidden size
FFN = 64             # real feed-forward size
HP = 128             # hidden size padded to one full lane tile
FP = 128             # FFN size padded to one full lane tile
LN_EPS = 1e-12
NEG_INF = -1e9
N_VEC_ROWS = 16      # static rows of the packed bias/LN tile (10 used, rest zero)
_MASK_ROW0 = N_VEC_ROWS   # per-example additive key-mask rows start here


# ----------------------------- Pallas kernel --------------------------------
def _biencoder_kernel(x_ref, wqkv_ref, wo_ref, w1_ref, w2_ref, vec_ref, out_ref,
                      *, b_pad, rep_pos_q):
    """Both BiEncoder sub-encoders in ONE kernel step (static trip-2 loop).

    x_ref:    (2, b_pad*SEQ, HP)  flattened, lane-padded embeddings per encoder
    wqkv_ref: (2, HP, 3*HP)       fused, lane-padded Q|K|V projection
    wo_ref:   (2, HP, HP)         output projection
    w1_ref:   (2, HP, FP)         FFN in
    w2_ref:   (2, FP, HP)         FFN out
    vec_ref:  (2, 16 + b_pad, 128) rows 0..9 = [b_q,b_k,b_v,b_o,ln1_g,ln1_b,b1,b2,
                                    ln2_g,ln2_b]; rows 16.. = per-example additive
                                    key masks (first SEQ lanes).
    out_ref:  (2, b_pad, HP)      pooled (rep_pos / CLS) vectors, lane-dense.
    """
    inv_h = 1.0 / HID
    scale = HID ** -0.5
    # encoder 0 = question (pools rep_pos_q); encoder 1 = ctx (pools CLS = 0)
    for e, rep_pos in ((0, rep_pos_q), (1, 0)):
        x = x_ref[e]                                           # (BS, HP)

        # ---- fused QKV projection: one lane-dense (BS,128)x(128,384) MXU matmul ----
        qkv = jnp.dot(x, wqkv_ref[e], preferred_element_type=jnp.float32)
        q = qkv[:, 0 * HP:1 * HP] + vec_ref[e, 0:1, :]
        k = qkv[:, 1 * HP:2 * HP] + vec_ref[e, 1:2, :]
        v = qkv[:, 2 * HP:3 * HP] + vec_ref[e, 2:3, :]

        # ---- per-example attention (no flattened O(B^2 S^2) scores) ----
        qb = q.reshape(b_pad, SEQ, HP)
        kb = k.reshape(b_pad, SEQ, HP)
        vb = v.reshape(b_pad, SEQ, HP)
        scores = jnp.einsum("bqd,bkd->bqk", qb, kb,
                            preferred_element_type=jnp.float32) * scale
        add_mask = vec_ref[e, _MASK_ROW0:_MASK_ROW0 + b_pad, 0:SEQ]   # (b_pad, SEQ)
        scores = scores + add_mask[:, None, :]
        scores = scores - jnp.max(scores, axis=-1, keepdims=True)
        p = jnp.exp(scores)
        p = p / jnp.sum(p, axis=-1, keepdims=True)
        ctx = jnp.einsum("bqk,bkd->bqd", p, vb,
                         preferred_element_type=jnp.float32)

        attn = (jnp.dot(ctx.reshape(b_pad * SEQ, HP), wo_ref[e],
                        preferred_element_type=jnp.float32) + vec_ref[e, 3:4, :])

        # ---- residual + LN1 (stats over the HID real lanes; pad lanes are zero) ----
        h = x + attn
        mu = jnp.sum(h, axis=-1, keepdims=True) * inv_h
        var = jnp.sum(h * h, axis=-1, keepdims=True) * inv_h - mu * mu
        h = (h - mu) * lax.rsqrt(var + LN_EPS) * vec_ref[e, 4:5, :] + vec_ref[e, 5:6, :]

        # ---- feed-forward ----
        f = jnp.dot(h, w1_ref[e], preferred_element_type=jnp.float32) + vec_ref[e, 6:7, :]
        f = jax.nn.gelu(f)   # TODO(synk): tanh-approx GELU (HF BERT uses exact erf)
        f = jnp.dot(f, w2_ref[e], preferred_element_type=jnp.float32) + vec_ref[e, 7:8, :]

        # ---- residual + LN2 ----
        h2 = h + f
        mu2 = jnp.sum(h2, axis=-1, keepdims=True) * inv_h
        var2 = jnp.sum(h2 * h2, axis=-1, keepdims=True) * inv_h - mu2 * mu2
        out = ((h2 - mu2) * lax.rsqrt(var2 + LN_EPS)
               * vec_ref[e, 8:9, :] + vec_ref[e, 9:10, :])

        # ---- pooled (rep_pos / CLS) rows only: lane-dense (b_pad, 128) store ----
        out3 = out.reshape(b_pad, SEQ, HP)
        pos = lax.broadcasted_iota(jnp.int32, (b_pad, SEQ, HP), 1)
        out_ref[e] = jnp.sum(jnp.where(pos == rep_pos, out3, 0.0), axis=1)


def _fused_biencoder(x, wqkv, wo, w1, w2, vecs, *, b_pad, rep_pos_q):
    """One pallas_call, one grid step, both encoders."""
    kernel = functools.partial(_biencoder_kernel, b_pad=b_pad, rep_pos_q=rep_pos_q)
    n_rows = vecs.shape[1]
    grid_spec = pltpu.PrefetchScalarGridSpec(
        num_scalar_prefetch=0,
        grid=(1,),
        in_specs=[
            pl.BlockSpec((2, b_pad * SEQ, HP), lambda i: (0, 0, 0)),   # x (flattened)
            pl.BlockSpec((2, HP, 3 * HP), lambda i: (0, 0, 0)),        # fused wqkv
            pl.BlockSpec((2, HP, HP), lambda i: (0, 0, 0)),            # wo
            pl.BlockSpec((2, HP, FP), lambda i: (0, 0, 0)),            # w1
            pl.BlockSpec((2, FP, HP), lambda i: (0, 0, 0)),            # w2
            pl.BlockSpec((2, n_rows, 128), lambda i: (0, 0, 0)),       # biases/LN + mask
        ],
        out_specs=pl.BlockSpec((2, b_pad, HP), lambda i: (0, 0, 0)),
    )
    return pl.pallas_call(
        kernel,
        out_shape=jax.ShapeDtypeStruct((2, b_pad, HP), jnp.float32),
        grid_spec=grid_spec,
        compiler_params=pltpu.CompilerParams(
            dimension_semantics=("arbitrary",)),
    )(x, wqkv, wo, w1, w2, vecs)


# ----------------------------- synthetic encoder params ---------------------
def init_encoder_params(key):
    ks = jax.random.split(key, 9)
    s = 0.02
    return {
        "tok_emb": jax.random.normal(ks[0], (VOCAB, HID), jnp.float32) * s,
        "seg_emb": jax.random.normal(ks[1], (2, HID), jnp.float32) * s,
        "pos_emb": jax.random.normal(ks[2], (SEQ, HID), jnp.float32) * s,
        "wq": jax.random.normal(ks[3], (HID, HID), jnp.float32) * s,
        "bq": jnp.zeros((HID,), jnp.float32),
        "wk": jax.random.normal(ks[4], (HID, HID), jnp.float32) * s,
        "bk": jnp.zeros((HID,), jnp.float32),
        "wv": jax.random.normal(ks[5], (HID, HID), jnp.float32) * s,
        "bv": jnp.zeros((HID,), jnp.float32),
        "wo": jax.random.normal(ks[6], (HID, HID), jnp.float32) * s,
        "bo": jnp.zeros((HID,), jnp.float32),
        "ln1_g": jnp.ones((HID,), jnp.float32),
        "ln1_b": jnp.zeros((HID,), jnp.float32),
        "w1": jax.random.normal(ks[7], (HID, FFN), jnp.float32) * s,
        "b1": jnp.zeros((FFN,), jnp.float32),
        "w2": jax.random.normal(ks[8], (FFN, HID), jnp.float32) * s,
        "b2": jnp.zeros((HID,), jnp.float32),
        "ln2_g": jnp.ones((HID,), jnp.float32),
        "ln2_b": jnp.zeros((HID,), jnp.float32),
    }


def _pad2(w, rows, cols):
    return jnp.pad(w, ((0, rows - w.shape[0]), (0, cols - w.shape[1])))


def _pad_row(v, lanes=128):
    v = v.reshape(1, -1)
    return jnp.pad(v, ((0, 0), (0, lanes - v.shape[1])))


def pack_encoder_params(p):
    """Fuse QKV, zero-pad every matrix/vector to lane-dense (128-multiple) widths."""
    w_qkv = jnp.concatenate([_pad2(p["wq"], HP, HP),
                             _pad2(p["wk"], HP, HP),
                             _pad2(p["wv"], HP, HP)], axis=1)          # (HP, 3HP)
    rows = [_pad_row(p["bq"]), _pad_row(p["bk"]), _pad_row(p["bv"]),
            _pad_row(p["bo"]), _pad_row(p["ln1_g"]), _pad_row(p["ln1_b"]),
            _pad_row(p["b1"]), _pad_row(p["b2"]),
            _pad_row(p["ln2_g"]), _pad_row(p["ln2_b"])]
    vecs = jnp.concatenate(
        rows + [jnp.zeros((N_VEC_ROWS - len(rows), 128), jnp.float32)], axis=0)
    return {
        "tok_emb": _pad2(p["tok_emb"], VOCAB, HP),
        "seg_emb": _pad2(p["seg_emb"], 2, HP),
        "pos_emb": _pad2(p["pos_emb"], SEQ, HP),
        "w_qkv": w_qkv,
        "w_o": _pad2(p["wo"], HP, HP),
        "w1": _pad2(p["w1"], HP, FP),
        "w2": _pad2(p["w2"], FP, HP),
        "vecs": vecs,
    }


def stack_packed(q_packed, c_packed):
    return {k: jnp.stack([q_packed[k], c_packed[k]]) for k in q_packed}


# ----------------------------- jitted forward -------------------------------
@functools.partial(jax.jit, static_argnames=("rep_pos",))
def _biencoder_forward(stacked, q_ids, q_segs, q_mask, c_ids, c_segs, c_mask,
                       *, rep_pos=0):
    """Embedding glue + one fused Pallas call covering both encoders."""
    b_q, b_c = q_ids.shape[0], c_ids.shape[0]
    b_pad = ((max(b_q, b_c) + 7) // 8) * 8   # sublane-aligned common batch
    # TODO(synk): b_pad is resolved at trace time, so each distinct (B_Q, B_C) bucket
    # triggers one recompile (static-shape requirement, same as before).
    assert SEQ <= 128, "per-example key mask row must fit in one 128-lane row"

    def embed_and_pad(ids, segs, e):
        tok = jnp.take(stacked["tok_emb"][e], ids, axis=0)     # (B, S, HP)
        seg = jnp.take(stacked["seg_emb"][e], segs, axis=0)
        x = tok + seg + stacked["pos_emb"][e][None]
        return jnp.pad(x, ((0, b_pad - ids.shape[0]), (0, 0), (0, 0)))

    x = jnp.stack([embed_and_pad(q_ids, q_segs, 0),
                   embed_and_pad(c_ids, c_segs, 1)])           # (2, b_pad, SEQ, HP)
    x = x.reshape(2, b_pad * SEQ, HP)

    def mask_block(m01):
        m = jnp.pad(m01.astype(jnp.float32), ((0, b_pad - m01.shape[0]), (0, 0)))
        add = (1.0 - m) * NEG_INF                              # (b_pad, SEQ)
        return jnp.pad(add, ((0, 0), (0, 128 - SEQ)))          # lane-pad to 128

    masks = jnp.stack([mask_block(q_mask), mask_block(c_mask)])   # (2, b_pad, 128)
    vecs = jnp.concatenate([stacked["vecs"], masks], axis=1)      # (2, 16+b_pad, 128)

    pooled = _fused_biencoder(x, stacked["w_qkv"], stacked["w_o"],
                              stacked["w1"], stacked["w2"], vecs,
                              b_pad=b_pad, rep_pos_q=rep_pos)
    return pooled[0, :b_q, :HID], pooled[1, :b_c, :HID]


def _dummy_inputs():
    z = jnp.zeros((1, SEQ), jnp.int32)
    return z, z, jnp.ones((1, SEQ), jnp.int32)


# ----------------------------- BiEncoder ------------------------------------
class BiEncoder:
    """JAX/Pallas port of dpr.models.biencoder.BiEncoder forward semantics."""

    def __init__(self, question_params, ctx_params,
                 fix_q_encoder=False, fix_ctx_encoder=False):
        self._packed = {"question": pack_encoder_params(question_params),
                        "ctx": pack_encoder_params(ctx_params)}
        self._stacked_cache = {}
        self._get_stacked("question", "ctx")   # default stack pre-built once
        self.fix_q_encoder = fix_q_encoder
        self.fix_ctx_encoder = fix_ctx_encoder
        # TODO(synk): fix_*_encoder / torch.no_grad gradient gating has no Pallas
        # equivalent in this inference-only port.

    def _get_stacked(self, q_name, c_name):
        key = (q_name, c_name)
        if key not in self._stacked_cache:
            self._stacked_cache[key] = stack_packed(self._packed[q_name],
                                                    self._packed[c_name])
        return self._stacked_cache[key]

    def forward(self, question_ids, question_segments, question_attn_mask,
                context_ids, ctx_segments, ctx_attn_mask,
                encoder_type=None, representation_token_pos=0,
                output_hidden_states=False):
        # TODO(synk): output_hidden_states / full sequence outputs are not
        # materialized; hidden states are returned as None (forward() discards them).
        q_name = ("question" if encoder_type is None or encoder_type == "question"
                  else "ctx")
        c_name = ("ctx" if encoder_type is None or encoder_type == "ctx"
                  else "question")
        stacked = self._get_stacked(q_name, c_name)

        q_none = question_ids is None
        c_none = context_ids is None
        if q_none and c_none:
            return None, None, None
        if q_none:
            question_ids, question_segments, question_attn_mask = _dummy_inputs()
        if c_none:
            context_ids, ctx_segments, ctx_attn_mask = _dummy_inputs()

        q_pooled, c_pooled = _biencoder_forward(
            stacked, question_ids, question_segments, question_attn_mask,
            context_ids, ctx_segments, ctx_attn_mask,
            rep_pos=int(representation_token_pos))
        return (None if q_none else q_pooled,
                None if c_none else c_pooled,
                None)


# ----------------------------- pure-JAX reference ---------------------------
def _reference_encoder(p, ids, segs, mask01, rep_pos):
    x = p["tok_emb"][ids] + p["seg_emb"][segs] + p["pos_emb"][None]      # (B,S,H)
    q = x @ p["wq"] + p["bq"]
    k = x @ p["wk"] + p["bk"]
    v = x @ p["wv"] + p["bv"]
    scores = jnp.einsum("bqd,bkd->bqk", q, k) * (HID ** -0.5)
    scores = scores + ((1.0 - mask01.astype(jnp.float32)) * NEG_INF)[:, None, :]
    attn = jnp.einsum("bqk,bkd->bqd", jax.nn.softmax(scores, axis=-1), v)
    attn = attn @ p["wo"] + p["bo"]
    h = x + attn
    mu = h.mean(-1, keepdims=True)
    var = (h * h).mean(-1, keepdims=True) - mu * mu
    h = (h - mu) * lax.rsqrt(var + LN_EPS) * p["ln1_g"] + p["ln1_b"]
    f = jax.nn.gelu(h @ p["w1"] + p["b1"]) @ p["w2"] + p["b2"]
    h2 = h + f
    mu2 = h2.mean(-1, keepdims=True)
    var2 = (h2 * h2).mean(-1, keepdims=True) - mu2 * mu2
    out = (h2 - mu2) * lax.rsqrt(var2 + LN_EPS) * p["ln2_g"] + p["ln2_b"]
    return out[:, rep_pos, :]


# ----------------------------- demo ------------------------------------------
if __name__ == "__main__":
    key = jax.random.PRNGKey(0)
    k_q, k_c, k_ids_q, k_ids_c = jax.random.split(key, 4)

    q_raw = init_encoder_params(k_q)
    c_raw = init_encoder_params(k_c)
    biencoder = BiEncoder(q_raw, c_raw)

    B_Q = 2          # questions
    B_C = 4          # contexts (e.g. 1 positive + 1 hard negative per question)

    question_ids = jax.random.randint(k_ids_q, (B_Q, SEQ), 0, VOCAB, jnp.int32)
    context_ids = jax.random.randint(k_ids_c, (B_C, SEQ), 0, VOCAB, jnp.int32)
    question_segments = jnp.zeros((B_Q, SEQ), jnp.int32)
    ctx_segments = jnp.zeros((B_C, SEQ), jnp.int32)
    question_attn_mask = jnp.concatenate(
        [jnp.ones((B_Q, SEQ - 2), jnp.int32), jnp.zeros((B_Q, 2), jnp.int32)], axis=1)
    ctx_attn_mask = jnp.concatenate(
        [jnp.ones((B_C, SEQ - 1), jnp.int32), jnp.zeros((B_C, 1), jnp.int32)], axis=1)

    q_pooled, ctx_pooled, q_hidden = biencoder.forward(
        question_ids, question_segments, question_attn_mask,
        context_ids, ctx_segments, ctx_attn_mask)

    jax.block_until_ready(q_pooled)
    jax.block_until_ready(ctx_pooled)

    assert q_pooled.shape == (B_Q, HID)
    assert ctx_pooled.shape == (B_C, HID)
    assert q_hidden is None
    assert bool(jnp.all(jnp.isfinite(q_pooled)))
    assert bool(jnp.all(jnp.isfinite(ctx_pooled)))

    # correctness check vs. a pure-JAX reference of the same synthetic encoder
    with jax.default_matmul_precision("highest"):
        ref_q = _reference_encoder(q_raw, question_ids, question_segments,
                                   question_attn_mask, 0)
        ref_c = _reference_encoder(c_raw, context_ids, ctx_segments,
                                   ctx_attn_mask, 0)
    np.testing.assert_allclose(np.asarray(q_pooled), np.asarray(ref_q),
                               rtol=5e-3, atol=5e-4)
    np.testing.assert_allclose(np.asarray(ctx_pooled), np.asarray(ref_c),
                               rtol=5e-3, atol=5e-4)

    print("KERNEL_OK")
</pallas_src>

<mosaic_0001>
module attributes {stable_mosaic.version = 11 : i64} {
  func.func @_biencoder_kernel(%arg0: i32, %arg1: memref<2x64x128xf32, #tpu.memory_space<vmem>>, %arg2: memref<2x128x384xf32, #tpu.memory_space<vmem>>, %arg3: memref<2x128x128xf32, #tpu.memory_space<vmem>>, %arg4: memref<2x128x128xf32, #tpu.memory_space<vmem>>, %arg5: memref<2x128x128xf32, #tpu.memory_space<vmem>>, %arg6: memref<2x24x128xf32, #tpu.memory_space<vmem>>, %arg7: memref<2x8x128xf32, #tpu.memory_space<vmem>>) attributes {dimension_semantics = [#tpu.dimension_semantics<arbitrary>], iteration_bounds = array<i64: 1>, scalar_prefetch = 0 : i64, scratch_operands = 0 : i64, tpu.core_type = #tpu.core_type<tc>, window_params = [{pipeline_mode = #tpu.pipeline_mode<synchronous>, transform_indices = @transform_0, window_bounds = array<i64: 2, 64, 128>}, {pipeline_mode = #tpu.pipeline_mode<synchronous>, transform_indices = @transform_1, window_bounds = array<i64: 2, 128, 384>}, {pipeline_mode = #tpu.pipeline_mode<synchronous>, transform_indices = @transform_2, window_bounds = array<i64: 2, 128, 128>}, {pipeline_mode = #tpu.pipeline_mode<synchronous>, transform_indices = @transform_3, window_bounds = array<i64: 2, 128, 128>}, {pipeline_mode = #tpu.pipeline_mode<synchronous>, transform_indices = @transform_4, window_bounds = array<i64: 2, 128, 128>}, {pipeline_mode = #tpu.pipeline_mode<synchronous>, transform_indices = @transform_5, window_bounds = array<i64: 2, 24, 128>}, {pipeline_mode = #tpu.pipeline_mode<synchronous>, transform_indices = @transform_6, window_bounds = array<i64: 2, 8, 128>}]} {
    %c0 = arith.constant 0 : index
    %c0_0 = arith.constant 0 : index
    %c0_1 = arith.constant 0 : index
    %0 = vector.load %arg1[%c0, %c0_0, %c0_1] : memref<2x64x128xf32, #tpu.memory_space<vmem>>, vector<1x64x128xf32>
    %1 = vector.shape_cast %0 : vector<1x64x128xf32> to vector<64x128xf32>
    %c0_2 = arith.constant 0 : index
    %c0_3 = arith.constant 0 : index
    %c0_4 = arith.constant 0 : index
    %2 = vector.load %arg2[%c0_2, %c0_3, %c0_4] : memref<2x128x384xf32, #tpu.memory_space<vmem>>, vector<1x128x384xf32>
    %3 = vector.shape_cast %2 : vector<1x128x384xf32> to vector<128x384xf32>
    %cst = arith.constant dense<0.000000e+00> : vector<64x384xf32>
    %4 = tpu.matmul %1, %3, %cst {dimension_numbers = #tpu.dot_dimension_numbers<[1], [0], [0], [1], [0, 0, 1, 1], [], []>} : vector<64x128xf32>, vector<128x384xf32>, vector<64x384xf32> -> vector<64x384xf32>
    %5 = vector.extract_strided_slice %4 {offsets = [0, 0], sizes = [64, 128], strides = [1, 1]} : vector<64x384xf32> to vector<64x128xf32>
    %c0_5 = arith.constant 0 : index
    %c0_6 = arith.constant 0 : index
    %c0_7 = arith.constant 0 : index
    %6 = vector.load %arg6[%c0_5, %c0_6, %c0_7] : memref<2x24x128xf32, #tpu.memory_space<vmem>>, vector<1x1x128xf32>
    %7 = vector.shape_cast %6 : vector<1x1x128xf32> to vector<1x128xf32>
    %8 = vector.broadcast %7 : vector<1x128xf32> to vector<64x128xf32>
    %9 = arith.addf %5, %8 : vector<64x128xf32>
    %10 = vector.extract_strided_slice %4 {offsets = [0, 128], sizes = [64, 128], strides = [1, 1]} : vector<64x384xf32> to vector<64x128xf32>
    %c0_8 = arith.constant 0 : index
    %c1 = arith.constant 1 : index
    %c0_9 = arith.constant 0 : index
    %11 = vector.load %arg6[%c0_8, %c1, %c0_9] : memref<2x24x128xf32, #tpu.memory_space<vmem>>, vector<1x1x128xf32>
    %12 = vector.shape_cast %11 : vector<1x1x128xf32> to vector<1x128xf32>
    %13 = vector.broadcast %12 : vector<1x128xf32> to vector<64x128xf32>
    %14 = arith.addf %10, %13 : vector<64x128xf32>
    %15 = vector.extract_strided_slice %4 {offsets = [0, 256], sizes = [64, 128], strides = [1, 1]} : vector<64x384xf32> to vector<64x128xf32>
    %c0_10 = arith.constant 0 : index
    %c2 = arith.constant 2 : index
    %c0_11 = arith.constant 0 : index
    %16 = vector.load %arg6[%c0_10, %c2, %c0_11] : memref<2x24x128xf32, #tpu.memory_space<vmem>>, vector<1x1x128xf32>
    %17 = vector.shape_cast %16 : vector<1x1x128xf32> to vector<1x128xf32>
    %18 = vector.broadcast %17 : vector<1x128xf32> to vector<64x128xf32>
    %19 = arith.addf %15, %18 : vector<64x128xf32>
    %20 = vector.shape_cast %9 : vector<64x128xf32> to vector<8x8x128xf32>
    %21 = vector.shape_cast %14 : vector<64x128xf32> to vector<8x8x128xf32>
    %22 = vector.shape_cast %19 : vector<64x128xf32> to vector<8x8x128xf32>
    "tpu.trace_start"() <{level = 10 : i32, message = "bqd,bkd->bqk"}> : () -> ()
    %cst_12 = arith.constant dense<0.000000e+00> : vector<8x8x8xf32>
    %23 = tpu.matmul %20, %21, %cst_12 {dimension_numbers = #tpu.dot_dimension_numbers<[2], [2], [1], [1], [0, 0, 0, 1, 1, 1], [0], [0]>} : vector<8x8x128xf32>, vector<8x8x128xf32>, vector<8x8x8xf32> -> vector<8x8x8xf32>
    "tpu.trace_stop"() : () -> ()
    %cst_13 = arith.constant 0.176776692 : f32
    %24 = vector.broadcast %cst_13 : f32 to vector<8x8x8xf32>
    %25 = arith.mulf %23, %24 : vector<8x8x8xf32>
    %c0_14 = arith.constant 0 : index
    %c16 = arith.constant 16 : index
    %c0_15 = arith.constant 0 : index
    %26 = vector.load %arg6[%c0_14, %c16, %c0_15] : memref<2x24x128xf32, #tpu.memory_space<vmem>>, vector<1x8x8xf32>
    %27 = vector.shape_cast %26 : vector<1x8x8xf32> to vector<8x8xf32>
    %28 = vector.shape_cast %27 : vector<8x8xf32> to vector<8x1x8xf32>
    %29 = vector.broadcast %28 : vector<8x1x8xf32> to vector<8x8x8xf32>
    %30 = arith.addf %25, %29 : vector<8x8x8xf32>
    %cst_16 = arith.constant dense<0xFF800000> : vector<8x8xf32>
    %31 = vector.multi_reduction <maximumf>, %30, %cst_16 [2] : vector<8x8x8xf32> to vector<8x8xf32>
    %32 = vector.shape_cast %31 : vector<8x8xf32> to vector<8x8x1xf32>
    %33 = vector.broadcast %32 : vector<8x8x1xf32> to vector<8x8x8xf32>
    %34 = arith.subf %30, %33 : vector<8x8x8xf32>
    %35 = math.exp %34 : vector<8x8x8xf32>
    %cst_17 = arith.constant dense<0.000000e+00> : vector<8x8xf32>
    %36 = vector.multi_reduction <add>, %35, %cst_17 [2] : vector<8x8x8xf32> to vector<8x8xf32>
    %37 = vector.shape_cast %36 : vector<8x8xf32> to vector<8x8x1xf32>
    %38 = vector.broadcast %37 : vector<8x8x1xf32> to vector<8x8x8xf32>
    %39 = arith.divf %35, %38 : vector<8x8x8xf32>
    "tpu.trace_start"() <{level = 10 : i32, message = "bqk,bkd->bqd"}> : () -> ()
    %cst_18 = arith.constant dense<0.000000e+00> : vector<8x8x128xf32>
    %40 = tpu.matmul %39, %22, %cst_18 {dimension_numbers = #tpu.dot_dimension_numbers<[2], [1], [1], [2], [0, 0, 0, 1, 1, 2], [0], [0]>} : vector<8x8x8xf32>, vector<8x8x128xf32>, vector<8x8x128xf32> -> vector<8x8x128xf32>
    "tpu.trace_stop"() : () -> ()
    %41 = vector.shape_cast %40 : vector<8x8x128xf32> to vector<64x128xf32>
    %c0_19 = arith.constant 0 : index
    %c0_20 = arith.constant 0 : index
    %c0_21 = arith.constant 0 : index
    %42 = vector.load %arg3[%c0_19, %c0_20, %c0_21] : memref<2x128x128xf32, #tpu.memory_space<vmem>>, vector<1x128x128xf32>
    %43 = vector.shape_cast %42 : vector<1x128x128xf32> to vector<128x128xf32>
    %cst_22 = arith.constant dense<0.000000e+00> : vector<64x128xf32>
    %44 = tpu.matmul %41, %43, %cst_22 {dimension_numbers = #tpu.dot_dimension_numbers<[1], [0], [0], [1], [0, 0, 1, 1], [], []>} : vector<64x128xf32>, vector<128x128xf32>, vector<64x128xf32> -> vector<64x128xf32>
    %c0_23 = arith.constant 0 : index
    %c3 = arith.constant 3 : index
    %c0_24 = arith.constant 0 : index
    %45 = vector.load %arg6[%c0_23, %c3, %c0_24] : memref<2x24x128xf32, #tpu.memory_space<vmem>>, vector<1x1x128xf32>
    %46 = vector.shape_cast %45 : vector<1x1x128xf32> to vector<1x128xf32>
    %47 = vector.broadcast %46 : vector<1x128xf32> to vector<64x128xf32>
    %48 = arith.addf %44, %47 : vector<64x128xf32>
    %49 = arith.addf %1, %48 : vector<64x128xf32>
    %cst_25 = arith.constant dense<0.000000e+00> : vector<64xf32>
    %50 = vector.multi_reduction <add>, %49, %cst_25 [1] : vector<64x128xf32> to vector<64xf32>
    %51 = vector.shape_cast %50 : vector<64xf32> to vector<64x1xf32>
    %cst_26 = arith.constant 3.125000e-02 : f32
    %52 = vector.broadcast %cst_26 : f32 to vector<64x1xf32>
    %53 = arith.mulf %51, %52 : vector<64x1xf32>
    %54 = arith.mulf %49, %49 : vector<64x128xf32>
    %cst_27 = arith.constant dense<0.000000e+00> : vector<64xf32>
    %55 = vector.multi_reduction <add>, %54, %cst_27 [1] : vector<64x128xf32> to vector<64xf32>
    %56 = vector.shape_cast %55 : vector<64xf32> to vector<64x1xf32>
    %cst_28 = arith.constant 3.125000e-02 : f32
    %57 = vector.broadcast %cst_28 : f32 to vector<64x1xf32>
    %58 = arith.mulf %56, %57 : vector<64x1xf32>
    %59 = arith.mulf %53, %53 : vector<64x1xf32>
    %60 = arith.subf %58, %59 : vector<64x1xf32>
    %61 = vector.broadcast %53 : vector<64x1xf32> to vector<64x128xf32>
    %62 = arith.subf %49, %61 : vector<64x128xf32>
    %cst_29 = arith.constant 9.99999996E-13 : f32
    %63 = vector.broadcast %cst_29 : f32 to vector<64x1xf32>
    %64 = arith.addf %60, %63 : vector<64x1xf32>
    %65 = math.rsqrt %64 : vector<64x1xf32>
    %66 = vector.broadcast %65 : vector<64x1xf32> to vector<64x128xf32>
    %67 = arith.mulf %62, %66 : vector<64x128xf32>
    %c0_30 = arith.constant 0 : index
    %c4 = arith.constant 4 : index
    %c0_31 = arith.constant 0 : index
    %68 = vector.load %arg6[%c0_30, %c4, %c0_31] : memref<2x24x128xf32, #tpu.memory_space<vmem>>, vector<1x1x128xf32>
    %69 = vector.shape_cast %68 : vector<1x1x128xf32> to vector<1x128xf32>
    %70 = vector.broadcast %69 : vector<1x128xf32> to vector<64x128xf32>
    %71 = arith.mulf %67, %70 : vector<64x128xf32>
    %c0_32 = arith.constant 0 : index
    %c5 = arith.constant 5 : index
    %c0_33 = arith.constant 0 : index
    %72 = vector.load %arg6[%c0_32, %c5, %c0_33] : memref<2x24x128xf32, #tpu.memory_space<vmem>>, vector<1x1x128xf32>
    %73 = vector.shape_cast %72 : vector<1x1x128xf32> to vector<1x128xf32>
    %74 = vector.broadcast %73 : vector<1x128xf32> to vector<64x128xf32>
    %75 = arith.addf %71, %74 : vector<64x128xf32>
    %c0_34 = arith.constant 0 : index
    %c0_35 = arith.constant 0 : index
    %c0_36 = arith.constant 0 : index
    %76 = vector.load %arg4[%c0_34, %c0_35, %c0_36] : memref<2x128x128xf32, #tpu.memory_space<vmem>>, vector<1x128x128xf32>
    %77 = vector.shape_cast %76 : vector<1x128x128xf32> to vector<128x128xf32>
    %cst_37 = arith.constant dense<0.000000e+00> : vector<64x128xf32>
    %78 = tpu.matmul %75, %77, %cst_37 {dimension_numbers = #tpu.dot_dimension_numbers<[1], [0], [0], [1], [0, 0, 1, 1], [], []>} : vector<64x128xf32>, vector<128x128xf32>, vector<64x128xf32> -> vector<64x128xf32>
    %c0_38 = arith.constant 0 : index
    %c6 = arith.constant 6 : index
    %c0_39 = arith.constant 0 : index
    %79 = vector.load %arg6[%c0_38, %c6, %c0_39] : memref<2x24x128xf32, #tpu.memory_space<vmem>>, vector<1x1x128xf32>
    %80 = vector.shape_cast %79 : vector<1x1x128xf32> to vector<1x128xf32>
    %81 = vector.broadcast %80 : vector<1x128xf32> to vector<64x128xf32>
    %82 = arith.addf %78, %81 : vector<64x128xf32>
    %83 = arith.mulf %82, %82 : vector<64x128xf32>
    %84 = arith.mulf %82, %83 : vector<64x128xf32>
    %cst_40 = arith.constant 4.471500e-02 : f32
    %85 = vector.broadcast %cst_40 : f32 to vector<64x128xf32>
    %86 = arith.mulf %85, %84 : vector<64x128xf32>
    %87 = arith.addf %82, %86 : vector<64x128xf32>
    %cst_41 = arith.constant 0.797884583 : f32
    %88 = vector.broadcast %cst_41 : f32 to vector<64x128xf32>
    %89 = arith.mulf %88, %87 : vector<64x128xf32>
    %90 = math.tanh %89 : vector<64x128xf32>
    %cst_42 = arith.constant 1.000000e+00 : f32
    %91 = vector.broadcast %cst_42 : f32 to vector<64x128xf32>
    %92 = arith.addf %91, %90 : vector<64x128xf32>
    %cst_43 = arith.constant 5.000000e-01 : f32
    %93 = vector.broadcast %cst_43 : f32 to vector<64x128xf32>
    %94 = arith.mulf %93, %92 : vector<64x128xf32>
    %95 = arith.mulf %82, %94 : vector<64x128xf32>
    %c0_44 = arith.constant 0 : index
    %c0_45 = arith.constant 0 : index
    %c0_46 = arith.constant 0 : index
    %96 = vector.load %arg5[%c0_44, %c0_45, %c0_46] : memref<2x128x128xf32, #tpu.memory_space<vmem>>, vector<1x128x128xf32>
    %97 = vector.shape_cast %96 : vector<1x128x128xf32> to vector<128x128xf32>
    %cst_47 = arith.constant dense<0.000000e+00> : vector<64x128xf32>
    %98 = tpu.matmul %95, %97, %cst_47 {dimension_numbers = #tpu.dot_dimension_numbers<[1], [0], [0], [1], [0, 0, 1, 1], [], []>} : vector<64x128xf32>, vector<128x128xf32>, vector<64x128xf32> -> vector<64x128xf32>
    %c0_48 = arith.constant 0 : index
    %c7 = arith.constant 7 : index
    %c0_49 = arith.constant 0 : index
    %99 = vector.load %arg6[%c0_48, %c7, %c0_49] : memref<2x24x128xf32, #tpu.memory_space<vmem>>, vector<1x1x128xf32>
    %100 = vector.shape_cast %99 : vector<1x1x128xf32> to vector<1x128xf32>
    %101 = vector.broadcast %100 : vector<1x128xf32> to vector<64x128xf32>
    %102 = arith.addf %98, %101 : vector<64x128xf32>
    %103 = arith.addf %75, %102 : vector<64x128xf32>
    %cst_50 = arith.constant dense<0.000000e+00> : vector<64xf32>
    %104 = vector.multi_reduction <add>, %103, %cst_50 [1] : vector<64x128xf32> to vector<64xf32>
    %105 = vector.shape_cast %104 : vector<64xf32> to vector<64x1xf32>
    %cst_51 = arith.constant 3.125000e-02 : f32
    %106 = vector.broadcast %cst_51 : f32 to vector<64x1xf32>
    %107 = arith.mulf %105, %106 : vector<64x1xf32>
    %108 = arith.mulf %103, %103 : vector<64x128xf32>
    %cst_52 = arith.constant dense<0.000000e+00> : vector<64xf32>
    %109 = vector.multi_reduction <add>, %108, %cst_52 [1] : vector<64x128xf32> to vector<64xf32>
    %110 = vector.shape_cast %109 : vector<64xf32> to vector<64x1xf32>
    %cst_53 = arith.constant 3.125000e-02 : f32
    %111 = vector.broadcast %cst_53 : f32 to vector<64x1xf32>
    %112 = arith.mulf %110, %111 : vector<64x1xf32>
    %113 = arith.mulf %107, %107 : vector<64x1xf32>
    %114 = arith.subf %112, %113 : vector<64x1xf32>
    %115 = vector.broadcast %107 : vector<64x1xf32> to vector<64x128xf32>
    %116 = arith.subf %103, %115 : vector<64x128xf32>
    %cst_54 = arith.constant 9.99999996E-13 : f32
    %117 = vector.broadcast %cst_54 : f32 to vector<64x1xf32>
    %118 = arith.addf %114, %117 : vector<64x1xf32>
    %119 = math.rsqrt %118 : vector<64x1xf32>
    %120 = vector.broadcast %119 : vector<64x1xf32> to vector<64x128xf32>
    %121 = arith.mulf %116, %120 : vector<64x128xf32>
    %c0_55 = arith.constant 0 : index
    %c8 = arith.constant 8 : index
    %c0_56 = arith.constant 0 : index
    %122 = vector.load %arg6[%c0_55, %c8, %c0_56] : memref<2x24x128xf32, #tpu.memory_space<vmem>>, vector<1x1x128xf32>
    %123 = vector.shape_cast %122 : vector<1x1x128xf32> to vector<1x128xf32>
    %124 = vector.broadcast %123 : vector<1x128xf32> to vector<64x128xf32>
    %125 = arith.mulf %121, %124 : vector<64x128xf32>
    %c0_57 = arith.constant 0 : index
    %c9 = arith.constant 9 : index
    %c0_58 = arith.constant 0 : index
    %126 = vector.load %arg6[%c0_57, %c9, %c0_58] : memref<2x24x128xf32, #tpu.memory_space<vmem>>, vector<1x1x128xf32>
    %127 = vector.shape_cast %126 : vector<1x1x128xf32> to vector<1x128xf32>
    %128 = vector.broadcast %127 : vector<1x128xf32> to vector<64x128xf32>
    %129 = arith.addf %125, %128 : vector<64x128xf32>
    %130 = vector.shape_cast %129 : vector<64x128xf32> to vector<8x8x128xf32>
    %131 = tpu.iota {dimensions = array<i32: 1>} : vector<8x8x128xi32>
    %c0_i32 = arith.constant 0 : i32
    %132 = vector.broadcast %c0_i32 : i32 to vector<8x8x128xi32>
    %133 = arith.cmpi eq, %131, %132 : vector<8x8x128xi32>
    %cst_59 = arith.constant 0.000000e+00 : f32
    %134 = vector.broadcast %cst_59 : f32 to vector<8x8x128xf32>
    %135 = arith.select %133, %130, %134 : vector<8x8x128xi1>, vector<8x8x128xf32>
    %cst_60 = arith.constant dense<0.000000e+00> : vector<8x128xf32>
    %136 = vector.multi_reduction <add>, %135, %cst_60 [1] : vector<8x8x128xf32> to vector<8x128xf32>
    %c0_61 = arith.constant 0 : index
    %c0_62 = arith.constant 0 : index
    %c0_63 = arith.constant 0 : index
    %137 = vector.load %arg7[%c0_61, %c0_62, %c0_63] : memref<2x8x128xf32, #tpu.memory_space<vmem>>, vector<1x8x128xf32>
    %138 = vector.shape_cast %137 : vector<1x8x128xf32> to vector<8x128xf32>
    %139 = vector.shape_cast %136 : vector<8x128xf32> to vector<1x8x128xf32>
    tpu.vector_store %arg7[%c0_61, %c0_62, %c0_63], %139 {strides = array<i32>} : memref<2x8x128xf32, #tpu.memory_space<vmem>>, vector<1x8x128xf32>,
    %c1_64 = arith.constant 1 : index
    %c0_65 = arith.constant 0 : index
    %c0_66 = arith.constant 0 : index
    %140 = vector.load %arg1[%c1_64, %c0_65, %c0_66] : memref<2x64x128xf32, #tpu.memory_space<vmem>>, vector<1x64x128xf32>
    %141 = vector.shape_cast %140 : vector<1x64x128xf32> to vector<64x128xf32>
    %c1_67 = arith.constant 1 : index
    %c0_68 = arith.constant 0 : index
    %c0_69 = arith.constant 0 : index
    %142 = vector.load %arg2[%c1_67, %c0_68, %c0_69] : memref<2x128x384xf32, #tpu.memory_space<vmem>>, vector<1x128x384xf32>
    %143 = vector.shape_cast %142 : vector<1x128x384xf32> to vector<128x384xf32>
    %cst_70 = arith.constant dense<0.000000e+00> : vector<64x384xf32>
    %144 = tpu.matmul %141, %143, %cst_70 {dimension_numbers = #tpu.dot_dimension_numbers<[1], [0], [0], [1], [0, 0, 1, 1], [], []>} : vector<64x128xf32>, vector<128x384xf32>, vector<64x384xf32> -> vector<64x384xf32>
    %145 = vector.extract_strided_slice %144 {offsets = [0, 0], sizes = [64, 128], strides = [1, 1]} : vector<64x384xf32> to vector<64x128xf32>
    %c1_71 = arith.constant 1 : index
    %c0_72 = arith.constant 0 : index
    %c0_73 = arith.constant 0 : index
    %146 = vector.load %arg6[%c1_71, %c0_72, %c0_73] : memref<2x24x128xf32, #tpu.memory_space<vmem>>, vector<1x1x128xf32>
    %147 = vector.shape_cast %146 : vector<1x1x128xf32> to vector<1x128xf32>
    %148 = vector.broadcast %147 : vector<1x128xf32> to vector<64x128xf32>
    %149 = arith.addf %145, %148 : vector<64x128xf32>
    %150 = vector.extract_strided_slice %144 {offsets = [0, 128], sizes = [64, 128], strides = [1, 1]} : vector<64x384xf32> to vector<64x128xf32>
    %c1_74 = arith.constant 1 : index
    %c1_75 = arith.constant 1 : index
    %c0_76 = arith.constant 0 : index
    %151 = vector.load %arg6[%c1_74, %c1_75, %c0_76] : memref<2x24x128xf32, #tpu.memory_space<vmem>>, vector<1x1x128xf32>
    %152 = vector.shape_cast %151 : vector<1x1x128xf32> to vector<1x128xf32>
    %153 = vector.broadcast %152 : vector<1x128xf32> to vector<64x128xf32>
    %154 = arith.addf %150, %153 : vector<64x128xf32>
    %155 = vector.extract_strided_slice %144 {offsets = [0, 256], sizes = [64, 128], strides = [1, 1]} : vector<64x384xf32> to vector<64x128xf32>
    %c1_77 = arith.constant 1 : index
    %c2_78 = arith.constant 2 : index
    %c0_79 = arith.constant 0 : index
    %156 = vector.load %arg6[%c1_77, %c2_78, %c0_79] : memref<2x24x128xf32, #tpu.memory_space<vmem>>, vector<1x1x128xf32>
    %157 = vector.shape_cast %156 : vector<1x1x128xf32> to vector<1x128xf32>
    %158 = vector.broadcast %157 : vector<1x128xf32> to vector<64x128xf32>
    %159 = arith.addf %155, %158 : vector<64x128xf32>
    %160 = vector.shape_cast %149 : vector<64x128xf32> to vector<8x8x128xf32>
    %161 = vector.shape_cast %154 : vector<64x128xf32> to vector<8x8x128xf32>
    %162 = vector.shape_cast %159 : vector<64x128xf32> to vector<8x8x128xf32>
    "tpu.trace_start"() <{level = 10 : i32, message = "bqd,bkd->bqk"}> : () -> ()
    %cst_80 = arith.constant dense<0.000000e+00> : vector<8x8x8xf32>
    %163 = tpu.matmul %160, %161, %cst_80 {dimension_numbers = #tpu.dot_dimension_numbers<[2], [2], [1], [1], [0, 0, 0, 1, 1, 1], [0], [0]>} : vector<8x8x128xf32>, vector<8x8x128xf32>, vector<8x8x8xf32> -> vector<8x8x8xf32>
    "tpu.trace_stop"() : () -> ()
    %cst_81 = arith.constant 0.176776692 : f32
    %164 = vector.broadcast %cst_81 : f32 to vector<8x8x8xf32>
    %165 = arith.mulf %163, %164 : vector<8x8x8xf32>
    %c1_82 = arith.constant 1 : index
    %c16_83 = arith.constant 16 : index
    %c0_84 = arith.constant 0 : index
    %166 = vector.load %arg6[%c1_82, %c16_83, %c0_84] : memref<2x24x128xf32, #tpu.memory_space<vmem>>, vector<1x8x8xf32>
    %167 = vector.shape_cast %166 : vector<1x8x8xf32> to vector<8x8xf32>
    %168 = vector.shape_cast %167 : vector<8x8xf32> to vector<8x1x8xf32>
    %169 = vector.broadcast %168 : vector<8x1x8xf32> to vector<8x8x8xf32>
    %170 = arith.addf %165, %169 : vector<8x8x8xf32>
    %cst_85 = arith.constant dense<0xFF800000> : vector<8x8xf32>
    %171 = vector.multi_reduction <maximumf>, %170, %cst_85 [2] : vector<8x8x8xf32> to vector<8x8xf32>
    %172 = vector.shape_cast %171 : vector<8x8xf32> to vector<8x8x1xf32>
    %173 = vector.broadcast %172 : vector<8x8x1xf32> to vector<8x8x8xf32>
    %174 = arith.subf %170, %173 : vector<8x8x8xf32>
    %175 = math.exp %174 : vector<8x8x8xf32>
    %cst_86 = arith.constant dense<0.000000e+00> : vector<8x8xf32>
    %176 = vector.multi_reduction <add>, %175, %cst_86 [2] : vector<8x8x8xf32> to vector<8x8xf32>
    %177 = vector.shape_cast %176 : vector<8x8xf32> to vector<8x8x1xf32>
    %178 = vector.broadcast %177 : vector<8x8x1xf32> to vector<8x8x8xf32>
    %179 = arith.divf %175, %178 : vector<8x8x8xf32>
    "tpu.trace_start"() <{level = 10 : i32, message = "bqk,bkd->bqd"}> : () -> ()
    %cst_87 = arith.constant dense<0.000000e+00> : vector<8x8x128xf32>
    %180 = tpu.matmul %179, %162, %cst_87 {dimension_numbers = #tpu.dot_dimension_numbers<[2], [1], [1], [2], [0, 0, 0, 1, 1, 2], [0], [0]>} : vector<8x8x8xf32>, vector<8x8x128xf32>, vector<8x8x128xf32> -> vector<8x8x128xf32>
    "tpu.trace_stop"() : () -> ()
    %181 = vector.shape_cast %180 : vector<8x8x128xf32> to vector<64x128xf32>
    %c1_88 = arith.constant 1 : index
    %c0_89 = arith.constant 0 : index
    %c0_90 = arith.constant 0 : index
    %182 = vector.load %arg3[%c1_88, %c0_89, %c0_90] : memref<2x128x128xf32, #tpu.memory_space<vmem>>, vector<1x128x128xf32>
    %183 = vector.shape_cast %182 : vector<1x128x128xf32> to vector<128x128xf32>
    %cst_91 = arith.constant dense<0.000000e+00> : vector<64x128xf32>
    %184 = tpu.matmul %181, %183, %cst_91 {dimension_numbers = #tpu.dot_dimension_numbers<[1], [0], [0], [1], [0, 0, 1, 1], [], []>} : vector<64x128xf32>, vector<128x128xf32>, vector<64x128xf32> -> vector<64x128xf32>
    %c1_92 = arith.constant 1 : index
    %c3_93 = arith.constant 3 : index
    %c0_94 = arith.constant 0 : index
    %185 = vector.load %arg6[%c1_92, %c3_93, %c0_94] : memref<2x24x128xf32, #tpu.memory_space<vmem>>, vector<1x1x128xf32>
    %186 = vector.shape_cast %185 : vector<1x1x128xf32> to vector<1x128xf32>
    %187 = vector.broadcast %186 : vector<1x128xf32> to vector<64x128xf32>
    %188 = arith.addf %184, %187 : vector<64x128xf32>
    %189 = arith.addf %141, %188 : vector<64x128xf32>
    %cst_95 = arith.constant dense<0.000000e+00> : vector<64xf32>
    %190 = vector.multi_reduction <add>, %189, %cst_95 [1] : vector<64x128xf32> to vector<64xf32>
    %191 = vector.shape_cast %190 : vector<64xf32> to vector<64x1xf32>
    %cst_96 = arith.constant 3.125000e-02 : f32
    %192 = vector.broadcast %cst_96 : f32 to vector<64x1xf32>
    %193 = arith.mulf %191, %192 : vector<64x1xf32>
    %194 = arith.mulf %189, %189 : vector<64x128xf32>
    %cst_97 = arith.constant dense<0.000000e+00> : vector<64xf32>
    %195 = vector.multi_reduction <add>, %194, %cst_97 [1] : vector<64x128xf32> to vector<64xf32>
    %196 = vector.shape_cast %195 : vector<64xf32> to vector<64x1xf32>
    %cst_98 = arith.constant 3.125000e-02 : f32
    %197 = vector.broadcast %cst_98 : f32 to vector<64x1xf32>
    %198 = arith.mulf %196, %197 : vector<64x1xf32>
    %199 = arith.mulf %193, %193 : vector<64x1xf32>
    %200 = arith.subf %198, %199 : vector<64x1xf32>
    %201 = vector.broadcast %193 : vector<64x1xf32> to vector<64x128xf32>
    %202 = arith.subf %189, %201 : vector<64x128xf32>
    %cst_99 = arith.constant 9.99999996E-13 : f32
    %203 = vector.broadcast %cst_99 : f32 to vector<64x1xf32>
    %204 = arith.addf %200, %203 : vector<64x1xf32>
    %205 = math.rsqrt %204 : vector<64x1xf32>
    %206 = vector.broadcast %205 : vector<64x1xf32> to vector<64x128xf32>
    %207 = arith.mulf %202, %206 : vector<64x128xf32>
    %c1_100 = arith.constant 1 : index
    %c4_101 = arith.constant 4 : index
    %c0_102 = arith.constant 0 : index
    %208 = vector.load %arg6[%c1_100, %c4_101, %c0_102] : memref<2x24x128xf32, #tpu.memory_space<vmem>>, vector<1x1x128xf32>
    %209 = vector.shape_cast %208 : vector<1x1x128xf32> to vector<1x128xf32>
    %210 = vector.broadcast %209 : vector<1x128xf32> to vector<64x128xf32>
    %211 = arith.mulf %207, %210 : vector<64x128xf32>
    %c1_103 = arith.constant 1 : index
    %c5_104 = arith.constant 5 : index
    %c0_105 = arith.constant 0 : index
    %212 = vector.load %arg6[%c1_103, %c5_104, %c0_105] : memref<2x24x128xf32, #tpu.memory_space<vmem>>, vector<1x1x128xf32>
    %213 = vector.shape_cast %212 : vector<1x1x128xf32> to vector<1x128xf32>
    %214 = vector.broadcast %213 : vector<1x128xf32> to vector<64x128xf32>
    %215 = arith.addf %211, %214 : vector<64x128xf32>
    %c1_106 = arith.constant 1 : index
    %c0_107 = arith.constant 0 : index
    %c0_108 = arith.constant 0 : index
    %216 = vector.load %arg4[%c1_106, %c0_107, %c0_108] : memref<2x128x128xf32, #tpu.memory_space<vmem>>, vector<1x128x128xf32>
    %217 = vector.shape_cast %216 : vector<1x128x128xf32> to vector<128x128xf32>
    %cst_109 = arith.constant dense<0.000000e+00> : vector<64x128xf32>
    %218 = tpu.matmul %215, %217, %cst_109 {dimension_numbers = #tpu.dot_dimension_numbers<[1], [0], [0], [1], [0, 0, 1, 1], [], []>} : vector<64x128xf32>, vector<128x128xf32>, vector<64x128xf32> -> vector<64x128xf32>
    %c1_110 = arith.constant 1 : index
    %c6_111 = arith.constant 6 : index
    %c0_112 = arith.constant 0 : index
    %219 = vector.load %arg6[%c1_110, %c6_111, %c0_112] : memref<2x24x128xf32, #tpu.memory_space<vmem>>, vector<1x1x128xf32>
    %220 = vector.shape_cast %219 : vector<1x1x128xf32> to vector<1x128xf32>
    %221 = vector.broadcast %220 : vector<1x128xf32> to vector<64x128xf32>
    %222 = arith.addf %218, %221 : vector<64x128xf32>
    %223 = arith.mulf %222, %222 : vector<64x128xf32>
    %224 = arith.mulf %222, %223 : vector<64x128xf32>
    %cst_113 = arith.constant 4.471500e-02 : f32
    %225 = vector.broadcast %cst_113 : f32 to vector<64x128xf32>
    %226 = arith.mulf %225, %224 : vector<64x128xf32>
    %227 = arith.addf %222, %226 : vector<64x128xf32>
    %cst_114 = arith.constant 0.797884583 : f32
    %228 = vector.broadcast %cst_114 : f32 to vector<64x128xf32>
    %229 = arith.mulf %228, %227 : vector<64x128xf32>
    %230 = math.tanh %229 : vector<64x128xf32>
    %cst_115 = arith.constant 1.000000e+00 : f32
    %231 = vector.broadcast %cst_115 : f32 to vector<64x128xf32>
    %232 = arith.addf %231, %230 : vector<64x128xf32>
    %cst_116 = arith.constant 5.000000e-01 : f32
    %233 = vector.broadcast %cst_116 : f32 to vector<64x128xf32>
    %234 = arith.mulf %233, %232 : vector<64x128xf32>
    %235 = arith.mulf %222, %234 : vector<64x128xf32>
    %c1_117 = arith.constant 1 : index
    %c0_118 = arith.constant 0 : index
    %c0_119 = arith.constant 0 : index
    %236 = vector.load %arg5[%c1_117, %c0_118, %c0_119] : memref<2x128x128xf32, #tpu.memory_space<vmem>>, vector<1x128x128xf32>
    %237 = vector.shape_cast %236 : vector<1x128x128xf32> to vector<128x128xf32>
    %cst_120 = arith.constant dense<0.000000e+00> : vector<64x128xf32>
    %238 = tpu.matmul %235, %237, %cst_120 {dimension_numbers = #tpu.dot_dimension_numbers<[1], [0], [0], [1], [0, 0, 1, 1], [], []>} : vector<64x128xf32>, vector<128x128xf32>, vector<64x128xf32> -> vector<64x128xf32>
    %c1_121 = arith.constant 1 : index
    %c7_122 = arith.constant 7 : index
    %c0_123 = arith.constant 0 : index
    %239 = vector.load %arg6[%c1_121, %c7_122, %c0_123] : memref<2x24x128xf32, #tpu.memory_space<vmem>>, vector<1x1x128xf32>
    %240 = vector.shape_cast %239 : vector<1x1x128xf32> to vector<1x128xf32>
    %241 = vector.broadcast %240 : vector<1x128xf32> to vector<64x128xf32>
    %242 = arith.addf %238, %241 : vector<64x128xf32>
    %243 = arith.addf %215, %242 : vector<64x128xf32>
    %cst_124 = arith.constant dense<0.000000e+00> : vector<64xf32>
    %244 = vector.multi_reduction <add>, %243, %cst_124 [1] : vector<64x128xf32> to vector<64xf32>
    %245 = vector.shape_cast %244 : vector<64xf32> to vector<64x1xf32>
    %cst_125 = arith.constant 3.125000e-02 : f32
    %246 = vector.broadcast %cst_125 : f32 to vector<64x1xf32>
    %247 = arith.mulf %245, %246 : vector<64x1xf32>
    %248 = arith.mulf %243, %243 : vector<64x128xf32>
    %cst_126 = arith.constant dense<0.000000e+00> : vector<64xf32>
    %249 = vector.multi_reduction <add>, %248, %cst_126 [1] : vector<64x128xf32> to vector<64xf32>
    %250 = vector.shape_cast %249 : vector<64xf32> to vector<64x1xf32>
    %cst_127 = arith.constant 3.125000e-02 : f32
    %251 = vector.broadcast %cst_127 : f32 to vector<64x1xf32>
    %252 = arith.mulf %250, %251 : vector<64x1xf32>
    %253 = arith.mulf %247, %247 : vector<64x1xf32>
    %254 = arith.subf %252, %253 : vector<64x1xf32>
    %255 = vector.broadcast %247 : vector<64x1xf32> to vector<64x128xf32>
    %256 = arith.subf %243, %255 : vector<64x128xf32>
    %cst_128 = arith.constant 9.99999996E-13 : f32
    %257 = vector.broadcast %cst_128 : f32 to vector<64x1xf32>
    %258 = arith.addf %254, %257 : vector<64x1xf32>
    %259 = math.rsqrt %258 : vector<64x1xf32>
    %260 = vector.broadcast %259 : vector<64x1xf32> to vector<64x128xf32>
    %261 = arith.mulf %256, %260 : vector<64x128xf32>
    %c1_129 = arith.constant 1 : index
    %c8_130 = arith.constant 8 : index
    %c0_131 = arith.constant 0 : index
    %262 = vector.load %arg6[%c1_129, %c8_130, %c0_131] : memref<2x24x128xf32, #tpu.memory_space<vmem>>, vector<1x1x128xf32>
    %263 = vector.shape_cast %262 : vector<1x1x128xf32> to vector<1x128xf32>
    %264 = vector.broadcast %263 : vector<1x128xf32> to vector<64x128xf32>
    %265 = arith.mulf %261, %264 : vector<64x128xf32>
    %c1_132 = arith.constant 1 : index
    %c9_133 = arith.constant 9 : index
    %c0_134 = arith.constant 0 : index
    %266 = vector.load %arg6[%c1_132, %c9_133, %c0_134] : memref<2x24x128xf32, #tpu.memory_space<vmem>>, vector<1x1x128xf32>
    %267 = vector.shape_cast %266 : vector<1x1x128xf32> to vector<1x128xf32>
    %268 = vector.broadcast %267 : vector<1x128xf32> to vector<64x128xf32>
    %269 = arith.addf %265, %268 : vector<64x128xf32>
    %270 = vector.shape_cast %269 : vector<64x128xf32> to vector<8x8x128xf32>
    %271 = tpu.iota {dimensions = array<i32: 1>} : vector<8x8x128xi32>
    %c0_i32_135 = arith.constant 0 : i32
    %272 = vector.broadcast %c0_i32_135 : i32 to vector<8x8x128xi32>
    %273 = arith.cmpi eq, %271, %272 : vector<8x8x128xi32>
    %cst_136 = arith.constant 0.000000e+00 : f32
    %274 = vector.broadcast %cst_136 : f32 to vector<8x8x128xf32>
    %275 = arith.select %273, %270, %274 : vector<8x8x128xi1>, vector<8x8x128xf32>
    %cst_137 = arith.constant dense<0.000000e+00> : vector<8x128xf32>
    %276 = vector.multi_reduction <add>, %275, %cst_137 [1] : vector<8x8x128xf32> to vector<8x128xf32>
    %c1_138 = arith.constant 1 : index
    %c0_139 = arith.constant 0 : index
    %c0_140 = arith.constant 0 : index
    %277 = vector.load %arg7[%c1_138, %c0_139, %c0_140] : memref<2x8x128xf32, #tpu.memory_space<vmem>>, vector<1x8x128xf32>
    %278 = vector.shape_cast %277 : vector<1x8x128xf32> to vector<8x128xf32>
    %279 = vector.shape_cast %276 : vector<8x128xf32> to vector<1x8x128xf32>
    tpu.vector_store %arg7[%c1_138, %c0_139, %c0_140], %279 {strides = array<i32>} : memref<2x8x128xf32, #tpu.memory_space<vmem>>, vector<1x8x128xf32>,
    return
  }
  func.func @transform_0(%arg0: i32) -> (i32, i32, i32) {
    %c0_i32 = arith.constant 0 : i32
    %c0_i32_0 = arith.constant 0 : i32
    %c0_i32_1 = arith.constant 0 : i32
    %c0_i32_2 = arith.constant 0 : i32
    return %c0_i32, %c0_i32_0, %c0_i32_1 : i32, i32, i32
  }
  func.func @transform_1(%arg0: i32) -> (i32, i32, i32) {
    %c0_i32 = arith.constant 0 : i32
    %c0_i32_0 = arith.constant 0 : i32
    %c0_i32_1 = arith.constant 0 : i32
    %c0_i32_2 = arith.constant 0 : i32
    return %c0_i32, %c0_i32_0, %c0_i32_1 : i32, i32, i32
  }
  func.func @transform_2(%arg0: i32) -> (i32, i32, i32) {
    %c0_i32 = arith.constant 0 : i32
    %c0_i32_0 = arith.constant 0 : i32
    %c0_i32_1 = arith.constant 0 : i32
    %c0_i32_2 = arith.constant 0 : i32
    return %c0_i32, %c0_i32_0, %c0_i32_1 : i32, i32, i32
  }
  func.func @transform_3(%arg0: i32) -> (i32, i32, i32) {
    %c0_i32 = arith.constant 0 : i32
    %c0_i32_0 = arith.constant 0 : i32
    %c0_i32_1 = arith.constant 0 : i32
    %c0_i32_2 = arith.constant 0 : i32
    return %c0_i32, %c0_i32_0, %c0_i32_1 : i32, i32, i32
  }
  func.func @transform_4(%arg0: i32) -> (i32, i32, i32) {
    %c0_i32 = arith.constant 0 : i32
    %c0_i32_0 = arith.constant 0 : i32
    %c0_i32_1 = arith.constant 0 : i32
    %c0_i32_2 = arith.constant 0 : i32
    return %c0_i32, %c0_i32_0, %c0_i32_1 : i32, i32, i32
  }
  func.func @transform_5(%arg0: i32) -> (i32, i32, i32) {
    %c0_i32 = arith.constant 0 : i32
    %c0_i32_0 = arith.constant 0 : i32
    %c0_i32_1 = arith.constant 0 : i32
    %c0_i32_2 = arith.constant 0 : i32
    return %c0_i32, %c0_i32_0, %c0_i32_1 : i32, i32, i32
  }
  func.func @transform_6(%arg0: i32) -> (i32, i32, i32) {
    %c0_i32 = arith.constant 0 : i32
    %c0_i32_0 = arith.constant 0 : i32
    %c0_i32_1 = arith.constant 0 : i32
    %c0_i32_2 = arith.constant 0 : i32
    return %c0_i32, %c0_i32_0, %c0_i32_1 : i32, i32, i32
  }
}

</mosaic_0001>

<llo_original>
// kernel: _biencoder_forward.1
$region0: #{_biencoder_forward.1}
  #allocation0 [shape = 'u32[]', space=smem, size = 0x4, offset = 0x4, fixed_abs, tag = 'smem constant byte address 0x4 - core index']
  #allocation1 [shape = 'u32[144,128]{1,0:T(1,128)}', space=vmem, size = 0x12000, scoped, tag = 'internal scratch']
  %s0 = inlined_call_operand.vmem [shape: f32[2,64,128], index: 0, kind: input, shape index: {}]
  %s1 = inlined_call_operand.vmem [shape: f32[2,128,384], index: 1, kind: input, shape index: {}]
  %s2 = inlined_call_operand.vmem [shape: f32[2,128,128], index: 2, kind: input, shape index: {}]
  %s3 = inlined_call_operand.vmem [shape: f32[2,128,128], index: 3, kind: input, shape index: {}]
  %s4 = inlined_call_operand.vmem [shape: f32[2,128,128], index: 4, kind: input, shape index: {}]
  %s5 = inlined_call_operand.vmem [shape: f32[2,24,128], index: 5, kind: input, shape index: {}]
  %s6 = inlined_call_operand.vmem [shape: f32[2,8,128], index: 6, kind: output, shape index: {}]
  %s7 = sld [smem:[#allocation0]]
  $region34: #{_biencoder_forward.1} parent=0
    _
  %s9 = ssub.s32 1, %s7
  %s10 = scalar_select 0, %s9, %s7
  // Predicated region
  $region2: #{_biencoder_forward.1} parent=0 // pred_check
    _
  $region3: #{_biencoder_forward.1} parent=0 // pred_check_branch
    %12 = sbr.rel (0) target = $region5
  $region4: #{_biencoder_forward.1} parent=0 // pred_region
    _
  $region5: #{_biencoder_forward.1} parent=0 // pred_fallthru
    _
  // Predicated region
  $region6: #{_biencoder_forward.1} parent=0 // pred_check
    _
  $region7: #{_biencoder_forward.1} parent=0 // pred_check_branch
    %14 = sbr.rel (0) target = $region9
  $region8: #{_biencoder_forward.1} parent=0 // pred_region
    _
  $region9: #{_biencoder_forward.1} parent=0 // pred_fallthru
    _
  // Predicated region
  $region10: #{_biencoder_forward.1} parent=0 // pred_check
    _
  $region11: #{_biencoder_forward.1} parent=0 // pred_check_branch
    %16 = sbr.rel (0) target = $region13
  $region12: #{_biencoder_forward.1} parent=0 // pred_region
    _
  $region13: #{_biencoder_forward.1} parent=0 // pred_fallthru
    _
  // Predicated region
  $region14: #{_biencoder_forward.1} parent=0 // pred_check
    _
  $region15: #{_biencoder_forward.1} parent=0 // pred_check_branch
    %18 = sbr.rel (0) target = $region17
  $region16: #{_biencoder_forward.1} parent=0 // pred_region
    _
  $region17: #{_biencoder_forward.1} parent=0 // pred_fallthru
    _
  // Predicated region
  $region18: #{_biencoder_forward.1} parent=0 // pred_check
    _
  $region19: #{_biencoder_forward.1} parent=0 // pred_check_branch
    %20 = sbr.rel (0) target = $region21
  $region20: #{_biencoder_forward.1} parent=0 // pred_region
    _
  $region21: #{_biencoder_forward.1} parent=0 // pred_fallthru
    _
  // Predicated region
  $region22: #{_biencoder_forward.1} parent=0 // pred_check
    _
  $region23: #{_biencoder_forward.1} parent=0 // pred_check_branch
    %22 = sbr.rel (0) target = $region25
  $region24: #{_biencoder_forward.1} parent=0 // pred_region
    _
  $region25: #{_biencoder_forward.1} parent=0 // pred_fallthru
    _
  %v23 = vld [vmem:[%s0] sm:$0xff]
  %v24 = vld [vmem:[%s0 + $0x8] sm:$0xff]
  %v25 = vld [vmem:[%s0 + $0x10] sm:$0xff]
  %v26 = vld [vmem:[%s0 + $0x18] sm:$0xff]
  %v27 = vld [vmem:[%s0 + $0x20] sm:$0xff]
  %v28 = vld [vmem:[%s0 + $0x28] sm:$0xff]
  %v29 = vld [vmem:[%s0 + $0x30] sm:$0xff]
  %v30 = vld [vmem:[%s0 + $0x38] sm:$0xff]
  %v31 = vld [vmem:[%s1] sm:$0xff]
  %v32 = vld [vmem:[%s1 + $0x8] sm:$0xff]
  %v33 = vld [vmem:[%s1 + $0x10] sm:$0xff]
  %v34 = vld [vmem:[%s1 + $0x18] sm:$0xff]
  %v35 = vld [vmem:[%s1 + $0x20] sm:$0xff]
  %v36 = vld [vmem:[%s1 + $0x28] sm:$0xff]
  %v37 = vld [vmem:[%s1 + $0x30] sm:$0xff]
  %v38 = vld [vmem:[%s1 + $0x38] sm:$0xff]
  %v39 = vld [vmem:[%s1 + $0x40] sm:$0xff]
  %v40 = vld [vmem:[%s1 + $0x48] sm:$0xff]
  %v41 = vld [vmem:[%s1 + $0x50] sm:$0xff]
  %v42 = vld [vmem:[%s1 + $0x58] sm:$0xff]
  %v43 = vld [vmem:[%s1 + $0x60] sm:$0xff]
  %v44 = vld [vmem:[%s1 + $0x68] sm:$0xff]
  %v45 = vld [vmem:[%s1 + $0x70] sm:$0xff]
  %v46 = vld [vmem:[%s1 + $0x78] sm:$0xff]
  %v47 = vld [vmem:[%s1 + $0x80] sm:$0xff]
  %v48 = vld [vmem:[%s1 + $0x88] sm:$0xff]
  %v49 = vld [vmem:[%s1 + $0x90] sm:$0xff]
  %v50 = vld [vmem:[%s1 + $0x98] sm:$0xff]
  %v51 = vld [vmem:[%s1 + $0xa0] sm:$0xff]
  %v52 = vld [vmem:[%s1 + $0xa8] sm:$0xff]
  %v53 = vld [vmem:[%s1 + $0xb0] sm:$0xff]
  %v54 = vld [vmem:[%s1 + $0xb8] sm:$0xff]
  %v55 = vld [vmem:[%s1 + $0xc0] sm:$0xff]
  %v56 = vld [vmem:[%s1 + $0xc8] sm:$0xff]
  %v57 = vld [vmem:[%s1 + $0xd0] sm:$0xff]
  %v58 = vld [vmem:[%s1 + $0xd8] sm:$0xff]
  %v59 = vld [vmem:[%s1 + $0xe0] sm:$0xff]
  %v60 = vld [vmem:[%s1 + $0xe8] sm:$0xff]
  %v61 = vld [vmem:[%s1 + $0xf0] sm:$0xff]
  %v62 = vld [vmem:[%s1 + $0xf8] sm:$0xff]
  %v63 = vld [vmem:[%s1 + $0x100] sm:$0xff]
  %v64 = vld [vmem:[%s1 + $0x108] sm:$0xff]
  %v65 = vld [vmem:[%s1 + $0x110] sm:$0xff]
  %v66 = vld [vmem:[%s1 + $0x118] sm:$0xff]
  %v67 = vld [vmem:[%s1 + $0x120] sm:$0xff]
  %v68 = vld [vmem:[%s1 + $0x128] sm:$0xff]
  %v69 = vld [vmem:[%s1 + $0x130] sm:$0xff]
  %v70 = vld [vmem:[%s1 + $0x138] sm:$0xff]
  %v71 = vld [vmem:[%s1 + $0x140] sm:$0xff]
  %v72 = vld [vmem:[%s1 + $0x148] sm:$0xff]
  %v73 = vld [vmem:[%s1 + $0x150] sm:$0xff]
  %v74 = vld [vmem:[%s1 + $0x158] sm:$0xff]
  %v75 = vld [vmem:[%s1 + $0x160] sm:$0xff]
  %v76 = vld [vmem:[%s1 + $0x168] sm:$0xff]
  %v77 = vld [vmem:[%s1 + $0x170] sm:$0xff]
  %v78 = vld [vmem:[%s1 + $0x178] sm:$0xff]
  %79 = vmatprep.subr.mxu0 %v77
  %80 = vmatpush1.msra.mxu0 %v76
  %81 = vmatprep.subr.mxu0 %v74
  %82 = vmatpush1.msra.mxu0 %v73
  %83 = vmatprep.subr.mxu0 %v71
  %84 = vmatpush1.msra.mxu0 %v70
  %85 = vmatprep.subr.mxu0 %v68
  %86 = vmatpush1.msra.mxu0 %v67
  %87 = vmatprep.subr.mxu0 %v65
  %88 = vmatpush1.msra.mxu0 %v64
  %89 = vmatprep.subr.mxu0 %v62
  %90 = vmatpush1.msra.mxu0 %v61
  %91 = vmatprep.subr.mxu0 %v59
  %92 = vmatpush1.msra.mxu0 %v58
  %93 = vmatprep.subr.mxu0 %v56
  %94 = vmatpush1.msra.mxu0 %v55
  %95 = vmatprep.subr.mxu0 %v53
  %96 = vmatpush1.msra.mxu0 %v52
  %97 = vmatprep.subr.mxu0 %v50
  %98 = vmatpush1.msra.mxu0 %v49
  %99 = vmatprep.subr.mxu0 %v47
  %100 = vmatpush1.msra.mxu0 %v46
  %101 = vmatprep.subr.mxu0 %v44
  %102 = vmatpush1.msra.mxu0 %v43
  %103 = vmatprep.subr.mxu0 %v41
  %104 = vmatpush1.msra.mxu0 %v40
  %105 = vmatprep.subr.mxu0 %v38
  %106 = vmatpush1.msra.mxu0 %v37
  %107 = vmatprep.subr.mxu0 %v35
  %108 = vmatpush1.msra.mxu0 %v34
  %109 = vmatprep.subr.mxu0 %v32
  %110 = vmatpush1.msra.mxu0 %v31
  %111 = vmatprep.subr.mxu0 0.0
  %112 = vmatpush2.msra.mxu0 0.0
  %113 = vmatprep.subr.mxu0 0.0
  %114 = vmatpush2.msra.mxu0 0.0
  %115 = vmatprep.subr.mxu0 0.0
  %116 = vmatpush2.msra.mxu0 0.0
  %117 = vmatprep.subr.mxu0 0.0
  %118 = vmatpush2.msra.mxu0 0.0
  %119 = vmatprep.subr.mxu0 0.0
  %120 = vmatpush2.msra.mxu0 0.0
  %121 = vmatprep.subr.mxu0 0.0
  %122 = vmatpush2.msra.mxu0 0.0
  %123 = vmatprep.subr.mxu0 0.0
  %124 = vmatpush2.msra.mxu0 0.0
  %125 = vmatprep.subr.mxu0 0.0
  %126 = vmatpush2.msra.mxu0 0.0
  %127 = vmatprep.subr.mxu0 0.0
  %128 = vmatpush2.msra.mxu0 0.0
  %129 = vmatprep.subr.mxu0 0.0
  %130 = vmatpush2.msra.mxu0 0.0
  %131 = vmatprep.subr.mxu0 0.0
  %132 = vmatpush2.msra.mxu0 0.0
  %133 = vmatprep.subr.mxu0 0.0
  %134 = vmatpush2.msra.mxu0 0.0
  %135 = vmatprep.subr.mxu0 0.0
  %136 = vmatpush2.msra.mxu0 0.0
  %137 = vmatprep.subr.mxu0 0.0
  %138 = vmatpush2.msra.mxu0 0.0
  %139 = vmatprep.subr.mxu0 0.0
  %140 = vmatpush2.msra.mxu0 0.0
  %141 = vmatprep.subr.mxu0 0.0
  %142 = vmatpush2.msra.mxu0 0.0
  %143 = vmatprep.mubr.f32.mxu0 0.0
  %144 = vmatmul.mubr.f32.gmra.mxu0 %v23
  %v145 = vpop.f32.mrf.mxu0
  %v146 = vadd.f32 0.0, %v145
  %v147 = vpop.f32.mrf.mxu0
  %v148 = vadd.f32 0.0, %v147
  %149 = vmatprep.mubr.f32.mxu0 0.0
  %150 = vmatmul.mubr.f32.gmra.mxu0 %v24
  %v151 = vpop.f32.mrf.mxu0
  %v152 = vadd.f32 0.0, %v151
  %v153 = vpop.f32.mrf.mxu0
  %v154 = vadd.f32 0.0, %v153
  %155 = vmatprep.mubr.f32.mxu0 0.0
  %156 = vmatmul.mubr.f32.gmra.mxu0 %v25
  %v157 = vpop.f32.mrf.mxu0
  %v158 = vadd.f32 0.0, %v157
  %v159 = vpop.f32.mrf.mxu0
  %v160 = vadd.f32 0.0, %v159
  %161 = vmatprep.mubr.f32.mxu0 0.0
  %162 = vmatmul.mubr.f32.gmra.mxu0 %v26
  %v163 = vpop.f32.mrf.mxu0
  %v164 = vadd.f32 0.0, %v163
  %v165 = vpop.f32.mrf.mxu0
  %v166 = vadd.f32 0.0, %v165
  %167 = vmatprep.mubr.f32.mxu0 0.0
  %168 = vmatmul.mubr.f32.gmra.mxu0 %v27
  %v169 = vpop.f32.mrf.mxu0
  %v170 = vadd.f32 0.0, %v169
  %v171 = vpop.f32.mrf.mxu0
  %v172 = vadd.f32 0.0, %v171
  %173 = vmatprep.mubr.f32.mxu0 0.0
  %174 = vmatmul.mubr.f32.gmra.mxu0 %v28
  %v175 = vpop.f32.mrf.mxu0
  %v176 = vadd.f32 0.0, %v175
  %v177 = vpop.f32.mrf.mxu0
  %v178 = vadd.f32 0.0, %v177
  %179 = vmatprep.mubr.f32.mxu0 0.0
  %180 = vmatmul.mubr.f32.gmra.mxu0 %v29
  %v181 = vpop.f32.mrf.mxu0
  %v182 = vadd.f32 0.0, %v181
  %v183 = vpop.f32.mrf.mxu0
  %v184 = vadd.f32 0.0, %v183
  %185 = vmatprep.mubr.f32.mxu0 0.0
  %186 = vmatmul.mubr.f32.gmra.mxu0 %v30
  %v187 = vpop.f32.mrf.mxu0
  %v188 = vadd.f32 0.0, %v187
  %v189 = vpop.f32.mrf.mxu0
  %v190 = vadd.f32 0.0, %v189
  %191 = vdwg.mxu0
  %192 = vmatprep.subr.mxu0 0.0
  %193 = vmatpush1.msra.mxu0 %v78
  %194 = vmatprep.subr.mxu0 0.0
  %195 = vmatpush1.msra.mxu0 %v75
  %196 = vmatprep.subr.mxu0 0.0
  %197 = vmatpush1.msra.mxu0 %v72
  %198 = vmatprep.subr.mxu0 0.0
  %199 = vmatpush1.msra.mxu0 %v69
  %200 = vmatprep.subr.mxu0 0.0
  %201 = vmatpush1.msra.mxu0 %v66
  %202 = vmatprep.subr.mxu0 0.0
  %203 = vmatpush1.msra.mxu0 %v63
  %204 = vmatprep.subr.mxu0 0.0
  %205 = vmatpush1.msra.mxu0 %v60
  %206 = vmatprep.subr.mxu0 0.0
  %207 = vmatpush1.msra.mxu0 %v57
  %208 = vmatprep.subr.mxu0 0.0
  %209 = vmatpush1.msra.mxu0 %v54
  %210 = vmatprep.subr.mxu0 0.0
  %211 = vmatpush1.msra.mxu0 %v51
  %212 = vmatprep.subr.mxu0 0.0
  %213 = vmatpush1.msra.mxu0 %v48
  %214 = vmatprep.subr.mxu0 0.0
  %215 = vmatpush1.msra.mxu0 %v45
  %216 = vmatprep.subr.mxu0 0.0
  %217 = vmatpush1.msra.mxu0 %v42
  %218 = vmatprep.subr.mxu0 0.0
  %219 = vmatpush1.msra.mxu0 %v39
  %220 = vmatprep.subr.mxu0 0.0
  %221 = vmatpush1.msra.mxu0 %v36
  %222 = vmatprep.subr.mxu0 0.0
  %223 = vmatpush1.msra.mxu0 %v33
  %224 = vmatprep.subr.mxu0 0.0
  %225 = vmatpush2.msra.mxu0 0.0
  %226 = vmatprep.subr.mxu0 0.0
  %227 = vmatpush2.msra.mxu0 0.0
  %228 = vmatprep.subr.mxu0 0.0
  %229 = vmatpush2.msra.mxu0 0.0
  %230 = vmatprep.subr.mxu0 0.0
  %231 = vmatpush2.msra.mxu0 0.0
  %232 = vmatprep.subr.mxu0 0.0
  %233 = vmatpush2.msra.mxu0 0.0
  %234 = vmatprep.subr.mxu0 0.0
  %235 = vmatpush2.msra.mxu0 0.0
  %236 = vmatprep.subr.mxu0 0.0
  %237 = vmatpush2.msra.mxu0 0.0
  %238 = vmatprep.subr.mxu0 0.0
  %239 = vmatpush2.msra.mxu0 0.0
  %240 = vmatprep.subr.mxu0 0.0
  %241 = vmatpush2.msra.mxu0 0.0
  %242 = vmatprep.subr.mxu0 0.0
  %243 = vmatpush2.msra.mxu0 0.0
  %244 = vmatprep.subr.mxu0 0.0
  %245 = vmatpush2.msra.mxu0 0.0
  %246 = vmatprep.subr.mxu0 0.0
  %247 = vmatpush2.msra.mxu0 0.0
  %248 = vmatprep.subr.mxu0 0.0
  %249 = vmatpush2.msra.mxu0 0.0
  %250 = vmatprep.subr.mxu0 0.0
  %251 = vmatpush2.msra.mxu0 0.0
  %252 = vmatprep.subr.mxu0 0.0
  %253 = vmatpush2.msra.mxu0 0.0
  %254 = vmatprep.subr.mxu0 0.0
  %255 = vmatpush2.msra.mxu0 0.0
  %256 = vmatprep.mubr.f32.mxu0 0.0
  %257 = vmatmul.mubr.f32.gmra.mxu0 %v23
  %v258 = vpop.f32.mrf.mxu0
  %v259 = vadd.f32 0.0, %v258
  %v260 = vpop.f32.mrf.mxu0
  %261 = vmatprep.mubr.f32.mxu0 0.0
  %262 = vmatmul.mubr.f32.gmra.mxu0 %v24
  %v263 = vpop.f32.mrf.mxu0
  %v264 = vadd.f32 0.0, %v263
  %v265 = vpop.f32.mrf.mxu0
  %266 = vmatprep.mubr.f32.mxu0 0.0
  %267 = vmatmul.mubr.f32.gmra.mxu0 %v25
  %v268 = vpop.f32.mrf.mxu0
  %v269 = vadd.f32 0.0, %v268
  %v270 = vpop.f32.mrf.mxu0
  %271 = vmatprep.mubr.f32.mxu0 0.0
  %272 = vmatmul.mubr.f32.gmra.mxu0 %v26
  %v273 = vpop.f32.mrf.mxu0
  %v274 = vadd.f32 0.0, %v273
  %v275 = vpop.f32.mrf.mxu0
  %276 = vmatprep.mubr.f32.mxu0 0.0
  %277 = vmatmul.mubr.f32.gmra.mxu0 %v27
  %v278 = vpop.f32.mrf.mxu0
  %v279 = vadd.f32 0.0, %v278
  %v280 = vpop.f32.mrf.mxu0
  %281 = vmatprep.mubr.f32.mxu0 0.0
  %282 = vmatmul.mubr.f32.gmra.mxu0 %v28
  %v283 = vpop.f32.mrf.mxu0
  %v284 = vadd.f32 0.0, %v283
  %v285 = vpop.f32.mrf.mxu0
  %286 = vmatprep.mubr.f32.mxu0 0.0
  %287 = vmatmul.mubr.f32.gmra.mxu0 %v29
  %v288 = vpop.f32.mrf.mxu0
  %v289 = vadd.f32 0.0, %v288
  %v290 = vpop.f32.mrf.mxu0
  %291 = vmatprep.mubr.f32.mxu0 0.0
  %292 = vmatmul.mubr.f32.gmra.mxu0 %v30
  %v293 = vpop.f32.mrf.mxu0
  %v294 = vadd.f32 0.0, %v293
  %v295 = vpop.f32.mrf.mxu0
  %296 = vdwg.mxu0
  %v297 = vld [vmem:[%s5] sm:$0x1]
  %v298 = vlaneseq
  %v299 = vshrl.u32 %v298, 7
  %v300 = vsub.s32 0, %v299
  %v301 = vrot.slane %v297, %v300
  %v302 = vadd.f32 %v146, %v301
  %v303 = vadd.f32 %v152, %v301
  %v304 = vadd.f32 %v158, %v301
  %v305 = vadd.f32 %v164, %v301
  %v306 = vadd.f32 %v170, %v301
  %v307 = vadd.f32 %v176, %v301
  %v308 = vadd.f32 %v182, %v301
  %v309 = vadd.f32 %v188, %v301
  %v310 = vld [vmem:[%s5 + $0x1] sm:$0x1]
  %v311 = vlaneseq
  %v312 = vshrl.u32 %v311, 7
  %v313 = vsub.s32 0, %v312
  %v314 = vrot.slane %v310, %v313
  %v315 = vadd.f32 %v148, %v314
  %v316 = vadd.f32 %v154, %v314
  %v317 = vadd.f32 %v160, %v314
  %v318 = vadd.f32 %v166, %v314
  %v319 = vadd.f32 %v172, %v314
  %v320 = vadd.f32 %v178, %v314
  %v321 = vadd.f32 %v184, %v314
  %v322 = vadd.f32 %v190, %v314
  %v323 = vld [vmem:[%s5 + $0x2] sm:$0x1]
  %v324 = vlaneseq
  %v325 = vshrl.u32 %v324, 7
  %v326 = vsub.s32 0, %v325
  %v327 = vrot.slane %v323, %v326
  %v328 = vadd.f32 %v259, %v327
  %v329 = vadd.f32 %v264, %v327
  %v330 = vadd.f32 %v269, %v327
  %v331 = vadd.f32 %v274, %v327
  %v332 = vadd.f32 %v279, %v327
  %v333 = vadd.f32 %v284, %v327
  %v334 = vadd.f32 %v289, %v327
  %v335 = vadd.f32 %v294, %v327
  %336 = vmatprep.subr.mxu0 0.0
  %337 = vmatpush1.xpose.msra.mxu0 0.0
  %338 = vmatprep.subr.mxu0 0.0
  %339 = vmatpush1.xpose.msra.mxu0 0.0
  %340 = vmatprep.subr.mxu0 0.0
  %341 = vmatpush1.xpose.msra.mxu0 0.0
  %342 = vmatprep.subr.mxu0 0.0
  %343 = vmatpush1.xpose.msra.mxu0 0.0
  %344 = vmatprep.subr.mxu0 0.0
  %345 = vmatpush1.xpose.msra.mxu0 0.0
  %346 = vmatprep.subr.mxu0 0.0
  %347 = vmatpush1.xpose.msra.mxu0 0.0
  %348 = vmatprep.subr.mxu0 0.0
  %349 = vmatpush1.xpose.msra.mxu0 0.0
  %350 = vmatprep.subr.mxu0 0.0
  %351 = vmatpush1.xpose.msra.mxu0 0.0
  %352 = vmatprep.subr.mxu0 0.0
  %353 = vmatpush1.xpose.msra.mxu0 0.0
  %354 = vmatprep.subr.mxu0 0.0
  %355 = vmatpush1.xpose.msra.mxu0 0.0
  %356 = vmatprep.subr.mxu0 0.0
  %357 = vmatpush1.xpose.msra.mxu0 0.0
  %358 = vmatprep.subr.mxu0 0.0
  %359 = vmatpush1.xpose.msra.mxu0 0.0
  %360 = vmatprep.subr.mxu0 0.0
  %361 = vmatpush1.xpose.msra.mxu0 0.0
  %362 = vmatprep.subr.mxu0 0.0
  %363 = vmatpush1.xpose.msra.mxu0 0.0
  %364 = vmatprep.subr.mxu0 0.0
  %365 = vmatpush1.xpose.msra.mxu0 0.0
  %366 = vmatprep.subr.mxu0 0.0
  %367 = vmatpush1.xpose.msra.mxu0 %v315
  %368 = vmatprep.subr.mxu0 0.0
  %369 = vmatpush2.xpose.msra.mxu0 0.0
  %370 = vmatprep.subr.mxu0 0.0
  %371 = vmatpush2.xpose.msra.mxu0 0.0
  %372 = vmatprep.subr.mxu0 0.0
  %373 = vmatpush2.xpose.msra.mxu0 0.0
  %374 = vmatprep.subr.mxu0 0.0
  %375 = vmatpush2.xpose.msra.mxu0 0.0
  %376 = vmatprep.subr.mxu0 0.0
  %377 = vmatpush2.xpose.msra.mxu0 0.0
  %378 = vmatprep.subr.mxu0 0.0
  %379 = vmatpush2.xpose.msra.mxu0 0.0
  %380 = vmatprep.subr.mxu0 0.0
  %381 = vmatpush2.xpose.msra.mxu0 0.0
  %382 = vmatprep.subr.mxu0 0.0
  %383 = vmatpush2.xpose.msra.mxu0 0.0
  %384 = vmatprep.subr.mxu0 0.0
  %385 = vmatpush2.xpose.msra.mxu0 0.0
  %386 = vmatprep.subr.mxu0 0.0
  %387 = vmatpush2.xpose.msra.mxu0 0.0
  %388 = vmatprep.subr.mxu0 0.0
  %389 = vmatpush2.xpose.msra.mxu0 0.0
  %390 = vmatprep.subr.mxu0 0.0
  %391 = vmatpush2.xpose.msra.mxu0 0.0
  %392 = vmatprep.subr.mxu0 0.0
  %393 = vmatpush2.xpose.msra.mxu0 0.0
  %394 = vmatprep.subr.mxu0 0.0
  %395 = vmatpush2.xpose.msra.mxu0 0.0
  %396 = vmatprep.subr.mxu0 0.0
  %397 = vmatpush2.xpose.msra.mxu0 0.0
  %398 = vmatprep.subr.mxu0 0.0
  %399 = vmatpush2.xpose.msra.mxu0 0.0
  %400 = vmatprep.mubr.f32.mxu0 0.0
  %401 = vmatmul.mubr.f32.gmra.mxu0 %v302
  %v402 = vpop.f32.mrf.mxu0
  %v403 = vadd.f32 0.0, %v402
  %v404 = vpop.f32.mrf.mxu0
  %405 = vdwg.mxu0
  %406 = vmatprep.subr.mxu0 0.0
  %407 = vmatpush1.xpose.msra.mxu0 0.0
  %408 = vmatprep.subr.mxu0 0.0
  %409 = vmatpush1.xpose.msra.mxu0 0.0
  %410 = vmatprep.subr.mxu0 0.0
  %411 = vmatpush1.xpose.msra.mxu0 0.0
  %412 = vmatprep.subr.mxu0 0.0
  %413 = vmatpush1.xpose.msra.mxu0 0.0
  %414 = vmatprep.subr.mxu0 0.0
  %415 = vmatpush1.xpose.msra.mxu0 0.0
  %416 = vmatprep.subr.mxu0 0.0
  %417 = vmatpush1.xpose.msra.mxu0 0.0
  %418 = vmatprep.subr.mxu0 0.0
  %419 = vmatpush1.xpose.msra.mxu0 0.0
  %420 = vmatprep.subr.mxu0 0.0
  %421 = vmatpush1.xpose.msra.mxu0 0.0
  %422 = vmatprep.subr.mxu0 0.0
  %423 = vmatpush1.xpose.msra.mxu0 0.0
  %424 = vmatprep.subr.mxu0 0.0
  %425 = vmatpush1.xpose.msra.mxu0 0.0
  %426 = vmatprep.subr.mxu0 0.0
  %427 = vmatpush1.xpose.msra.mxu0 0.0
  %428 = vmatprep.subr.mxu0 0.0
  %429 = vmatpush1.xpose.msra.mxu0 0.0
  %430 = vmatprep.subr.mxu0 0.0
  %431 = vmatpush1.xpose.msra.mxu0 0.0
  %432 = vmatprep.subr.mxu0 0.0
  %433 = vmatpush1.xpose.msra.mxu0 0.0
  %434 = vmatprep.subr.mxu0 0.0
  %435 = vmatpush1.xpose.msra.mxu0 0.0
  %436 = vmatprep.subr.mxu0 0.0
  %437 = vmatpush1.xpose.msra.mxu0 %v316
  %438 = vmatprep.subr.mxu0 0.0
  %439 = vmatpush2.xpose.msra.mxu0 0.0
  %440 = vmatprep.subr.mxu0 0.0
  %441 = vmatpush2.xpose.msra.mxu0 0.0
  %442 = vmatprep.subr.mxu0 0.0
  %443 = vmatpush2.xpose.msra.mxu0 0.0
  %444 = vmatprep.subr.mxu0 0.0
  %445 = vmatpush2.xpose.msra.mxu0 0.0
  %446 = vmatprep.subr.mxu0 0.0
  %447 = vmatpush2.xpose.msra.mxu0 0.0
  %448 = vmatprep.subr.mxu0 0.0
  %449 = vmatpush2.xpose.msra.mxu0 0.0
  %450 = vmatprep.subr.mxu0 0.0
  %451 = vmatpush2.xpose.msra.mxu0 0.0
  %452 = vmatprep.subr.mxu0 0.0
  %453 = vmatpush2.xpose.msra.mxu0 0.0
  %454 = vmatprep.subr.mxu0 0.0
  %455 = vmatpush2.xpose.msra.mxu0 0.0
  %456 = vmatprep.subr.mxu0 0.0
  %457 = vmatpush2.xpose.msra.mxu0 0.0
  %458 = vmatprep.subr.mxu0 0.0
  %459 = vmatpush2.xpose.msra.mxu0 0.0
  %460 = vmatprep.subr.mxu0 0.0
  %461 = vmatpush2.xpose.msra.mxu0 0.0
  %462 = vmatprep.subr.mxu0 0.0
  %463 = vmatpush2.xpose.msra.mxu0 0.0
  %464 = vmatprep.subr.mxu0 0.0
  %465 = vmatpush2.xpose.msra.mxu0 0.0
  %466 = vmatprep.subr.mxu0 0.0
  %467 = vmatpush2.xpose.msra.mxu0 0.0
  %468 = vmatprep.subr.mxu0 0.0
  %469 = vmatpush2.xpose.msra.mxu0 0.0
  %470 = vmatprep.mubr.f32.mxu0 0.0
  %471 = vmatmul.mubr.f32.gmra.mxu0 %v303
  %v472 = vpop.f32.mrf.mxu0
  %v473 = vadd.f32 0.0, %v472
  %v474 = vpop.f32.mrf.mxu0
  %475 = vdwg.mxu0
  %476 = vmatprep.subr.mxu0 0.0
  %477 = vmatpush1.xpose.msra.mxu0 0.0
  %478 = vmatprep.subr.mxu0 0.0
  %479 = vmatpush1.xpose.msra.mxu0 0.0
  %480 = vmatprep.subr.mxu0 0.0
  %481 = vmatpush1.xpose.msra.mxu0 0.0
  %482 = vmatprep.subr.mxu0 0.0
  %483 = vmatpush1.xpose.msra.mxu0 0.0
  %484 = vmatprep.subr.mxu0 0.0
  %485 = vmatpush1.xpose.msra.mxu0 0.0
  %486 = vmatprep.subr.mxu0 0.0
  %487 = vmatpush1.xpose.msra.mxu0 0.0
  %488 = vmatprep.subr.mxu0 0.0
  %489 = vmatpush1.xpose.msra.mxu0 0.0
  %490 = vmatprep.subr.mxu0 0.0
  %491 = vmatpush1.xpose.msra.mxu0 0.0
  %492 = vmatprep.subr.mxu0 0.0
  %493 = vmatpush1.xpose.msra.mxu0 0.0
  %494 = vmatprep.subr.mxu0 0.0
  %495 = vmatpush1.xpose.msra.mxu0 0.0
  %496 = vmatprep.subr.mxu0 0.0
  %497 = vmatpush1.xpose.msra.mxu0 0.0
  %498 = vmatprep.subr.mxu0 0.0
  %499 = vmatpush1.xpose.msra.mxu0 0.0
  %500 = vmatprep.subr.mxu0 0.0
  %501 = vmatpush1.xpose.msra.mxu0 0.0
  %502 = vmatprep.subr.mxu0 0.0
  %503 = vmatpush1.xpose.msra.mxu0 0.0
  %504 = vmatprep.subr.mxu0 0.0
  %505 = vmatpush1.xpose.msra.mxu0 0.0
  %506 = vmatprep.subr.mxu0 0.0
  %507 = vmatpush1.xpose.msra.mxu0 %v317
  %508 = vmatprep.subr.mxu0 0.0
  %509 = vmatpush2.xpose.msra.mxu0 0.0
  %510 = vmatprep.subr.mxu0 0.0
  %511 = vmatpush2.xpose.msra.mxu0 0.0
  %512 = vmatprep.subr.mxu0 0.0
  %513 = vmatpush2.xpose.msra.mxu0 0.0
  %514 = vmatprep.subr.mxu0 0.0
  %515 = vmatpush2.xpose.msra.mxu0 0.0
  %516 = vmatprep.subr.mxu0 0.0
  %517 = vmatpush2.xpose.msra.mxu0 0.0
  %518 = vmatprep.subr.mxu0 0.0
  %519 = vmatpush2.xpose.msra.mxu0 0.0
  %520 = vmatprep.subr.mxu0 0.0
  %521 = vmatpush2.xpose.msra.mxu0 0.0
  %522 = vmatprep.subr.mxu0 0.0
  %523 = vmatpush2.xpose.msra.mxu0 0.0
  %524 = vmatprep.subr.mxu0 0.0
  %525 = vmatpush2.xpose.msra.mxu0 0.0
  %526 = vmatprep.subr.mxu0 0.0
  %527 = vmatpush2.xpose.msra.mxu0 0.0
  %528 = vmatprep.subr.mxu0 0.0
  %529 = vmatpush2.xpose.msra.mxu0 0.0
  %530 = vmatprep.subr.mxu0 0.0
  %531 = vmatpush2.xpose.msra.mxu0 0.0
  %532 = vmatprep.subr.mxu0 0.0
  %533 = vmatpush2.xpose.msra.mxu0 0.0
  %534 = vmatprep.subr.mxu0 0.0
  %535 = vmatpush2.xpose.msra.mxu0 0.0
  %536 = vmatprep.subr.mxu0 0.0
  %537 = vmatpush2.xpose.msra.mxu0 0.0
  %538 = vmatprep.subr.mxu0 0.0
  %539 = vmatpush2.xpose.msra.mxu0 0.0
  %540 = vmatprep.mubr.f32.mxu0 0.0
  %541 = vmatmul.mubr.f32.gmra.mxu0 %v304
  %v542 = vpop.f32.mrf.mxu0
  %v543 = vadd.f32 0.0, %v542
  %v544 = vpop.f32.mrf.mxu0
  %545 = vdwg.mxu0
  %546 = vmatprep.subr.mxu0 0.0
  %547 = vmatpush1.xpose.msra.mxu0 0.0
  %548 = vmatprep.subr.mxu0 0.0
  %549 = vmatpush1.xpose.msra.mxu0 0.0
  %550 = vmatprep.subr.mxu0 0.0
  %551 = vmatpush1.xpose.msra.mxu0 0.0
  %552 = vmatprep.subr.mxu0 0.0
  %553 = vmatpush1.xpose.msra.mxu0 0.0
  %554 = vmatprep.subr.mxu0 0.0
  %555 = vmatpush1.xpose.msra.mxu0 0.0
  %556 = vmatprep.subr.mxu0 0.0
  %557 = vmatpush1.xpose.msra.mxu0 0.0
  %558 = vmatprep.subr.mxu0 0.0
  %559 = vmatpush1.xpose.msra.mxu0 0.0
  %560 = vmatprep.subr.mxu0 0.0
  %561 = vmatpush1.xpose.msra.mxu0 0.0
  %562 = vmatprep.subr.mxu0 0.0
  %563 = vmatpush1.xpose.msra.mxu0 0.0
  %564 = vmatprep.subr.mxu0 0.0
  %565 = vmatpush1.xpose.msra.mxu0 0.0
  %566 = vmatprep.subr.mxu0 0.0
  %567 = vmatpush1.xpose.msra.mxu0 0.0
  %568 = vmatprep.subr.mxu0 0.0
  %569 = vmatpush1.xpose.msra.mxu0 0.0
  %570 = vmatprep.subr.mxu0 0.0
  %571 = vmatpush1.xpose.msra.mxu0 0.0
  %572 = vmatprep.subr.mxu0 0.0
  %573 = vmatpush1.xpose.msra.mxu0 0.0
  %574 = vmatprep.subr.mxu0 0.0
  %575 = vmatpush1.xpose.msra.mxu0 0.0
  %576 = vmatprep.subr.mxu0 0.0
  %577 = vmatpush1.xpose.msra.mxu0 %v318
  %578 = vmatprep.subr.mxu0 0.0
  %579 = vmatpush2.xpose.msra.mxu0 0.0
  %580 = vmatprep.subr.mxu0 0.0
  %581 = vmatpush2.xpose.msra.mxu0 0.0
  %582 = vmatprep.subr.mxu0 0.0
  %583 = vmatpush2.xpose.msra.mxu0 0.0
  %584 = vmatprep.subr.mxu0 0.0
  %585 = vmatpush2.xpose.msra.mxu0 0.0
  %586 = vmatprep.subr.mxu0 0.0
  %587 = vmatpush2.xpose.msra.mxu0 0.0
  %588 = vmatprep.subr.mxu0 0.0
  %589 = vmatpush2.xpose.msra.mxu0 0.0
  %590 = vmatprep.subr.mxu0 0.0
  %591 = vmatpush2.xpose.msra.mxu0 0.0
  %592 = vmatprep.subr.mxu0 0.0
  %593 = vmatpush2.xpose.msra.mxu0 0.0
  %594 = vmatprep.subr.mxu0 0.0
  %595 = vmatpush2.xpose.msra.mxu0 0.0
  %596 = vmatprep.subr.mxu0 0.0
  %597 = vmatpush2.xpose.msra.mxu0 0.0
  %598 = vmatprep.subr.mxu0 0.0
  %599 = vmatpush2.xpose.msra.mxu0 0.0
  %600 = vmatprep.subr.mxu0 0.0
  %601 = vmatpush2.xpose.msra.mxu0 0.0
  %602 = vmatprep.subr.mxu0 0.0
  %603 = vmatpush2.xpose.msra.mxu0 0.0
  %604 = vmatprep.subr.mxu0 0.0
  %605 = vmatpush2.xpose.msra.mxu0 0.0
  %606 = vmatprep.subr.mxu0 0.0
  %607 = vmatpush2.xpose.msra.mxu0 0.0
  %608 = vmatprep.subr.mxu0 0.0
  %609 = vmatpush2.xpose.msra.mxu0 0.0
  %610 = vmatprep.mubr.f32.mxu0 0.0
  %611 = vmatmul.mubr.f32.gmra.mxu0 %v305
  %v612 = vpop.f32.mrf.mxu0
  %v613 = vadd.f32 0.0, %v612
  %v614 = vpop.f32.mrf.mxu0
  %615 = vdwg.mxu0
  %616 = vmatprep.subr.mxu0 0.0
  %617 = vmatpush1.xpose.msra.mxu0 0.0
  %618 = vmatprep.subr.mxu0 0.0
  %619 = vmatpush1.xpose.msra.mxu0 0.0
  %620 = vmatprep.subr.mxu0 0.0
  %621 = vmatpush1.xpose.msra.mxu0 0.0
  %622 = vmatprep.subr.mxu0 0.0
  %623 = vmatpush1.xpose.msra.mxu0 0.0
  %624 = vmatprep.subr.mxu0 0.0
  %625 = vmatpush1.xpose.msra.mxu0 0.0
  %626 = vmatprep.subr.mxu0 0.0
  %627 = vmatpush1.xpose.msra.mxu0 0.0
  %628 = vmatprep.subr.mxu0 0.0
  %629 = vmatpush1.xpose.msra.mxu0 0.0
  %630 = vmatprep.subr.mxu0 0.0
  %631 = vmatpush1.xpose.msra.mxu0 0.0
  %632 = vmatprep.subr.mxu0 0.0
  %633 = vmatpush1.xpose.msra.mxu0 0.0
  %634 = vmatprep.subr.mxu0 0.0
  %635 = vmatpush1.xpose.msra.mxu0 0.0
  %636 = vmatprep.subr.mxu0 0.0
  %637 = vmatpush1.xpose.msra.mxu0 0.0
  %638 = vmatprep.subr.mxu0 0.0
  %639 = vmatpush1.xpose.msra.mxu0 0.0
  %640 = vmatprep.subr.mxu0 0.0
  %641 = vmatpush1.xpose.msra.mxu0 0.0
  %642 = vmatprep.subr.mxu0 0.0
  %643 = vmatpush1.xpose.msra.mxu0 0.0
  %644 = vmatprep.subr.mxu0 0.0
  %645 = vmatpush1.xpose.msra.mxu0 0.0
  %646 = vmatprep.subr.mxu0 0.0
  %647 = vmatpush1.xpose.msra.mxu0 %v319
  %648 = vmatprep.subr.mxu0 0.0
  %649 = vmatpush2.xpose.msra.mxu0 0.0
  %650 = vmatprep.subr.mxu0 0.0
  %651 = vmatpush2.xpose.msra.mxu0 0.0
  %652 = vmatprep.subr.mxu0 0.0
  %653 = vmatpush2.xpose.msra.mxu0 0.0
  %654 = vmatprep.subr.mxu0 0.0
  %655 = vmatpush2.xpose.msra.mxu0 0.0
  %656 = vmatprep.subr.mxu0 0.0
  %657 = vmatpush2.xpose.msra.mxu0 0.0
  %658 = vmatprep.subr.mxu0 0.0
  %659 = vmatpush2.xpose.msra.mxu0 0.0
  %660 = vmatprep.subr.mxu0 0.0
  %661 = vmatpush2.xpose.msra.mxu0 0.0
  %662 = vmatprep.subr.mxu0 0.0
  %663 = vmatpush2.xpose.msra.mxu0 0.0
  %664 = vmatprep.subr.mxu0 0.0
  %665 = vmatpush2.xpose.msra.mxu0 0.0
  %666 = vmatprep.subr.mxu0 0.0
  %667 = vmatpush2.xpose.msra.mxu0 0.0
  %668 = vmatprep.subr.mxu0 0.0
  %669 = vmatpush2.xpose.msra.mxu0 0.0
  %670 = vmatprep.subr.mxu0 0.0
  %671 = vmatpush2.xpose.msra.mxu0 0.0
  %672 = vmatprep.subr.mxu0 0.0
  %673 = vmatpush2.xpose.msra.mxu0 0.0
  %674 = vmatprep.subr.mxu0 0.0
  %675 = vmatpush2.xpose.msra.mxu0 0.0
  %676 = vmatprep.subr.mxu0 0.0
  %677 = vmatpush2.xpose.msra.mxu0 0.0
  %678 = vmatprep.subr.mxu0 0.0
  %679 = vmatpush2.xpose.msra.mxu0 0.0
  %680 = vmatprep.mubr.f32.mxu0 0.0
  %681 = vmatmul.mubr.f32.gmra.mxu0 %v306
  %v682 = vpop.f32.mrf.mxu0
  %v683 = vadd.f32 0.0, %v682
  %v684 = vpop.f32.mrf.mxu0
  %685 = vdwg.mxu0
  %686 = vmatprep.subr.mxu0 0.0
  %687 = vmatpush1.xpose.msra.mxu0 0.0
  %688 = vmatprep.subr.mxu0 0.0
  %689 = vmatpush1.xpose.msra.mxu0 0.0
  %690 = vmatprep.subr.mxu0 0.0
  %691 = vmatpush1.xpose.msra.mxu0 0.0
  %692 = vmatprep.subr.mxu0 0.0
  %693 = vmatpush1.xpose.msra.mxu0 0.0
  %694 = vmatprep.subr.mxu0 0.0
  %695 = vmatpush1.xpose.msra.mxu0 0.0
  %696 = vmatprep.subr.mxu0 0.0
  %697 = vmatpush1.xpose.msra.mxu0 0.0
  %698 = vmatprep.subr.mxu0 0.0
  %699 = vmatpush1.xpose.msra.mxu0 0.0
  %700 = vmatprep.subr.mxu0 0.0
  %701 = vmatpush1.xpose.msra.mxu0 0.0
  %702 = vmatprep.subr.mxu0 0.0
  %703 = vmatpush1.xpose.msra.mxu0 0.0
  %704 = vmatprep.subr.mxu0 0.0
  %705 = vmatpush1.xpose.msra.mxu0 0.0
  %706 = vmatprep.subr.mxu0 0.0
  %707 = vmatpush1.xpose.msra.mxu0 0.0
  %708 = vmatprep.subr.mxu0 0.0
  %709 = vmatpush1.xpose.msra.mxu0 0.0
  %710 = vmatprep.subr.mxu0 0.0
  %711 = vmatpush1.xpose.msra.mxu0 0.0
  %712 = vmatprep.subr.mxu0 0.0
  %713 = vmatpush1.xpose.msra.mxu0 0.0
  %714 = vmatprep.subr.mxu0 0.0
  %715 = vmatpush1.xpose.msra.mxu0 0.0
  %716 = vmatprep.subr.mxu0 0.0
  %717 = vmatpush1.xpose.msra.mxu0 %v320
  %718 = vmatprep.subr.mxu0 0.0
  %719 = vmatpush2.xpose.msra.mxu0 0.0
  %720 = vmatprep.subr.mxu0 0.0
  %721 = vmatpush2.xpose.msra.mxu0 0.0
  %722 = vmatprep.subr.mxu0 0.0
  %723 = vmatpush2.xpose.msra.mxu0 0.0
  %724 = vmatprep.subr.mxu0 0.0
  %725 = vmatpush2.xpose.msra.mxu0 0.0
  %726 = vmatprep.subr.mxu0 0.0
  %727 = vmatpush2.xpose.msra.mxu0 0.0
  %728 = vmatprep.subr.mxu0 0.0
  %729 = vmatpush2.xpose.msra.mxu0 0.0
  %730 = vmatprep.subr.mxu0 0.0
  %731 = vmatpush2.xpose.msra.mxu0 0.0
  %732 = vmatprep.subr.mxu0 0.0
  %733 = vmatpush2.xpose.msra.mxu0 0.0
  %734 = vmatprep.subr.mxu0 0.0
  %735 = vmatpush2.xpose.msra.mxu0 0.0
  %736 = vmatprep.subr.mxu0 0.0
  %737 = vmatpush2.xpose.msra.mxu0 0.0
  %738 = vmatprep.subr.mxu0 0.0
  %739 = vmatpush2.xpose.msra.mxu0 0.0
  %740 = vmatprep.subr.mxu0 0.0
  %741 = vmatpush2.xpose.msra.mxu0 0.0
  %742 = vmatprep.subr.mxu0 0.0
  %743 = vmatpush2.xpose.msra.mxu0 0.0
  %744 = vmatprep.subr.mxu0 0.0
  %745 = vmatpush2.xpose.msra.mxu0 0.0
  %746 = vmatprep.subr.mxu0 0.0
  %747 = vmatpush2.xpose.msra.mxu0 0.0
  %748 = vmatprep.subr.mxu0 0.0
  %749 = vmatpush2.xpose.msra.mxu0 0.0
  %750 = vmatprep.mubr.f32.mxu0 0.0
  %751 = vmatmul.mubr.f32.gmra.mxu0 %v307
  %v752 = vpop.f32.mrf.mxu0
  %v753 = vadd.f32 0.0, %v752
  %v754 = vpop.f32.mrf.mxu0
  %755 = vdwg.mxu0
  %756 = vmatprep.subr.mxu0 0.0
  %757 = vmatpush1.xpose.msra.mxu0 0.0
  %758 = vmatprep.subr.mxu0 0.0
  %759 = vmatpush1.xpose.msra.mxu0 0.0
  %760 = vmatprep.subr.mxu0 0.0
  %761 = vmatpush1.xpose.msra.mxu0 0.0
  %762 = vmatprep.subr.mxu0 0.0
  %763 = vmatpush1.xpose.msra.mxu0 0.0
  %764 = vmatprep.subr.mxu0 0.0
  %765 = vmatpush1.xpose.msra.mxu0 0.0
  %766 = vmatprep.subr.mxu0 0.0
  %767 = vmatpush1.xpose.msra.mxu0 0.0
  %768 = vmatprep.subr.mxu0 0.0
  %769 = vmatpush1.xpose.msra.mxu0 0.0
  %770 = vmatprep.subr.mxu0 0.0
  %771 = vmatpush1.xpose.msra.mxu0 0.0
  %772 = vmatprep.subr.mxu0 0.0
  %773 = vmatpush1.xpose.msra.mxu0 0.0
  %774 = vmatprep.subr.mxu0 0.0
  %775 = vmatpush1.xpose.msra.mxu0 0.0
  %776 = vmatprep.subr.mxu0 0.0
  %777 = vmatpush1.xpose.msra.mxu0 0.0
  %778 = vmatprep.subr.mxu0 0.0
  %779 = vmatpush1.xpose.msra.mxu0 0.0
  %780 = vmatprep.subr.mxu0 0.0
  %781 = vmatpush1.xpose.msra.mxu0 0.0
  %782 = vmatprep.subr.mxu0 0.0
  %783 = vmatpush1.xpose.msra.mxu0 0.0
  %784 = vmatprep.subr.mxu0 0.0
  %785 = vmatpush1.xpose.msra.mxu0 0.0
  %786 = vmatprep.subr.mxu0 0.0
  %787 = vmatpush1.xpose.msra.mxu0 %v321
  %788 = vmatprep.subr.mxu0 0.0
  %789 = vmatpush2.xpose.msra.mxu0 0.0
  %790 = vmatprep.subr.mxu0 0.0
  %791 = vmatpush2.xpose.msra.mxu0 0.0
  %792 = vmatprep.subr.mxu0 0.0
  %793 = vmatpush2.xpose.msra.mxu0 0.0
  %794 = vmatprep.subr.mxu0 0.0
  %795 = vmatpush2.xpose.msra.mxu0 0.0
  %796 = vmatprep.subr.mxu0 0.0
  %797 = vmatpush2.xpose.msra.mxu0 0.0
  %798 = vmatprep.subr.mxu0 0.0
  %799 = vmatpush2.xpose.msra.mxu0 0.0
  %800 = vmatprep.subr.mxu0 0.0
  %801 = vmatpush2.xpose.msra.mxu0 0.0
  %802 = vmatprep.subr.mxu0 0.0
  %803 = vmatpush2.xpose.msra.mxu0 0.0
  %804 = vmatprep.subr.mxu0 0.0
  %805 = vmatpush2.xpose.msra.mxu0 0.0
  %806 = vmatprep.subr.mxu0 0.0
  %807 = vmatpush2.xpose.msra.mxu0 0.0
  %808 = vmatprep.subr.mxu0 0.0
  %809 = vmatpush2.xpose.msra.mxu0 0.0
  %810 = vmatprep.subr.mxu0 0.0
  %811 = vmatpush2.xpose.msra.mxu0 0.0
  %812 = vmatprep.subr.mxu0 0.0
  %813 = vmatpush2.xpose.msra.mxu0 0.0
  %814 = vmatprep.subr.mxu0 0.0
  %815 = vmatpush2.xpose.msra.mxu0 0.0
  %816 = vmatprep.subr.mxu0 0.0
  %817 = vmatpush2.xpose.msra.mxu0 0.0
  %818 = vmatprep.subr.mxu0 0.0
  %819 = vmatpush2.xpose.msra.mxu0 0.0
  %820 = vmatprep.mubr.f32.mxu0 0.0
  %821 = vmatmul.mubr.f32.gmra.mxu0 %v308
  %v822 = vpop.f32.mrf.mxu0
  %v823 = vadd.f32 0.0, %v822
  %v824 = vpop.f32.mrf.mxu0
  %825 = vdwg.mxu0
  %826 = vmatprep.subr.mxu0 0.0
  %827 = vmatpush1.xpose.msra.mxu0 0.0
  %828 = vmatprep.subr.mxu0 0.0
  %829 = vmatpush1.xpose.msra.mxu0 0.0
  %830 = vmatprep.subr.mxu0 0.0
  %831 = vmatpush1.xpose.msra.mxu0 0.0
  %832 = vmatprep.subr.mxu0 0.0
  %833 = vmatpush1.xpose.msra.mxu0 0.0
  %834 = vmatprep.subr.mxu0 0.0
  %835 = vmatpush1.xpose.msra.mxu0 0.0
  %836 = vmatprep.subr.mxu0 0.0
  %837 = vmatpush1.xpose.msra.mxu0 0.0
  %838 = vmatprep.subr.mxu0 0.0
  %839 = vmatpush1.xpose.msra.mxu0 0.0
  %840 = vmatprep.subr.mxu0 0.0
  %841 = vmatpush1.xpose.msra.mxu0 0.0
  %842 = vmatprep.subr.mxu0 0.0
  %843 = vmatpush1.xpose.msra.mxu0 0.0
  %844 = vmatprep.subr.mxu0 0.0
  %845 = vmatpush1.xpose.msra.mxu0 0.0
  %846 = vmatprep.subr.mxu0 0.0
  %847 = vmatpush1.xpose.msra.mxu0 0.0
  %848 = vmatprep.subr.mxu0 0.0
  %849 = vmatpush1.xpose.msra.mxu0 0.0
  %850 = vmatprep.subr.mxu0 0.0
  %851 = vmatpush1.xpose.msra.mxu0 0.0
  %852 = vmatprep.subr.mxu0 0.0
  %853 = vmatpush1.xpose.msra.mxu0 0.0
  %854 = vmatprep.subr.mxu0 0.0
  %855 = vmatpush1.xpose.msra.mxu0 0.0
  %856 = vmatprep.subr.mxu0 0.0
  %857 = vmatpush1.xpose.msra.mxu0 %v322
  %858 = vmatprep.subr.mxu0 0.0
  %859 = vmatpush2.xpose.msra.mxu0 0.0
  %860 = vmatprep.subr.mxu0 0.0
  %861 = vmatpush2.xpose.msra.mxu0 0.0
  %862 = vmatprep.subr.mxu0 0.0
  %863 = vmatpush2.xpose.msra.mxu0 0.0
  %864 = vmatprep.subr.mxu0 0.0
  %865 = vmatpush2.xpose.msra.mxu0 0.0
  %866 = vmatprep.subr.mxu0 0.0
  %867 = vmatpush2.xpose.msra.mxu0 0.0
  %868 = vmatprep.subr.mxu0 0.0
  %869 = vmatpush2.xpose.msra.mxu0 0.0
  %870 = vmatprep.subr.mxu0 0.0
  %871 = vmatpush2.xpose.msra.mxu0 0.0
  %872 = vmatprep.subr.mxu0 0.0
  %873 = vmatpush2.xpose.msra.mxu0 0.0
  %874 = vmatprep.subr.mxu0 0.0
  %875 = vmatpush2.xpose.msra.mxu0 0.0
  %876 = vmatprep.subr.mxu0 0.0
  %877 = vmatpush2.xpose.msra.mxu0 0.0
  %878 = vmatprep.subr.mxu0 0.0
  %879 = vmatpush2.xpose.msra.mxu0 0.0
  %880 = vmatprep.subr.mxu0 0.0
  %881 = vmatpush2.xpose.msra.mxu0 0.0
  %882 = vmatprep.subr.mxu0 0.0
  %883 = vmatpush2.xpose.msra.mxu0 0.0
  %884 = vmatprep.subr.mxu0 0.0
  %885 = vmatpush2.xpose.msra.mxu0 0.0
  %886 = vmatprep.subr.mxu0 0.0
  %887 = vmatpush2.xpose.msra.mxu0 0.0
  %888 = vmatprep.subr.mxu0 0.0
  %889 = vmatpush2.xpose.msra.mxu0 0.0
  %890 = vmatprep.mubr.f32.mxu0 0.0
  %891 = vmatmul.mubr.f32.gmra.mxu0 %v309
  %v892 = vpop.f32.mrf.mxu0
  %v893 = vadd.f32 0.0, %v892
  %v894 = vpop.f32.mrf.mxu0
  %895 = vdwg.mxu0
  %v896 = vmul.f32 %v403, 0.17677669
  %v897 = vmul.f32 %v473, 0.17677669
  %v898 = vmul.f32 %v543, 0.17677669
  %v899 = vmul.f32 %v613, 0.17677669
  %v900 = vmul.f32 %v683, 0.17677669
  %v901 = vmul.f32 %v753, 0.17677669
  %v902 = vmul.f32 %v823, 0.17677669
  %v903 = vmul.f32 %v893, 0.17677669
  %v904 = vld [vmem:[%s5 + $0x10] sm:$0xff]
  %v906 = vcombine.high %v904, %v904
  %v908 = vunpack.c.l.s4 1966171168
  %v909 = vunpack.c.0.s8 %v908
  %v910 = vlaneseq
  %v911 = vshrl.u32 %v910, 7
  %v912 = vsub.s32 %v909, %v911
  %v913 = vrot.slane %v904, %v912
  %v915 = vunpack.c.l.s4 1966171168
  %v916 = vunpack.c.0.s8 %v915
  %v917 = vlaneseq
  %v918 = vshrl.u32 %v917, 7
  %v919 = vsub.s32 %v916, %v918
  %v920 = vrot.slane %v906, %v919
  %v921 = vcombine.high %v913, %v913
  %v922 = vcombine.high %v920, %v920
  %v924 = vunpack.c.l.s4 1966171168
  %v925 = vunpack.c.0.s8 %v924
  %v926 = vlaneseq
  %v927 = vshrl.u32 %v926, 7
  %v928 = vsub.s32 %v925, %v927
  %v929 = vrot.slane %v913, %v928
  %v931 = vunpack.c.l.s4 1966171168
  %v932 = vunpack.c.0.s8 %v931
  %v933 = vlaneseq
  %v934 = vshrl.u32 %v933, 7
  %v935 = vsub.s32 %v932, %v934
  %v936 = vrot.slane %v920, %v935
  %v938 = vunpack.c.l.s4 1966171168
  %v939 = vunpack.c.0.s8 %v938
  %v940 = vlaneseq
  %v941 = vshrl.u32 %v940, 7
  %v942 = vsub.s32 %v939, %v941
  %v943 = vrot.slane %v921, %v942
  %v945 = vunpack.c.l.s4 1966171168
  %v946 = vunpack.c.0.s8 %v945
  %v947 = vlaneseq
  %v948 = vshrl.u32 %v947, 7
  %v949 = vsub.s32 %v946, %v948
  %v950 = vrot.slane %v922, %v949
  %v951 = vcombine.high %v929, %v929
  %v952 = vcombine.high %v936, %v936
  %v953 = vcombine.high %v943, %v943
  %v954 = vcombine.high %v950, %v950
  %v955 = vlaneseq
  %v956 = vshrl.u32 %v955, 7
  %v957 = vsub.s32 0, %v956
  %v958 = vrot.slane %v929, %v957
  %v959 = vlaneseq
  %v960 = vshrl.u32 %v959, 7
  %v961 = vsub.s32 0, %v960
  %v962 = vrot.slane %v943, %v961
  %v963 = vlaneseq
  %v964 = vshrl.u32 %v963, 7
  %v965 = vsub.s32 0, %v964
  %v966 = vrot.slane %v951, %v965
  %v967 = vlaneseq
  %v968 = vshrl.u32 %v967, 7
  %v969 = vsub.s32 0, %v968
  %v970 = vrot.slane %v953, %v969
  %v971 = vlaneseq
  %v972 = vshrl.u32 %v971, 7
  %v973 = vsub.s32 0, %v972
  %v974 = vrot.slane %v936, %v973
  %v975 = vlaneseq
  %v976 = vshrl.u32 %v975, 7
  %v977 = vsub.s32 0, %v976
  %v978 = vrot.slane %v950, %v977
  %v979 = vlaneseq
  %v980 = vshrl.u32 %v979, 7
  %v981 = vsub.s32 0, %v980
  %v982 = vrot.slane %v952, %v981
  %v983 = vlaneseq
  %v984 = vshrl.u32 %v983, 7
  %v985 = vsub.s32 0, %v984
  %v986 = vrot.slane %v954, %v985
  %v995 = vadd.f32 %v896, %v958
  %v996 = vadd.f32 %v897, %v962
  %v997 = vadd.f32 %v898, %v966
  %v998 = vadd.f32 %v899, %v970
  %v999 = vadd.f32 %v900, %v974
  %v1000 = vadd.f32 %v901, %v978
  %v1001 = vadd.f32 %v902, %v982
  %v1002 = vadd.f32 %v903, %v986
  %vm1003 = vcmask 64512
  %v1004 = vsel %vm1003, %v995, -inf
  %1005 = vmax.xlane.f32.xlu0 %v1004
  %v1006 = vpop.xlane.xlu0 %1005
  %v1007 = vsel %vm1003, %v996, -inf
  %1008 = vmax.xlane.f32.xlu0 %v1007
  %v1009 = vpop.xlane.xlu0 %1008
  %v1010 = vsel %vm1003, %v997, -inf
  %1011 = vmax.xlane.f32.xlu0 %v1010
  %v1012 = vpop.xlane.xlu0 %1011
  %v1013 = vsel %vm1003, %v998, -inf
  %1014 = vmax.xlane.f32.xlu0 %v1013
  %v1015 = vpop.xlane.xlu0 %1014
  %v1016 = vsel %vm1003, %v999, -inf
  %1017 = vmax.xlane.f32.xlu0 %v1016
  %v1018 = vpop.xlane.xlu0 %1017
  %v1019 = vsel %vm1003, %v1000, -inf
  %1020 = vmax.xlane.f32.xlu0 %v1019
  %v1021 = vpop.xlane.xlu0 %1020
  %v1022 = vsel %vm1003, %v1001, -inf
  %1023 = vmax.xlane.f32.xlu0 %v1022
  %v1024 = vpop.xlane.xlu0 %1023
  %v1025 = vsel %vm1003, %v1002, -inf
  %1026 = vmax.xlane.f32.xlu0 %v1025
  %v1027 = vpop.xlane.xlu0 %1026
  %v1028 = vsub.f32 %v995, %v1006
  %v1029 = vsub.f32 %v996, %v1009
  %v1030 = vsub.f32 %v997, %v1012
  %v1031 = vsub.f32 %v998, %v1015
  %v1032 = vsub.f32 %v999, %v1018
  %v1033 = vsub.f32 %v1000, %v1021
  %v1034 = vsub.f32 %v1001, %v1024
  %v1035 = vsub.f32 %v1002, %v1027
  %v1036 = vmul.f32 %v1028, 1.442695
  %v1037 = vpow.pop %v1036
  %v1038 = vmul.f32 %v1029, 1.442695
  %v1039 = vpow.pop %v1038
  %v1040 = vmul.f32 %v1030, 1.442695
  %v1041 = vpow.pop %v1040
  %v1042 = vmul.f32 %v1031, 1.442695
  %v1043 = vpow.pop %v1042
  %v1044 = vmul.f32 %v1032, 1.442695
  %v1045 = vpow.pop %v1044
  %v1046 = vmul.f32 %v1033, 1.442695
  %v1047 = vpow.pop %v1046
  %v1048 = vmul.f32 %v1034, 1.442695
  %v1049 = vpow.pop %v1048
  %v1050 = vmul.f32 %v1035, 1.442695
  %v1051 = vpow.pop %v1050
  %v1052 = vsel %vm1003, %v1037, 0.0
  %1053 = vadd.xlane.f32.xlu0 %v1052
  %v1054 = vpop.xlane.xlu0 %1053
  %v1055 = vsel %vm1003, %v1039, 0.0
  %1056 = vadd.xlane.f32.xlu0 %v1055
  %v1057 = vpop.xlane.xlu0 %1056
  %v1058 = vsel %vm1003, %v1041, 0.0
  %1059 = vadd.xlane.f32.xlu0 %v1058
  %v1060 = vpop.xlane.xlu0 %1059
  %v1061 = vsel %vm1003, %v1043, 0.0
  %1062 = vadd.xlane.f32.xlu0 %v1061
  %v1063 = vpop.xlane.xlu0 %1062
  %v1064 = vsel %vm1003, %v1045, 0.0
  %1065 = vadd.xlane.f32.xlu0 %v1064
  %v1066 = vpop.xlane.xlu0 %1065
  %v1067 = vsel %vm1003, %v1047, 0.0
  %1068 = vadd.xlane.f32.xlu0 %v1067
  %v1069 = vpop.xlane.xlu0 %1068
  %v1070 = vsel %vm1003, %v1049, 0.0
  %1071 = vadd.xlane.f32.xlu0 %v1070
  %v1072 = vpop.xlane.xlu0 %1071
  %v1073 = vsel %vm1003, %v1051, 0.0
  %1074 = vadd.xlane.f32.xlu0 %v1073
  %v1075 = vpop.xlane.xlu0 %1074
  %v1076 = vrcp.pop %v1054
  %v1077 = vmul.f32 %v1037, %v1076
  %v1078 = vrcp.pop %v1057
  %v1079 = vmul.f32 %v1039, %v1078
  %v1080 = vrcp.pop %v1060
  %v1081 = vmul.f32 %v1041, %v1080
  %v1082 = vrcp.pop %v1063
  %v1083 = vmul.f32 %v1043, %v1082
  %v1084 = vrcp.pop %v1066
  %v1085 = vmul.f32 %v1045, %v1084
  %v1086 = vrcp.pop %v1069
  %v1087 = vmul.f32 %v1047, %v1086
  %v1088 = vrcp.pop %v1072
  %v1089 = vmul.f32 %v1049, %v1088
  %v1090 = vrcp.pop %v1075
  %v1091 = vmul.f32 %v1051, %v1090
  %v1093 = vsel %vm1003, %v1077, 0
  %1095 = vmatprep.subr.mxu0 0.0
  %1096 = vmatpush1.msra.mxu0 0.0
  %1097 = vmatprep.subr.mxu0 0.0
  %1098 = vmatpush1.msra.mxu0 0.0
  %1099 = vmatprep.subr.mxu0 0.0
  %1100 = vmatpush1.msra.mxu0 0.0
  %1101 = vmatprep.subr.mxu0 0.0
  %1102 = vmatpush1.msra.mxu0 0.0
  %1103 = vmatprep.subr.mxu0 0.0
  %1104 = vmatpush1.msra.mxu0 0.0
  %1105 = vmatprep.subr.mxu0 0.0
  %1106 = vmatpush1.msra.mxu0 0.0
  %1107 = vmatprep.subr.mxu0 0.0
  %1108 = vmatpush1.msra.mxu0 0.0
  %1109 = vmatprep.subr.mxu0 0.0
  %1110 = vmatpush1.msra.mxu0 0.0
  %1111 = vmatprep.subr.mxu0 0.0
  %1112 = vmatpush1.msra.mxu0 0.0
  %1113 = vmatprep.subr.mxu0 0.0
  %1114 = vmatpush1.msra.mxu0 0.0
  %1115 = vmatprep.subr.mxu0 0.0
  %1116 = vmatpush1.msra.mxu0 0.0
  %1117 = vmatprep.subr.mxu0 0.0
  %1118 = vmatpush1.msra.mxu0 0.0
  %1119 = vmatprep.subr.mxu0 0.0
  %1120 = vmatpush1.msra.mxu0 0.0
  %1121 = vmatprep.subr.mxu0 0.0
  %1122 = vmatpush1.msra.mxu0 0.0
  %1123 = vmatprep.subr.mxu0 0.0
  %1124 = vmatpush1.msra.mxu0 0.0
  %1125 = vmatprep.subr.mxu0 0.0
  %1126 = vmatpush1.msra.mxu0 %v328
  %1127 = vmatprep.subr.mxu0 0.0
  %1128 = vmatpush2.msra.mxu0 0.0
  %1129 = vmatprep.subr.mxu0 0.0
  %1130 = vmatpush2.msra.mxu0 0.0
  %1131 = vmatprep.subr.mxu0 0.0
  %1132 = vmatpush2.msra.mxu0 0.0
  %1133 = vmatprep.subr.mxu0 0.0
  %1134 = vmatpush2.msra.mxu0 0.0
  %1135 = vmatprep.subr.mxu0 0.0
  %1136 = vmatpush2.msra.mxu0 0.0
  %1137 = vmatprep.subr.mxu0 0.0
  %1138 = vmatpush2.msra.mxu0 0.0
  %1139 = vmatprep.subr.mxu0 0.0
  %1140 = vmatpush2.msra.mxu0 0.0
  %1141 = vmatprep.subr.mxu0 0.0
  %1142 = vmatpush2.msra.mxu0 0.0
  %1143 = vmatprep.subr.mxu0 0.0
  %1144 = vmatpush2.msra.mxu0 0.0
  %1145 = vmatprep.subr.mxu0 0.0
  %1146 = vmatpush2.msra.mxu0 0.0
  %1147 = vmatprep.subr.mxu0 0.0
  %1148 = vmatpush2.msra.mxu0 0.0
  %1149 = vmatprep.subr.mxu0 0.0
  %1150 = vmatpush2.msra.mxu0 0.0
  %1151 = vmatprep.subr.mxu0 0.0
  %1152 = vmatpush2.msra.mxu0 0.0
  %1153 = vmatprep.subr.mxu0 0.0
  %1154 = vmatpush2.msra.mxu0 0.0
  %1155 = vmatprep.subr.mxu0 0.0
  %1156 = vmatpush2.msra.mxu0 0.0
  %1157 = vmatprep.subr.mxu0 0.0
  %1158 = vmatpush2.msra.mxu0 0.0
  %1159 = vmatprep.mubr.f32.mxu0 0.0
  %1160 = vmatmul.mubr.f32.gmra.mxu0 %v1093
  %v1161 = vpop.f32.mrf.mxu0
  %v1162 = vadd.f32 0.0, %v1161
  %v1163 = vpop.f32.mrf.mxu0
  %1164 = vdwg.mxu0
  %v1166 = vsel %vm1003, %v1079, 0
  %1168 = vmatprep.subr.mxu0 0.0
  %1169 = vmatpush1.msra.mxu0 0.0
  %1170 = vmatprep.subr.mxu0 0.0
  %1171 = vmatpush1.msra.mxu0 0.0
  %1172 = vmatprep.subr.mxu0 0.0
  %1173 = vmatpush1.msra.mxu0 0.0
  %1174 = vmatprep.subr.mxu0 0.0
  %1175 = vmatpush1.msra.mxu0 0.0
  %1176 = vmatprep.subr.mxu0 0.0
  %1177 = vmatpush1.msra.mxu0 0.0
  %1178 = vmatprep.subr.mxu0 0.0
  %1179 = vmatpush1.msra.mxu0 0.0
  %1180 = vmatprep.subr.mxu0 0.0
  %1181 = vmatpush1.msra.mxu0 0.0
  %1182 = vmatprep.subr.mxu0 0.0
  %1183 = vmatpush1.msra.mxu0 0.0
  %1184 = vmatprep.subr.mxu0 0.0
  %1185 = vmatpush1.msra.mxu0 0.0
  %1186 = vmatprep.subr.mxu0 0.0
  %1187 = vmatpush1.msra.mxu0 0.0
  %1188 = vmatprep.subr.mxu0 0.0
  %1189 = vmatpush1.msra.mxu0 0.0
  %1190 = vmatprep.subr.mxu0 0.0
  %1191 = vmatpush1.msra.mxu0 0.0
  %1192 = vmatprep.subr.mxu0 0.0
  %1193 = vmatpush1.msra.mxu0 0.0
  %1194 = vmatprep.subr.mxu0 0.0
  %1195 = vmatpush1.msra.mxu0 0.0
  %1196 = vmatprep.subr.mxu0 0.0
  %1197 = vmatpush1.msra.mxu0 0.0
  %1198 = vmatprep.subr.mxu0 0.0
  %1199 = vmatpush1.msra.mxu0 %v329
  %1200 = vmatprep.subr.mxu0 0.0
  %1201 = vmatpush2.msra.mxu0 0.0
  %1202 = vmatprep.subr.mxu0 0.0
  %1203 = vmatpush2.msra.mxu0 0.0
  %1204 = vmatprep.subr.mxu0 0.0
  %1205 = vmatpush2.msra.mxu0 0.0
  %1206 = vmatprep.subr.mxu0 0.0
  %1207 = vmatpush2.msra.mxu0 0.0
  %1208 = vmatprep.subr.mxu0 0.0
  %1209 = vmatpush2.msra.mxu0 0.0
  %1210 = vmatprep.subr.mxu0 0.0
  %1211 = vmatpush2.msra.mxu0 0.0
  %1212 = vmatprep.subr.mxu0 0.0
  %1213 = vmatpush2.msra.mxu0 0.0
  %1214 = vmatprep.subr.mxu0 0.0
  %1215 = vmatpush2.msra.mxu0 0.0
  %1216 = vmatprep.subr.mxu0 0.0
  %1217 = vmatpush2.msra.mxu0 0.0
  %1218 = vmatprep.subr.mxu0 0.0
  %1219 = vmatpush2.msra.mxu0 0.0
  %1220 = vmatprep.subr.mxu0 0.0
  %1221 = vmatpush2.msra.mxu0 0.0
  %1222 = vmatprep.subr.mxu0 0.0
  %1223 = vmatpush2.msra.mxu0 0.0
  %1224 = vmatprep.subr.mxu0 0.0
  %1225 = vmatpush2.msra.mxu0 0.0
  %1226 = vmatprep.subr.mxu0 0.0
  %1227 = vmatpush2.msra.mxu0 0.0
  %1228 = vmatprep.subr.mxu0 0.0
  %1229 = vmatpush2.msra.mxu0 0.0
  %1230 = vmatprep.subr.mxu0 0.0
  %1231 = vmatpush2.msra.mxu0 0.0
  %1232 = vmatprep.mubr.f32.mxu0 0.0
  %1233 = vmatmul.mubr.f32.gmra.mxu0 %v1166
  %v1234 = vpop.f32.mrf.mxu0
  %v1235 = vadd.f32 0.0, %v1234
  %v1236 = vpop.f32.mrf.mxu0
  %1237 = vdwg.mxu0
  %v1239 = vsel %vm1003, %v1081, 0
  %1241 = vmatprep.subr.mxu0 0.0
  %1242 = vmatpush1.msra.mxu0 0.0
  %1243 = vmatprep.subr.mxu0 0.0
  %1244 = vmatpush1.msra.mxu0 0.0
  %1245 = vmatprep.subr.mxu0 0.0
  %1246 = vmatpush1.msra.mxu0 0.0
  %1247 = vmatprep.subr.mxu0 0.0
  %1248 = vmatpush1.msra.mxu0 0.0
  %1249 = vmatprep.subr.mxu0 0.0
  %1250 = vmatpush1.msra.mxu0 0.0
  %1251 = vmatprep.subr.mxu0 0.0
  %1252 = vmatpush1.msra.mxu0 0.0
  %1253 = vmatprep.subr.mxu0 0.0
  %1254 = vmatpush1.msra.mxu0 0.0
  %1255 = vmatprep.subr.mxu0 0.0
  %1256 = vmatpush1.msra.mxu0 0.0
  %1257 = vmatprep.subr.mxu0 0.0
  %1258 = vmatpush1.msra.mxu0 0.0
  %1259 = vmatprep.subr.mxu0 0.0
  %1260 = vmatpush1.msra.mxu0 0.0
  %1261 = vmatprep.subr.mxu0 0.0
  %1262 = vmatpush1.msra.mxu0 0.0
  %1263 = vmatprep.subr.mxu0 0.0
  %1264 = vmatpush1.msra.mxu0 0.0
  %1265 = vmatprep.subr.mxu0 0.0
  %1266 = vmatpush1.msra.mxu0 0.0
  %1267 = vmatprep.subr.mxu0 0.0
  %1268 = vmatpush1.msra.mxu0 0.0
  %1269 = vmatprep.subr.mxu0 0.0
  %1270 = vmatpush1.msra.mxu0 0.0
  %1271 = vmatprep.subr.mxu0 0.0
  %1272 = vmatpush1.msra.mxu0 %v330
  %1273 = vmatprep.subr.mxu0 0.0
  %1274 = vmatpush2.msra.mxu0 0.0
  %1275 = vmatprep.subr.mxu0 0.0
  %1276 = vmatpush2.msra.mxu0 0.0
  %1277 = vmatprep.subr.mxu0 0.0
  %1278 = vmatpush2.msra.mxu0 0.0
  %1279 = vmatprep.subr.mxu0 0.0
  %1280 = vmatpush2.msra.mxu0 0.0
  %1281 = vmatprep.subr.mxu0 0.0
  %1282 = vmatpush2.msra.mxu0 0.0
  %1283 = vmatprep.subr.mxu0 0.0
  %1284 = vmatpush2.msra.mxu0 0.0
  %1285 = vmatprep.subr.mxu0 0.0
  %1286 = vmatpush2.msra.mxu0 0.0
  %1287 = vmatprep.subr.mxu0 0.0
  %1288 = vmatpush2.msra.mxu0 0.0
  %1289 = vmatprep.subr.mxu0 0.0
  %1290 = vmatpush2.msra.mxu0 0.0
  %1291 = vmatprep.subr.mxu0 0.0
  %1292 = vmatpush2.msra.mxu0 0.0
  %1293 = vmatprep.subr.mxu0 0.0
  %1294 = vmatpush2.msra.mxu0 0.0
  %1295 = vmatprep.subr.mxu0 0.0
  %1296 = vmatpush2.msra.mxu0 0.0
  %1297 = vmatprep.subr.mxu0 0.0
  %1298 = vmatpush2.msra.mxu0 0.0
  %1299 = vmatprep.subr.mxu0 0.0
  %1300 = vmatpush2.msra.mxu0 0.0
  %1301 = vmatprep.subr.mxu0 0.0
  %1302 = vmatpush2.msra.mxu0 0.0
  %1303 = vmatprep.subr.mxu0 0.0
  %1304 = vmatpush2.msra.mxu0 0.0
  %1305 = vmatprep.mubr.f32.mxu0 0.0
  %1306 = vmatmul.mubr.f32.gmra.mxu0 %v1239
  %v1307 = vpop.f32.mrf.mxu0
  %v1308 = vadd.f32 0.0, %v1307
  %v1309 = vpop.f32.mrf.mxu0
  %1310 = vdwg.mxu0
  %v1312 = vsel %vm1003, %v1083, 0
  %1314 = vmatprep.subr.mxu0 0.0
  %1315 = vmatpush1.msra.mxu0 0.0
  %1316 = vmatprep.subr.mxu0 0.0
  %1317 = vmatpush1.msra.mxu0 0.0
  %1318 = vmatprep.subr.mxu0 0.0
  %1319 = vmatpush1.msra.mxu0 0.0
  %1320 = vmatprep.subr.mxu0 0.0
  %1321 = vmatpush1.msra.mxu0 0.0
  %1322 = vmatprep.subr.mxu0 0.0
  %1323 = vmatpush1.msra.mxu0 0.0
  %1324 = vmatprep.subr.mxu0 0.0
  %1325 = vmatpush1.msra.mxu0 0.0
  %1326 = vmatprep.subr.mxu0 0.0
  %1327 = vmatpush1.msra.mxu0 0.0
  %1328 = vmatprep.subr.mxu0 0.0
  %1329 = vmatpush1.msra.mxu0 0.0
  %1330 = vmatprep.subr.mxu0 0.0
  %1331 = vmatpush1.msra.mxu0 0.0
  %1332 = vmatprep.subr.mxu0 0.0
  %1333 = vmatpush1.msra.mxu0 0.0
  %1334 = vmatprep.subr.mxu0 0.0
  %1335 = vmatpush1.msra.mxu0 0.0
  %1336 = vmatprep.subr.mxu0 0.0
  %1337 = vmatpush1.msra.mxu0 0.0
  %1338 = vmatprep.subr.mxu0 0.0
  %1339 = vmatpush1.msra.mxu0 0.0
  %1340 = vmatprep.subr.mxu0 0.0
  %1341 = vmatpush1.msra.mxu0 0.0
  %1342 = vmatprep.subr.mxu0 0.0
  %1343 = vmatpush1.msra.mxu0 0.0
  %1344 = vmatprep.subr.mxu0 0.0
  %1345 = vmatpush1.msra.mxu0 %v331
  %1346 = vmatprep.subr.mxu0 0.0
  %1347 = vmatpush2.msra.mxu0 0.0
  %1348 = vmatprep.subr.mxu0 0.0
  %1349 = vmatpush2.msra.mxu0 0.0
  %1350 = vmatprep.subr.mxu0 0.0
  %1351 = vmatpush2.msra.mxu0 0.0
  %1352 = vmatprep.subr.mxu0 0.0
  %1353 = vmatpush2.msra.mxu0 0.0
  %1354 = vmatprep.subr.mxu0 0.0
  %1355 = vmatpush2.msra.mxu0 0.0
  %1356 = vmatprep.subr.mxu0 0.0
  %1357 = vmatpush2.msra.mxu0 0.0
  %1358 = vmatprep.subr.mxu0 0.0
  %1359 = vmatpush2.msra.mxu0 0.0
  %1360 = vmatprep.subr.mxu0 0.0
  %1361 = vmatpush2.msra.mxu0 0.0
  %1362 = vmatprep.subr.mxu0 0.0
  %1363 = vmatpush2.msra.mxu0 0.0
  %1364 = vmatprep.subr.mxu0 0.0
  %1365 = vmatpush2.msra.mxu0 0.0
  %1366 = vmatprep.subr.mxu0 0.0
  %1367 = vmatpush2.msra.mxu0 0.0
  %1368 = vmatprep.subr.mxu0 0.0
  %1369 = vmatpush2.msra.mxu0 0.0
  %1370 = vmatprep.subr.mxu0 0.0
  %1371 = vmatpush2.msra.mxu0 0.0
  %1372 = vmatprep.subr.mxu0 0.0
  %1373 = vmatpush2.msra.mxu0 0.0
  %1374 = vmatprep.subr.mxu0 0.0
  %1375 = vmatpush2.msra.mxu0 0.0
  %1376 = vmatprep.subr.mxu0 0.0
  %1377 = vmatpush2.msra.mxu0 0.0
  %1378 = vmatprep.mubr.f32.mxu0 0.0
  %1379 = vmatmul.mubr.f32.gmra.mxu0 %v1312
  %v1380 = vpop.f32.mrf.mxu0
  %v1381 = vadd.f32 0.0, %v1380
  %v1382 = vpop.f32.mrf.mxu0
  %1383 = vdwg.mxu0
  %v1385 = vsel %vm1003, %v1085, 0
  %1387 = vmatprep.subr.mxu0 0.0
  %1388 = vmatpush1.msra.mxu0 0.0
  %1389 = vmatprep.subr.mxu0 0.0
  %1390 = vmatpush1.msra.mxu0 0.0
  %1391 = vmatprep.subr.mxu0 0.0
  %1392 = vmatpush1.msra.mxu0 0.0
  %1393 = vmatprep.subr.mxu0 0.0
  %1394 = vmatpush1.msra.mxu0 0.0
  %1395 = vmatprep.subr.mxu0 0.0
  %1396 = vmatpush1.msra.mxu0 0.0
  %1397 = vmatprep.subr.mxu0 0.0
  %1398 = vmatpush1.msra.mxu0 0.0
  %1399 = vmatprep.subr.mxu0 0.0
  %1400 = vmatpush1.msra.mxu0 0.0
  %1401 = vmatprep.subr.mxu0 0.0
  %1402 = vmatpush1.msra.mxu0 0.0
  %1403 = vmatprep.subr.mxu0 0.0
  %1404 = vmatpush1.msra.mxu0 0.0
  %1405 = vmatprep.subr.mxu0 0.0
  %1406 = vmatpush1.msra.mxu0 0.0
  %1407 = vmatprep.subr.mxu0 0.0
  %1408 = vmatpush1.msra.mxu0 0.0
  %1409 = vmatprep.subr.mxu0 0.0
  %1410 = vmatpush1.msra.mxu0 0.0
  %1411 = vmatprep.subr.mxu0 0.0
  %1412 = vmatpush1.msra.mxu0 0.0
  %1413 = vmatprep.subr.mxu0 0.0
  %1414 = vmatpush1.msra.mxu0 0.0
  %1415 = vmatprep.subr.mxu0 0.0
  %1416 = vmatpush1.msra.mxu0 0.0
  %1417 = vmatprep.subr.mxu0 0.0
  %1418 = vmatpush1.msra.mxu0 %v332
  %1419 = vmatprep.subr.mxu0 0.0
  %1420 = vmatpush2.msra.mxu0 0.0
  %1421 = vmatprep.subr.mxu0 0.0
  %1422 = vmatpush2.msra.mxu0 0.0
  %1423 = vmatprep.subr.mxu0 0.0
  %1424 = vmatpush2.msra.mxu0 0.0
  %1425 = vmatprep.subr.mxu0 0.0
  %1426 = vmatpush2.msra.mxu0 0.0
  %1427 = vmatprep.subr.mxu0 0.0
  %1428 = vmatpush2.msra.mxu0 0.0
  %1429 = vmatprep.subr.mxu0 0.0
  %1430 = vmatpush2.msra.mxu0 0.0
  %1431 = vmatprep.subr.mxu0 0.0
  %1432 = vmatpush2.msra.mxu0 0.0
  %1433 = vmatprep.subr.mxu0 0.0
  %1434 = vmatpush2.msra.mxu0 0.0
  %1435 = vmatprep.subr.mxu0 0.0
  %1436 = vmatpush2.msra.mxu0 0.0
  %1437 = vmatprep.subr.mxu0 0.0
  %1438 = vmatpush2.msra.mxu0 0.0
  %1439 = vmatprep.subr.mxu0 0.0
  %1440 = vmatpush2.msra.mxu0 0.0
  %1441 = vmatprep.subr.mxu0 0.0
  %1442 = vmatpush2.msra.mxu0 0.0
  %1443 = vmatprep.subr.mxu0 0.0
  %1444 = vmatpush2.msra.mxu0 0.0
  %1445 = vmatprep.subr.mxu0 0.0
  %1446 = vmatpush2.msra.mxu0 0.0
  %1447 = vmatprep.subr.mxu0 0.0
  %1448 = vmatpush2.msra.mxu0 0.0
  %1449 = vmatprep.subr.mxu0 0.0
  %1450 = vmatpush2.msra.mxu0 0.0
  %1451 = vmatprep.mubr.f32.mxu0 0.0
  %1452 = vmatmul.mubr.f32.gmra.mxu0 %v1385
  %v1453 = vpop.f32.mrf.mxu0
  %v1454 = vadd.f32 0.0, %v1453
  %v1455 = vpop.f32.mrf.mxu0
  %1456 = vdwg.mxu0
  %v1458 = vsel %vm1003, %v1087, 0
  %1460 = vmatprep.subr.mxu0 0.0
  %1461 = vmatpush1.msra.mxu0 0.0
  %1462 = vmatprep.subr.mxu0 0.0
  %1463 = vmatpush1.msra.mxu0 0.0
  %1464 = vmatprep.subr.mxu0 0.0
  %1465 = vmatpush1.msra.mxu0 0.0
  %1466 = vmatprep.subr.mxu0 0.0
  %1467 = vmatpush1.msra.mxu0 0.0
  %1468 = vmatprep.subr.mxu0 0.0
  %1469 = vmatpush1.msra.mxu0 0.0
  %1470 = vmatprep.subr.mxu0 0.0
  %1471 = vmatpush1.msra.mxu0 0.0
  %1472 = vmatprep.subr.mxu0 0.0
  %1473 = vmatpush1.msra.mxu0 0.0
  %1474 = vmatprep.subr.mxu0 0.0
  %1475 = vmatpush1.msra.mxu0 0.0
  %1476 = vmatprep.subr.mxu0 0.0
  %1477 = vmatpush1.msra.mxu0 0.0
  %1478 = vmatprep.subr.mxu0 0.0
  %1479 = vmatpush1.msra.mxu0 0.0
  %1480 = vmatprep.subr.mxu0 0.0
  %1481 = vmatpush1.msra.mxu0 0.0
  %1482 = vmatprep.subr.mxu0 0.0
  %1483 = vmatpush1.msra.mxu0 0.0
  %1484 = vmatprep.subr.mxu0 0.0
  %1485 = vmatpush1.msra.mxu0 0.0
  %1486 = vmatprep.subr.mxu0 0.0
  %1487 = vmatpush1.msra.mxu0 0.0
  %1488 = vmatprep.subr.mxu0 0.0
  %1489 = vmatpush1.msra.mxu0 0.0
  %1490 = vmatprep.subr.mxu0 0.0
  %1491 = vmatpush1.msra.mxu0 %v333
  %1492 = vmatprep.subr.mxu0 0.0
  %1493 = vmatpush2.msra.mxu0 0.0
  %1494 = vmatprep.subr.mxu0 0.0
  %1495 = vmatpush2.msra.mxu0 0.0
  %1496 = vmatprep.subr.mxu0 0.0
  %1497 = vmatpush2.msra.mxu0 0.0
  %1498 = vmatprep.subr.mxu0 0.0
  %1499 = vmatpush2.msra.mxu0 0.0
  %1500 = vmatprep.subr.mxu0 0.0
  %1501 = vmatpush2.msra.mxu0 0.0
  %1502 = vmatprep.subr.mxu0 0.0
  %1503 = vmatpush2.msra.mxu0 0.0
  %1504 = vmatprep.subr.mxu0 0.0
  %1505 = vmatpush2.msra.mxu0 0.0
  %1506 = vmatprep.subr.mxu0 0.0
  %1507 = vmatpush2.msra.mxu0 0.0
  %1508 = vmatprep.subr.mxu0 0.0
  %1509 = vmatpush2.msra.mxu0 0.0
  %1510 = vmatprep.subr.mxu0 0.0
  %1511 = vmatpush2.msra.mxu0 0.0
  %1512 = vmatprep.subr.mxu0 0.0
  %1513 = vmatpush2.msra.mxu0 0.0
  %1514 = vmatprep.subr.mxu0 0.0
  %1515 = vmatpush2.msra.mxu0 0.0
  %1516 = vmatprep.subr.mxu0 0.0
  %1517 = vmatpush2.msra.mxu0 0.0
  %1518 = vmatprep.subr.mxu0 0.0
  %1519 = vmatpush2.msra.mxu0 0.0
  %1520 = vmatprep.subr.mxu0 0.0
  %1521 = vmatpush2.msra.mxu0 0.0
  %1522 = vmatprep.subr.mxu0 0.0
  %1523 = vmatpush2.msra.mxu0 0.0
  %1524 = vmatprep.mubr.f32.mxu0 0.0
  %1525 = vmatmul.mubr.f32.gmra.mxu0 %v1458
  %v1526 = vpop.f32.mrf.mxu0
  %v1527 = vadd.f32 0.0, %v1526
  %v1528 = vpop.f32.mrf.mxu0
  %1529 = vdwg.mxu0
  %v1531 = vsel %vm1003, %v1089, 0
  %1533 = vmatprep.subr.mxu0 0.0
  %1534 = vmatpush1.msra.mxu0 0.0
  %1535 = vmatprep.subr.mxu0 0.0
  %1536 = vmatpush1.msra.mxu0 0.0
  %1537 = vmatprep.subr.mxu0 0.0
  %1538 = vmatpush1.msra.mxu0 0.0
  %1539 = vmatprep.subr.mxu0 0.0
  %1540 = vmatpush1.msra.mxu0 0.0
  %1541 = vmatprep.subr.mxu0 0.0
  %1542 = vmatpush1.msra.mxu0 0.0
  %1543 = vmatprep.subr.mxu0 0.0
  %1544 = vmatpush1.msra.mxu0 0.0
  %1545 = vmatprep.subr.mxu0 0.0
  %1546 = vmatpush1.msra.mxu0 0.0
  %1547 = vmatprep.subr.mxu0 0.0
  %1548 = vmatpush1.msra.mxu0 0.0
  %1549 = vmatprep.subr.mxu0 0.0
  %1550 = vmatpush1.msra.mxu0 0.0
  %1551 = vmatprep.subr.mxu0 0.0
  %1552 = vmatpush1.msra.mxu0 0.0
  %1553 = vmatprep.subr.mxu0 0.0
  %1554 = vmatpush1.msra.mxu0 0.0
  %1555 = vmatprep.subr.mxu0 0.0
  %1556 = vmatpush1.msra.mxu0 0.0
  %1557 = vmatprep.subr.mxu0 0.0
  %1558 = vmatpush1.msra.mxu0 0.0
  %1559 = vmatprep.subr.mxu0 0.0
  %1560 = vmatpush1.msra.mxu0 0.0
  %1561 = vmatprep.subr.mxu0 0.0
  %1562 = vmatpush1.msra.mxu0 0.0
  %1563 = vmatprep.subr.mxu0 0.0
  %1564 = vmatpush1.msra.mxu0 %v334
  %1565 = vmatprep.subr.mxu0 0.0
  %1566 = vmatpush2.msra.mxu0 0.0
  %1567 = vmatprep.subr.mxu0 0.0
  %1568 = vmatpush2.msra.mxu0 0.0
  %1569 = vmatprep.subr.mxu0 0.0
  %1570 = vmatpush2.msra.mxu0 0.0
  %1571 = vmatprep.subr.mxu0 0.0
  %1572 = vmatpush2.msra.mxu0 0.0
  %1573 = vmatprep.subr.mxu0 0.0
  %1574 = vmatpush2.msra.mxu0 0.0
  %1575 = vmatprep.subr.mxu0 0.0
  %1576 = vmatpush2.msra.mxu0 0.0
  %1577 = vmatprep.subr.mxu0 0.0
  %1578 = vmatpush2.msra.mxu0 0.0
  %1579 = vmatprep.subr.mxu0 0.0
  %1580 = vmatpush2.msra.mxu0 0.0
  %1581 = vmatprep.subr.mxu0 0.0
  %1582 = vmatpush2.msra.mxu0 0.0
  %1583 = vmatprep.subr.mxu0 0.0
  %1584 = vmatpush2.msra.mxu0 0.0
  %1585 = vmatprep.subr.mxu0 0.0
  %1586 = vmatpush2.msra.mxu0 0.0
  %1587 = vmatprep.subr.mxu0 0.0
  %1588 = vmatpush2.msra.mxu0 0.0
  %1589 = vmatprep.subr.mxu0 0.0
  %1590 = vmatpush2.msra.mxu0 0.0
  %1591 = vmatprep.subr.mxu0 0.0
  %1592 = vmatpush2.msra.mxu0 0.0
  %1593 = vmatprep.subr.mxu0 0.0
  %1594 = vmatpush2.msra.mxu0 0.0
  %1595 = vmatprep.subr.mxu0 0.0
  %1596 = vmatpush2.msra.mxu0 0.0
  %1597 = vmatprep.mubr.f32.mxu0 0.0
  %1598 = vmatmul.mubr.f32.gmra.mxu0 %v1531
  %v1599 = vpop.f32.mrf.mxu0
  %v1600 = vadd.f32 0.0, %v1599
  %v1601 = vpop.f32.mrf.mxu0
  %1602 = vdwg.mxu0
  %v1604 = vsel %vm1003, %v1091, 0
  %1606 = vmatprep.subr.mxu0 0.0
  %1607 = vmatpush1.msra.mxu0 0.0
  %1608 = vmatprep.subr.mxu0 0.0
  %1609 = vmatpush1.msra.mxu0 0.0
  %1610 = vmatprep.subr.mxu0 0.0
  %1611 = vmatpush1.msra.mxu0 0.0
  %1612 = vmatprep.subr.mxu0 0.0
  %1613 = vmatpush1.msra.mxu0 0.0
  %1614 = vmatprep.subr.mxu0 0.0
  %1615 = vmatpush1.msra.mxu0 0.0
  %1616 = vmatprep.subr.mxu0 0.0
  %1617 = vmatpush1.msra.mxu0 0.0
  %1618 = vmatprep.subr.mxu0 0.0
  %1619 = vmatpush1.msra.mxu0 0.0
  %1620 = vmatprep.subr.mxu0 0.0
  %1621 = vmatpush1.msra.mxu0 0.0
  %1622 = vmatprep.subr.mxu0 0.0
  %1623 = vmatpush1.msra.mxu0 0.0
  %1624 = vmatprep.subr.mxu0 0.0
  %1625 = vmatpush1.msra.mxu0 0.0
  %1626 = vmatprep.subr.mxu0 0.0
  %1627 = vmatpush1.msra.mxu0 0.0
  %1628 = vmatprep.subr.mxu0 0.0
  %1629 = vmatpush1.msra.mxu0 0.0
  %1630 = vmatprep.subr.mxu0 0.0
  %1631 = vmatpush1.msra.mxu0 0.0
  %1632 = vmatprep.subr.mxu0 0.0
  %1633 = vmatpush1.msra.mxu0 0.0
  %1634 = vmatprep.subr.mxu0 0.0
  %1635 = vmatpush1.msra.mxu0 0.0
  %1636 = vmatprep.subr.mxu0 0.0
  %1637 = vmatpush1.msra.mxu0 %v335
  %1638 = vmatprep.subr.mxu0 0.0
  %1639 = vmatpush2.msra.mxu0 0.0
  %1640 = vmatprep.subr.mxu0 0.0
  %1641 = vmatpush2.msra.mxu0 0.0
  %1642 = vmatprep.subr.mxu0 0.0
  %1643 = vmatpush2.msra.mxu0 0.0
  %1644 = vmatprep.subr.mxu0 0.0
  %1645 = vmatpush2.msra.mxu0 0.0
  %1646 = vmatprep.subr.mxu0 0.0
  %1647 = vmatpush2.msra.mxu0 0.0
  %1648 = vmatprep.subr.mxu0 0.0
  %1649 = vmatpush2.msra.mxu0 0.0
  %1650 = vmatprep.subr.mxu0 0.0
  %1651 = vmatpush2.msra.mxu0 0.0
  %1652 = vmatprep.subr.mxu0 0.0
  %1653 = vmatpush2.msra.mxu0 0.0
  %1654 = vmatprep.subr.mxu0 0.0
  %1655 = vmatpush2.msra.mxu0 0.0
  %1656 = vmatprep.subr.mxu0 0.0
  %1657 = vmatpush2.msra.mxu0 0.0
  %1658 = vmatprep.subr.mxu0 0.0
  %1659 = vmatpush2.msra.mxu0 0.0
  %1660 = vmatprep.subr.mxu0 0.0
  %1661 = vmatpush2.msra.mxu0 0.0
  %1662 = vmatprep.subr.mxu0 0.0
  %1663 = vmatpush2.msra.mxu0 0.0
  %1664 = vmatprep.subr.mxu0 0.0
  %1665 = vmatpush2.msra.mxu0 0.0
  %1666 = vmatprep.subr.mxu0 0.0
  %1667 = vmatpush2.msra.mxu0 0.0
  %1668 = vmatprep.subr.mxu0 0.0
  %1669 = vmatpush2.msra.mxu0 0.0
  %1670 = vmatprep.mubr.f32.mxu0 0.0
  %1671 = vmatmul.mubr.f32.gmra.mxu0 %v1604
  %v1672 = vpop.f32.mrf.mxu0
  %v1673 = vadd.f32 0.0, %v1672
  %v1674 = vpop.f32.mrf.mxu0
  %1675 = vdwg.mxu0
  %v1676 = vld [vmem:[%s2] sm:$0xff]
  %v1677 = vld [vmem:[%s2 + $0x8] sm:$0xff]
  %v1678 = vld [vmem:[%s2 + $0x10] sm:$0xff]
  %v1679 = vld [vmem:[%s2 + $0x18] sm:$0xff]
  %v1680 = vld [vmem:[%s2 + $0x20] sm:$0xff]
  %v1681 = vld [vmem:[%s2 + $0x28] sm:$0xff]
  %v1682 = vld [vmem:[%s2 + $0x30] sm:$0xff]
  %v1683 = vld [vmem:[%s2 + $0x38] sm:$0xff]
  %v1684 = vld [vmem:[%s2 + $0x40] sm:$0xff]
  %v1685 = vld [vmem:[%s2 + $0x48] sm:$0xff]
  %v1686 = vld [vmem:[%s2 + $0x50] sm:$0xff]
  %v1687 = vld [vmem:[%s2 + $0x58] sm:$0xff]
  %v1688 = vld [vmem:[%s2 + $0x60] sm:$0xff]
  %v1689 = vld [vmem:[%s2 + $0x68] sm:$0xff]
  %v1690 = vld [vmem:[%s2 + $0x70] sm:$0xff]
  %v1691 = vld [vmem:[%s2 + $0x78] sm:$0xff]
  %v1692 = vld [vmem:[%s5 + $0x3] sm:$0x1]
  %v1693 = vlaneseq
  %v1694 = vshrl.u32 %v1693, 7
  %v1695 = vsub.s32 0, %v1694
  %v1696 = vrot.slane %v1692, %v1695
  %1697 = vmatprep.subr.mxu0 0.0
  %1698 = vmatpush1.msra.mxu0 %v1691
  %1699 = vmatprep.subr.mxu0 0.0
  %1700 = vmatpush1.msra.mxu0 %v1690
  %1701 = vmatprep.subr.mxu0 0.0
  %1702 = vmatpush1.msra.mxu0 %v1689
  %1703 = vmatprep.subr.mxu0 0.0
  %1704 = vmatpush1.msra.mxu0 %v1688
  %1705 = vmatprep.subr.mxu0 0.0
  %1706 = vmatpush1.msra.mxu0 %v1687
  %1707 = vmatprep.subr.mxu0 0.0
  %1708 = vmatpush1.msra.mxu0 %v1686
  %1709 = vmatprep.subr.mxu0 0.0
  %1710 = vmatpush1.msra.mxu0 %v1685
  %1711 = vmatprep.subr.mxu0 0.0
  %1712 = vmatpush1.msra.mxu0 %v1684
  %1713 = vmatprep.subr.mxu0 0.0
  %1714 = vmatpush1.msra.mxu0 %v1683
  %1715 = vmatprep.subr.mxu0 0.0
  %1716 = vmatpush1.msra.mxu0 %v1682
  %1717 = vmatprep.subr.mxu0 0.0
  %1718 = vmatpush1.msra.mxu0 %v1681
  %1719 = vmatprep.subr.mxu0 0.0
  %1720 = vmatpush1.msra.mxu0 %v1680
  %1721 = vmatprep.subr.mxu0 0.0
  %1722 = vmatpush1.msra.mxu0 %v1679
  %1723 = vmatprep.subr.mxu0 0.0
  %1724 = vmatpush1.msra.mxu0 %v1678
  %1725 = vmatprep.subr.mxu0 0.0
  %1726 = vmatpush1.msra.mxu0 %v1677
  %1727 = vmatprep.subr.mxu0 0.0
  %1728 = vmatpush1.msra.mxu0 %v1676
  %1729 = vmatprep.subr.mxu0 0.0
  %1730 = vmatpush2.msra.mxu0 0.0
  %1731 = vmatprep.subr.mxu0 0.0
  %1732 = vmatpush2.msra.mxu0 0.0
  %1733 = vmatprep.subr.mxu0 0.0
  %1734 = vmatpush2.msra.mxu0 0.0
  %1735 = vmatprep.subr.mxu0 0.0
  %1736 = vmatpush2.msra.mxu0 0.0
  %1737 = vmatprep.subr.mxu0 0.0
  %1738 = vmatpush2.msra.mxu0 0.0
  %1739 = vmatprep.subr.mxu0 0.0
  %1740 = vmatpush2.msra.mxu0 0.0
  %1741 = vmatprep.subr.mxu0 0.0
  %1742 = vmatpush2.msra.mxu0 0.0
  %1743 = vmatprep.subr.mxu0 0.0
  %1744 = vmatpush2.msra.mxu0 0.0
  %1745 = vmatprep.subr.mxu0 0.0
  %1746 = vmatpush2.msra.mxu0 0.0
  %1747 = vmatprep.subr.mxu0 0.0
  %1748 = vmatpush2.msra.mxu0 0.0
  %1749 = vmatprep.subr.mxu0 0.0
  %1750 = vmatpush2.msra.mxu0 0.0
  %1751 = vmatprep.subr.mxu0 0.0
  %1752 = vmatpush2.msra.mxu0 0.0
  %1753 = vmatprep.subr.mxu0 0.0
  %1754 = vmatpush2.msra.mxu0 0.0
  %1755 = vmatprep.subr.mxu0 0.0
  %1756 = vmatpush2.msra.mxu0 0.0
  %1757 = vmatprep.subr.mxu0 0.0
  %1758 = vmatpush2.msra.mxu0 0.0
  %1759 = vmatprep.subr.mxu0 0.0
  %1760 = vmatpush2.msra.mxu0 0.0
  %1761 = vmatprep.mubr.f32.mxu0 0.0
  %1762 = vmatmul.mubr.f32.gmra.mxu0 %v1162
  %v1763 = vpop.f32.mrf.mxu0
  %v1764 = vadd.f32 %v1696, %v1763
  %v1765 = vpop.f32.mrf.mxu0
  %1766 = vmatprep.mubr.f32.mxu0 0.0
  %1767 = vmatmul.mubr.f32.gmra.mxu0 %v1235
  %v1768 = vpop.f32.mrf.mxu0
  %v1769 = vadd.f32 %v1696, %v1768
  %v1770 = vpop.f32.mrf.mxu0
  %1771 = vmatprep.mubr.f32.mxu0 0.0
  %1772 = vmatmul.mubr.f32.gmra.mxu0 %v1308
  %v1773 = vpop.f32.mrf.mxu0
  %v1774 = vadd.f32 %v1696, %v1773
  %v1775 = vpop.f32.mrf.mxu0
  %1776 = vmatprep.mubr.f32.mxu0 0.0
  %1777 = vmatmul.mubr.f32.gmra.mxu0 %v1381
  %v1778 = vpop.f32.mrf.mxu0
  %v1779 = vadd.f32 %v1696, %v1778
  %v1780 = vpop.f32.mrf.mxu0
  %1781 = vmatprep.mubr.f32.mxu0 0.0
  %1782 = vmatmul.mubr.f32.gmra.mxu0 %v1454
  %v1783 = vpop.f32.mrf.mxu0
  %v1784 = vadd.f32 %v1696, %v1783
  %v1785 = vpop.f32.mrf.mxu0
  %1786 = vmatprep.mubr.f32.mxu0 0.0
  %1787 = vmatmul.mubr.f32.gmra.mxu0 %v1527
  %v1788 = vpop.f32.mrf.mxu0
  %v1789 = vadd.f32 %v1696, %v1788
  %v1790 = vpop.f32.mrf.mxu0
  %1791 = vmatprep.mubr.f32.mxu0 0.0
  %1792 = vmatmul.mubr.f32.gmra.mxu0 %v1600
  %v1793 = vpop.f32.mrf.mxu0
  %v1794 = vadd.f32 %v1696, %v1793
  %v1795 = vpop.f32.mrf.mxu0
  %1796 = vmatprep.mubr.f32.mxu0 0.0
  %1797 = vmatmul.mubr.f32.gmra.mxu0 %v1673
  %v1798 = vpop.f32.mrf.mxu0
  %v1799 = vadd.f32 %v1696, %v1798
  %v1800 = vpop.f32.mrf.mxu0
  %1801 = vdwg.mxu0
  %v1802 = vadd.f32 %v23, %v1764
  %v1803 = vadd.f32 %v24, %v1769
  %v1804 = vadd.f32 %v25, %v1774
  %v1805 = vadd.f32 %v26, %v1779
  %v1806 = vadd.f32 %v27, %v1784
  %v1807 = vadd.f32 %v28, %v1789
  %v1808 = vadd.f32 %v29, %v1794
  %v1809 = vadd.f32 %v30, %v1799
  %1810 = vadd.xlane.f32.xlu0 %v1802
  %v1811 = vpop.xlane.xlu0 %1810
  %1812 = vadd.xlane.f32.xlu0 %v1803
  %v1813 = vpop.xlane.xlu0 %1812
  %1814 = vadd.xlane.f32.xlu0 %v1804
  %v1815 = vpop.xlane.xlu0 %1814
  %1816 = vadd.xlane.f32.xlu0 %v1805
  %v1817 = vpop.xlane.xlu0 %1816
  %1818 = vadd.xlane.f32.xlu0 %v1806
  %v1819 = vpop.xlane.xlu0 %1818
  %1820 = vadd.xlane.f32.xlu0 %v1807
  %v1821 = vpop.xlane.xlu0 %1820
  %1822 = vadd.xlane.f32.xlu0 %v1808
  %v1823 = vpop.xlane.xlu0 %1822
  %1824 = vadd.xlane.f32.xlu0 %v1809
  %v1825 = vpop.xlane.xlu0 %1824
  %v1826 = vmul.f32 %v1811, 0.03125
  %v1827 = vmul.f32 %v1813, 0.03125
  %v1828 = vmul.f32 %v1815, 0.03125
  %v1829 = vmul.f32 %v1817, 0.03125
  %v1830 = vmul.f32 %v1819, 0.03125
  %v1831 = vmul.f32 %v1821, 0.03125
  %v1832 = vmul.f32 %v1823, 0.03125
  %v1833 = vmul.f32 %v1825, 0.03125
  %v1834 = vmul.f32 %v1802, %v1802
  %v1835 = vmul.f32 %v1803, %v1803
  %v1836 = vmul.f32 %v1804, %v1804
  %v1837 = vmul.f32 %v1805, %v1805
  %v1838 = vmul.f32 %v1806, %v1806
  %v1839 = vmul.f32 %v1807, %v1807
  %v1840 = vmul.f32 %v1808, %v1808
  %v1841 = vmul.f32 %v1809, %v1809
  %1842 = vadd.xlane.f32.xlu0 %v1834
  %v1843 = vpop.xlane.xlu0 %1842
  %1844 = vadd.xlane.f32.xlu0 %v1835
  %v1845 = vpop.xlane.xlu0 %1844
  %1846 = vadd.xlane.f32.xlu0 %v1836
  %v1847 = vpop.xlane.xlu0 %1846
  %1848 = vadd.xlane.f32.xlu0 %v1837
  %v1849 = vpop.xlane.xlu0 %1848
  %1850 = vadd.xlane.f32.xlu0 %v1838
  %v1851 = vpop.xlane.xlu0 %1850
  %1852 = vadd.xlane.f32.xlu0 %v1839
  %v1853 = vpop.xlane.xlu0 %1852
  %1854 = vadd.xlane.f32.xlu0 %v1840
  %v1855 = vpop.xlane.xlu0 %1854
  %1856 = vadd.xlane.f32.xlu0 %v1841
  %v1857 = vpop.xlane.xlu0 %1856
  %v1858 = vmul.f32 %v1843, 0.03125
  %v1859 = vmul.f32 %v1845, 0.03125
  %v1860 = vmul.f32 %v1847, 0.03125
  %v1861 = vmul.f32 %v1849, 0.03125
  %v1862 = vmul.f32 %v1851, 0.03125
  %v1863 = vmul.f32 %v1853, 0.03125
  %v1864 = vmul.f32 %v1855, 0.03125
  %v1865 = vmul.f32 %v1857, 0.03125
  %v1866 = vmul.f32 %v1826, %v1826
  %v1867 = vmul.f32 %v1827, %v1827
  %v1868 = vmul.f32 %v1828, %v1828
  %v1869 = vmul.f32 %v1829, %v1829
  %v1870 = vmul.f32 %v1830, %v1830
  %v1871 = vmul.f32 %v1831, %v1831
  %v1872 = vmul.f32 %v1832, %v1832
  %v1873 = vmul.f32 %v1833, %v1833
  %v1874 = vsub.f32 %v1858, %v1866
  %v1875 = vsub.f32 %v1859, %v1867
  %v1876 = vsub.f32 %v1860, %v1868
  %v1877 = vsub.f32 %v1861, %v1869
  %v1878 = vsub.f32 %v1862, %v1870
  %v1879 = vsub.f32 %v1863, %v1871
  %v1880 = vsub.f32 %v1864, %v1872
  %v1881 = vsub.f32 %v1865, %v1873
  %v1882 = vsub.f32 %v1802, %v1826
  %v1883 = vsub.f32 %v1803, %v1827
  %v1884 = vsub.f32 %v1804, %v1828
  %v1885 = vsub.f32 %v1805, %v1829
  %v1886 = vsub.f32 %v1806, %v1830
  %v1887 = vsub.f32 %v1807, %v1831
  %v1888 = vsub.f32 %v1808, %v1832
  %v1889 = vsub.f32 %v1809, %v1833
  %v1890 = vadd.f32 %v1874, 1e-12
  %v1891 = vadd.f32 %v1875, 1e-12
  %v1892 = vadd.f32 %v1876, 1e-12
  %v1893 = vadd.f32 %v1877, 1e-12
  %v1894 = vadd.f32 %v1878, 1e-12
  %v1895 = vadd.f32 %v1879, 1e-12
  %v1896 = vadd.f32 %v1880, 1e-12
  %v1897 = vadd.f32 %v1881, 1e-12
  %v1898 = vrsqrt.pop %v1890
  %v1899 = vrsqrt.pop %v1891
  %v1900 = vrsqrt.pop %v1892
  %v1901 = vrsqrt.pop %v1893
  %v1902 = vrsqrt.pop %v1894
  %v1903 = vrsqrt.pop %v1895
  %v1904 = vrsqrt.pop %v1896
  %v1905 = vrsqrt.pop %v1897
  %v1906 = vmul.f32 %v1882, %v1898
  %v1907 = vmul.f32 %v1883, %v1899
  %v1908 = vmul.f32 %v1884, %v1900
  %v1909 = vmul.f32 %v1885, %v1901
  %v1910 = vmul.f32 %v1886, %v1902
  %v1911 = vmul.f32 %v1887, %v1903
  %v1912 = vmul.f32 %v1888, %v1904
  %v1913 = vmul.f32 %v1889, %v1905
  %v1914 = vld [vmem:[%s5 + $0x4] sm:$0x1]
  %v1915 = vlaneseq
  %v1916 = vshrl.u32 %v1915, 7
  %v1917 = vsub.s32 0, %v1916
  %v1918 = vrot.slane %v1914, %v1917
  %v1919 = vmul.f32 %v1906, %v1918
  %v1920 = vmul.f32 %v1907, %v1918
  %v1921 = vmul.f32 %v1908, %v1918
  %v1922 = vmul.f32 %v1909, %v1918
  %v1923 = vmul.f32 %v1910, %v1918
  %v1924 = vmul.f32 %v1911, %v1918
  %v1925 = vmul.f32 %v1912, %v1918
  %v1926 = vmul.f32 %v1913, %v1918
  %v1927 = vld [vmem:[%s5 + $0x5] sm:$0x1]
  %v1928 = vlaneseq
  %v1929 = vshrl.u32 %v1928, 7
  %v1930 = vsub.s32 0, %v1929
  %v1931 = vrot.slane %v1927, %v1930
  %v1932 = vadd.f32 %v1919, %v1931
  %v1933 = vadd.f32 %v1920, %v1931
  %v1934 = vadd.f32 %v1921, %v1931
  %v1935 = vadd.f32 %v1922, %v1931
  %v1936 = vadd.f32 %v1923, %v1931
  %v1937 = vadd.f32 %v1924, %v1931
  %v1938 = vadd.f32 %v1925, %v1931
  %v1939 = vadd.f32 %v1926, %v1931
  %v1940 = vld [vmem:[%s3] sm:$0xff]
  %v1941 = vld [vmem:[%s3 + $0x8] sm:$0xff]
  %v1942 = vld [vmem:[%s3 + $0x10] sm:$0xff]
  %v1943 = vld [vmem:[%s3 + $0x18] sm:$0xff]
  %v1944 = vld [vmem:[%s3 + $0x20] sm:$0xff]
  %v1945 = vld [vmem:[%s3 + $0x28] sm:$0xff]
  %v1946 = vld [vmem:[%s3 + $0x30] sm:$0xff]
  %v1947 = vld [vmem:[%s3 + $0x38] sm:$0xff]
  %v1948 = vld [vmem:[%s3 + $0x40] sm:$0xff]
  %v1949 = vld [vmem:[%s3 + $0x48] sm:$0xff]
  %v1950 = vld [vmem:[%s3 + $0x50] sm:$0xff]
  %v1951 = vld [vmem:[%s3 + $0x58] sm:$0xff]
  %v1952 = vld [vmem:[%s3 + $0x60] sm:$0xff]
  %v1953 = vld [vmem:[%s3 + $0x68] sm:$0xff]
  %v1954 = vld [vmem:[%s3 + $0x70] sm:$0xff]
  %v1955 = vld [vmem:[%s3 + $0x78] sm:$0xff]
  %v1956 = vld [vmem:[%s5 + $0x6] sm:$0x1]
  %v1957 = vlaneseq
  %v1958 = vshrl.u32 %v1957, 7
  %v1959 = vsub.s32 0, %v1958
  %v1960 = vrot.slane %v1956, %v1959
  %1961 = vmatprep.subr.mxu0 0.0
  %1962 = vmatpush1.msra.mxu0 %v1955
  %1963 = vmatprep.subr.mxu0 0.0
  %1964 = vmatpush1.msra.mxu0 %v1954
  %1965 = vmatprep.subr.mxu0 0.0
  %1966 = vmatpush1.msra.mxu0 %v1953
  %1967 = vmatprep.subr.mxu0 0.0
  %1968 = vmatpush1.msra.mxu0 %v1952
  %1969 = vmatprep.subr.mxu0 0.0
  %1970 = vmatpush1.msra.mxu0 %v1951
  %1971 = vmatprep.subr.mxu0 0.0
  %1972 = vmatpush1.msra.mxu0 %v1950
  %1973 = vmatprep.subr.mxu0 0.0
  %1974 = vmatpush1.msra.mxu0 %v1949
  %1975 = vmatprep.subr.mxu0 0.0
  %1976 = vmatpush1.msra.mxu0 %v1948
  %1977 = vmatprep.subr.mxu0 0.0
  %1978 = vmatpush1.msra.mxu0 %v1947
  %1979 = vmatprep.subr.mxu0 0.0
  %1980 = vmatpush1.msra.mxu0 %v1946
  %1981 = vmatprep.subr.mxu0 0.0
  %1982 = vmatpush1.msra.mxu0 %v1945
  %1983 = vmatprep.subr.mxu0 0.0
  %1984 = vmatpush1.msra.mxu0 %v1944
  %1985 = vmatprep.subr.mxu0 0.0
  %1986 = vmatpush1.msra.mxu0 %v1943
  %1987 = vmatprep.subr.mxu0 0.0
  %1988 = vmatpush1.msra.mxu0 %v1942
  %1989 = vmatprep.subr.mxu0 0.0
  %1990 = vmatpush1.msra.mxu0 %v1941
  %1991 = vmatprep.subr.mxu0 0.0
  %1992 = vmatpush1.msra.mxu0 %v1940
  %1993 = vmatprep.subr.mxu0 0.0
  %1994 = vmatpush2.msra.mxu0 0.0
  %1995 = vmatprep.subr.mxu0 0.0
  %1996 = vmatpush2.msra.mxu0 0.0
  %1997 = vmatprep.subr.mxu0 0.0
  %1998 = vmatpush2.msra.mxu0 0.0
  %1999 = vmatprep.subr.mxu0 0.0
  %2000 = vmatpush2.msra.mxu0 0.0
  %2001 = vmatprep.subr.mxu0 0.0
  %2002 = vmatpush2.msra.mxu0 0.0
  %2003 = vmatprep.subr.mxu0 0.0
  %2004 = vmatpush2.msra.mxu0 0.0
  %2005 = vmatprep.subr.mxu0 0.0
  %2006 = vmatpush2.msra.mxu0 0.0
  %2007 = vmatprep.subr.mxu0 0.0
  %2008 = vmatpush2.msra.mxu0 0.0
  %2009 = vmatprep.subr.mxu0 0.0
  %2010 = vmatpush2.msra.mxu0 0.0
  %2011 = vmatprep.subr.mxu0 0.0
  %2012 = vmatpush2.msra.mxu0 0.0
  %2013 = vmatprep.subr.mxu0 0.0
  %2014 = vmatpush2.msra.mxu0 0.0
  %2015 = vmatprep.subr.mxu0 0.0
  %2016 = vmatpush2.msra.mxu0 0.0
  %2017 = vmatprep.subr.mxu0 0.0
  %2018 = vmatpush2.msra.mxu0 0.0
  %2019 = vmatprep.subr.mxu0 0.0
  %2020 = vmatpush2.msra.mxu0 0.0
  %2021 = vmatprep.subr.mxu0 0.0
  %2022 = vmatpush2.msra.mxu0 0.0
  %2023 = vmatprep.subr.mxu0 0.0
  %2024 = vmatpush2.msra.mxu0 0.0
  %2025 = vmatprep.mubr.f32.mxu0 0.0
  %2026 = vmatmul.mubr.f32.gmra.mxu0 %v1932
  %v2027 = vpop.f32.mrf.mxu0
  %v2028 = vadd.f32 %v1960, %v2027
  %v2029 = vpop.f32.mrf.mxu0
  %2030 = vmatprep.mubr.f32.mxu0 0.0
  %2031 = vmatmul.mubr.f32.gmra.mxu0 %v1933
  %v2032 = vpop.f32.mrf.mxu0
  %v2033 = vadd.f32 %v1960, %v2032
  %v2034 = vpop.f32.mrf.mxu0
  %2035 = vmatprep.mubr.f32.mxu0 0.0
  %2036 = vmatmul.mubr.f32.gmra.mxu0 %v1934
  %v2037 = vpop.f32.mrf.mxu0
  %v2038 = vadd.f32 %v1960, %v2037
  %v2039 = vpop.f32.mrf.mxu0
  %2040 = vmatprep.mubr.f32.mxu0 0.0
  %2041 = vmatmul.mubr.f32.gmra.mxu0 %v1935
  %v2042 = vpop.f32.mrf.mxu0
  %v2043 = vadd.f32 %v1960, %v2042
  %v2044 = vpop.f32.mrf.mxu0
  %2045 = vmatprep.mubr.f32.mxu0 0.0
  %2046 = vmatmul.mubr.f32.gmra.mxu0 %v1936
  %v2047 = vpop.f32.mrf.mxu0
  %v2048 = vadd.f32 %v1960, %v2047
  %v2049 = vpop.f32.mrf.mxu0
  %2050 = vmatprep.mubr.f32.mxu0 0.0
  %2051 = vmatmul.mubr.f32.gmra.mxu0 %v1937
  %v2052 = vpop.f32.mrf.mxu0
  %v2053 = vadd.f32 %v1960, %v2052
  %v2054 = vpop.f32.mrf.mxu0
  %2055 = vmatprep.mubr.f32.mxu0 0.0
  %2056 = vmatmul.mubr.f32.gmra.mxu0 %v1938
  %v2057 = vpop.f32.mrf.mxu0
  %v2058 = vadd.f32 %v1960, %v2057
  %v2059 = vpop.f32.mrf.mxu0
  %2060 = vmatprep.mubr.f32.mxu0 0.0
  %2061 = vmatmul.mubr.f32.gmra.mxu0 %v1939
  %v2062 = vpop.f32.mrf.mxu0
  %v2063 = vadd.f32 %v1960, %v2062
  %v2064 = vpop.f32.mrf.mxu0
  %2065 = vdwg.mxu0
  %v2066 = vmul.f32 %v2028, %v2028
  %v2067 = vmul.f32 %v2033, %v2033
  %v2068 = vmul.f32 %v2038, %v2038
  %v2069 = vmul.f32 %v2043, %v2043
  %v2070 = vmul.f32 %v2048, %v2048
  %v2071 = vmul.f32 %v2053, %v2053
  %v2072 = vmul.f32 %v2058, %v2058
  %v2073 = vmul.f32 %v2063, %v2063
  %v2074 = vmul.f32 %v2028, %v2066
  %v2075 = vmul.f32 %v2033, %v2067
  %v2076 = vmul.f32 %v2038, %v2068
  %v2077 = vmul.f32 %v2043, %v2069
  %v2078 = vmul.f32 %v2048, %v2070
  %v2079 = vmul.f32 %v2053, %v2071
  %v2080 = vmul.f32 %v2058, %v2072
  %v2081 = vmul.f32 %v2063, %v2073
  %v2082 = vmul.f32 %v2074, 0.044715
  %v2083 = vmul.f32 %v2075, 0.044715
  %v2084 = vmul.f32 %v2076, 0.044715
  %v2085 = vmul.f32 %v2077, 0.044715
  %v2086 = vmul.f32 %v2078, 0.044715
  %v2087 = vmul.f32 %v2079, 0.044715
  %v2088 = vmul.f32 %v2080, 0.044715
  %v2089 = vmul.f32 %v2081, 0.044715
  %v2090 = vadd.f32 %v2028, %v2082
  %v2091 = vadd.f32 %v2033, %v2083
  %v2092 = vadd.f32 %v2038, %v2084
  %v2093 = vadd.f32 %v2043, %v2085
  %v2094 = vadd.f32 %v2048, %v2086
  %v2095 = vadd.f32 %v2053, %v2087
  %v2096 = vadd.f32 %v2058, %v2088
  %v2097 = vadd.f32 %v2063, %v2089
  %v2098 = vmul.f32 %v2090, 0.7978846
  %v2099 = vmul.f32 %v2091, 0.7978846
  %v2100 = vmul.f32 %v2092, 0.7978846
  %v2101 = vmul.f32 %v2093, 0.7978846
  %v2102 = vmul.f32 %v2094, 0.7978846
  %v2103 = vmul.f32 %v2095, 0.7978846
  %v2104 = vmul.f32 %v2096, 0.7978846
  %v2105 = vmul.f32 %v2097, 0.7978846
  %v2106 = vtanh.pop %v2098
  %v2107 = vtanh.pop %v2099
  %v2108 = vtanh.pop %v2100
  %v2109 = vtanh.pop %v2101
  %v2110 = vtanh.pop %v2102
  %v2111 = vtanh.pop %v2103
  %v2112 = vtanh.pop %v2104
  %v2113 = vtanh.pop %v2105
  %v2114 = vadd.f32 %v2106, 1.0
  %v2115 = vadd.f32 %v2107, 1.0
  %v2116 = vadd.f32 %v2108, 1.0
  %v2117 = vadd.f32 %v2109, 1.0
  %v2118 = vadd.f32 %v2110, 1.0
  %v2119 = vadd.f32 %v2111, 1.0
  %v2120 = vadd.f32 %v2112, 1.0
  %v2121 = vadd.f32 %v2113, 1.0
  %v2122 = vmul.f32 %v2114, 0.5
  %v2123 = vmul.f32 %v2115, 0.5
  %v2124 = vmul.f32 %v2116, 0.5
  %v2125 = vmul.f32 %v2117, 0.5
  %v2126 = vmul.f32 %v2118, 0.5
  %v2127 = vmul.f32 %v2119, 0.5
  %v2128 = vmul.f32 %v2120, 0.5
  %v2129 = vmul.f32 %v2121, 0.5
  %v2130 = vmul.f32 %v2028, %v2122
  %v2131 = vmul.f32 %v2033, %v2123
  %v2132 = vmul.f32 %v2038, %v2124
  %v2133 = vmul.f32 %v2043, %v2125
  %v2134 = vmul.f32 %v2048, %v2126
  %v2135 = vmul.f32 %v2053, %v2127
  %v2136 = vmul.f32 %v2058, %v2128
  %v2137 = vmul.f32 %v2063, %v2129
  %v2138 = vld [vmem:[%s4] sm:$0xff]
  %v2139 = vld [vmem:[%s4 + $0x8] sm:$0xff]
  %v2140 = vld [vmem:[%s4 + $0x10] sm:$0xff]
  %v2141 = vld [vmem:[%s4 + $0x18] sm:$0xff]
  %v2142 = vld [vmem:[%s4 + $0x20] sm:$0xff]
  %v2143 = vld [vmem:[%s4 + $0x28] sm:$0xff]
  %v2144 = vld [vmem:[%s4 + $0x30] sm:$0xff]
  %v2145 = vld [vmem:[%s4 + $0x38] sm:$0xff]
  %v2146 = vld [vmem:[%s4 + $0x40] sm:$0xff]
  %v2147 = vld [vmem:[%s4 + $0x48] sm:$0xff]
  %v2148 = vld [vmem:[%s4 + $0x50] sm:$0xff]
  %v2149 = vld [vmem:[%s4 + $0x58] sm:$0xff]
  %v2150 = vld [vmem:[%s4 + $0x60] sm:$0xff]
  %v2151 = vld [vmem:[%s4 + $0x68] sm:$0xff]
  %v2152 = vld [vmem:[%s4 + $0x70] sm:$0xff]
  %v2153 = vld [vmem:[%s4 + $0x78] sm:$0xff]
  %v2154 = vld [vmem:[%s5 + $0x7] sm:$0x1]
  %v2155 = vlaneseq
  %v2156 = vshrl.u32 %v2155, 7
  %v2157 = vsub.s32 0, %v2156
  %v2158 = vrot.slane %v2154, %v2157
  %2159 = vmatprep.subr.mxu0 0.0
  %2160 = vmatpush1.msra.mxu0 %v2153
  %2161 = vmatprep.subr.mxu0 0.0
  %2162 = vmatpush1.msra.mxu0 %v2152
  %2163 = vmatprep.subr.mxu0 0.0
  %2164 = vmatpush1.msra.mxu0 %v2151
  %2165 = vmatprep.subr.mxu0 0.0
  %2166 = vmatpush1.msra.mxu0 %v2150
  %2167 = vmatprep.subr.mxu0 0.0
  %2168 = vmatpush1.msra.mxu0 %v2149
  %2169 = vmatprep.subr.mxu0 0.0
  %2170 = vmatpush1.msra.mxu0 %v2148
  %2171 = vmatprep.subr.mxu0 0.0
  %2172 = vmatpush1.msra.mxu0 %v2147
  %2173 = vmatprep.subr.mxu0 0.0
  %2174 = vmatpush1.msra.mxu0 %v2146
  %2175 = vmatprep.subr.mxu0 0.0
  %2176 = vmatpush1.msra.mxu0 %v2145
  %2177 = vmatprep.subr.mxu0 0.0
  %2178 = vmatpush1.msra.mxu0 %v2144
  %2179 = vmatprep.subr.mxu0 0.0
  %2180 = vmatpush1.msra.mxu0 %v2143
  %2181 = vmatprep.subr.mxu0 0.0
  %2182 = vmatpush1.msra.mxu0 %v2142
  %2183 = vmatprep.subr.mxu0 0.0
  %2184 = vmatpush1.msra.mxu0 %v2141
  %2185 = vmatprep.subr.mxu0 0.0
  %2186 = vmatpush1.msra.mxu0 %v2140
  %2187 = vmatprep.subr.mxu0 0.0
  %2188 = vmatpush1.msra.mxu0 %v2139
  %2189 = vmatprep.subr.mxu0 0.0
  %2190 = vmatpush1.msra.mxu0 %v2138
  %2191 = vmatprep.subr.mxu0 0.0
  %2192 = vmatpush2.msra.mxu0 0.0
  %2193 = vmatprep.subr.mxu0 0.0
  %2194 = vmatpush2.msra.mxu0 0.0
  %2195 = vmatprep.subr.mxu0 0.0
  %2196 = vmatpush2.msra.mxu0 0.0
  %2197 = vmatprep.subr.mxu0 0.0
  %2198 = vmatpush2.msra.mxu0 0.0
  %2199 = vmatprep.subr.mxu0 0.0
  %2200 = vmatpush2.msra.mxu0 0.0
  %2201 = vmatprep.subr.mxu0 0.0
  %2202 = vmatpush2.msra.mxu0 0.0
  %2203 = vmatprep.subr.mxu0 0.0
  %2204 = vmatpush2.msra.mxu0 0.0
  %2205 = vmatprep.subr.mxu0 0.0
  %2206 = vmatpush2.msra.mxu0 0.0
  %2207 = vmatprep.subr.mxu0 0.0
  %2208 = vmatpush2.msra.mxu0 0.0
  %2209 = vmatprep.subr.mxu0 0.0
  %2210 = vmatpush2.msra.mxu0 0.0
  %2211 = vmatprep.subr.mxu0 0.0
  %2212 = vmatpush2.msra.mxu0 0.0
  %2213 = vmatprep.subr.mxu0 0.0
  %2214 = vmatpush2.msra.mxu0 0.0
  %2215 = vmatprep.subr.mxu0 0.0
  %2216 = vmatpush2.msra.mxu0 0.0
  %2217 = vmatprep.subr.mxu0 0.0
  %2218 = vmatpush2.msra.mxu0 0.0
  %2219 = vmatprep.subr.mxu0 0.0
  %2220 = vmatpush2.msra.mxu0 0.0
  %2221 = vmatprep.subr.mxu0 0.0
  %2222 = vmatpush2.msra.mxu0 0.0
  %2223 = vmatprep.mubr.f32.mxu0 0.0
  %2224 = vmatmul.mubr.f32.gmra.mxu0 %v2130
  %v2225 = vpop.f32.mrf.mxu0
  %v2226 = vadd.f32 %v2158, %v2225
  %v2227 = vpop.f32.mrf.mxu0
  %2228 = vmatprep.mubr.f32.mxu0 0.0
  %2229 = vmatmul.mubr.f32.gmra.mxu0 %v2131
  %v2230 = vpop.f32.mrf.mxu0
  %v2231 = vadd.f32 %v2158, %v2230
  %v2232 = vpop.f32.mrf.mxu0
  %2233 = vmatprep.mubr.f32.mxu0 0.0
  %2234 = vmatmul.mubr.f32.gmra.mxu0 %v2132
  %v2235 = vpop.f32.mrf.mxu0
  %v2236 = vadd.f32 %v2158, %v2235
  %v2237 = vpop.f32.mrf.mxu0
  %2238 = vmatprep.mubr.f32.mxu0 0.0
  %2239 = vmatmul.mubr.f32.gmra.mxu0 %v2133
  %v2240 = vpop.f32.mrf.mxu0
  %v2241 = vadd.f32 %v2158, %v2240
  %v2242 = vpop.f32.mrf.mxu0
  %2243 = vmatprep.mubr.f32.mxu0 0.0
  %2244 = vmatmul.mubr.f32.gmra.mxu0 %v2134
  %v2245 = vpop.f32.mrf.mxu0
  %v2246 = vadd.f32 %v2158, %v2245
  %v2247 = vpop.f32.mrf.mxu0
  %2248 = vmatprep.mubr.f32.mxu0 0.0
  %2249 = vmatmul.mubr.f32.gmra.mxu0 %v2135
  %v2250 = vpop.f32.mrf.mxu0
  %v2251 = vadd.f32 %v2158, %v2250
  %v2252 = vpop.f32.mrf.mxu0
  %2253 = vmatprep.mubr.f32.mxu0 0.0
  %2254 = vmatmul.mubr.f32.gmra.mxu0 %v2136
  %v2255 = vpop.f32.mrf.mxu0
  %v2256 = vadd.f32 %v2158, %v2255
  %v2257 = vpop.f32.mrf.mxu0
  %2258 = vmatprep.mubr.f32.mxu0 0.0
  %2259 = vmatmul.mubr.f32.gmra.mxu0 %v2137
  %v2260 = vpop.f32.mrf.mxu0
  %v2261 = vadd.f32 %v2158, %v2260
  %v2262 = vpop.f32.mrf.mxu0
  %2263 = vdwg.mxu0
  %v2264 = vadd.f32 %v1932, %v2226
  %v2265 = vadd.f32 %v1933, %v2231
  %v2266 = vadd.f32 %v1934, %v2236
  %v2267 = vadd.f32 %v1935, %v2241
  %v2268 = vadd.f32 %v1936, %v2246
  %v2269 = vadd.f32 %v1937, %v2251
  %v2270 = vadd.f32 %v1938, %v2256
  %v2271 = vadd.f32 %v1939, %v2261
  %2272 = vadd.xlane.f32.xlu0 %v2264
  %v2273 = vpop.xlane.xlu0 %2272
  %2274 = vadd.xlane.f32.xlu0 %v2265
  %v2275 = vpop.xlane.xlu0 %2274
  %2276 = vadd.xlane.f32.xlu0 %v2266
  %v2277 = vpop.xlane.xlu0 %2276
  %2278 = vadd.xlane.f32.xlu0 %v2267
  %v2279 = vpop.xlane.xlu0 %2278
  %2280 = vadd.xlane.f32.xlu0 %v2268
  %v2281 = vpop.xlane.xlu0 %2280
  %2282 = vadd.xlane.f32.xlu0 %v2269
  %v2283 = vpop.xlane.xlu0 %2282
  %2284 = vadd.xlane.f32.xlu0 %v2270
  %v2285 = vpop.xlane.xlu0 %2284
  %2286 = vadd.xlane.f32.xlu0 %v2271
  %v2287 = vpop.xlane.xlu0 %2286
  %v2288 = vmul.f32 %v2273, 0.03125
  %v2289 = vmul.f32 %v2275, 0.03125
  %v2290 = vmul.f32 %v2277, 0.03125
  %v2291 = vmul.f32 %v2279, 0.03125
  %v2292 = vmul.f32 %v2281, 0.03125
  %v2293 = vmul.f32 %v2283, 0.03125
  %v2294 = vmul.f32 %v2285, 0.03125
  %v2295 = vmul.f32 %v2287, 0.03125
  %v2296 = vmul.f32 %v2264, %v2264
  %v2297 = vmul.f32 %v2265, %v2265
  %v2298 = vmul.f32 %v2266, %v2266
  %v2299 = vmul.f32 %v2267, %v2267
  %v2300 = vmul.f32 %v2268, %v2268
  %v2301 = vmul.f32 %v2269, %v2269
  %v2302 = vmul.f32 %v2270, %v2270
  %v2303 = vmul.f32 %v2271, %v2271
  %2304 = vadd.xlane.f32.xlu0 %v2296
  %v2305 = vpop.xlane.xlu0 %2304
  %2306 = vadd.xlane.f32.xlu0 %v2297
  %v2307 = vpop.xlane.xlu0 %2306
  %2308 = vadd.xlane.f32.xlu0 %v2298
  %v2309 = vpop.xlane.xlu0 %2308
  %2310 = vadd.xlane.f32.xlu0 %v2299
  %v2311 = vpop.xlane.xlu0 %2310
  %2312 = vadd.xlane.f32.xlu0 %v2300
  %v2313 = vpop.xlane.xlu0 %2312
  %2314 = vadd.xlane.f32.xlu0 %v2301
  %v2315 = vpop.xlane.xlu0 %2314
  %2316 = vadd.xlane.f32.xlu0 %v2302
  %v2317 = vpop.xlane.xlu0 %2316
  %2318 = vadd.xlane.f32.xlu0 %v2303
  %v2319 = vpop.xlane.xlu0 %2318
  %v2320 = vmul.f32 %v2305, 0.03125
  %v2321 = vmul.f32 %v2307, 0.03125
  %v2322 = vmul.f32 %v2309, 0.03125
  %v2323 = vmul.f32 %v2311, 0.03125
  %v2324 = vmul.f32 %v2313, 0.03125
  %v2325 = vmul.f32 %v2315, 0.03125
  %v2326 = vmul.f32 %v2317, 0.03125
  %v2327 = vmul.f32 %v2319, 0.03125
  %v2328 = vmul.f32 %v2288, %v2288
  %v2329 = vmul.f32 %v2289, %v2289
  %v2330 = vmul.f32 %v2290, %v2290
  %v2331 = vmul.f32 %v2291, %v2291
  %v2332 = vmul.f32 %v2292, %v2292
  %v2333 = vmul.f32 %v2293, %v2293
  %v2334 = vmul.f32 %v2294, %v2294
  %v2335 = vmul.f32 %v2295, %v2295
  %v2336 = vsub.f32 %v2320, %v2328
  %v2337 = vsub.f32 %v2321, %v2329
  %v2338 = vsub.f32 %v2322, %v2330
  %v2339 = vsub.f32 %v2323, %v2331
  %v2340 = vsub.f32 %v2324, %v2332
  %v2341 = vsub.f32 %v2325, %v2333
  %v2342 = vsub.f32 %v2326, %v2334
  %v2343 = vsub.f32 %v2327, %v2335
  %v2344 = vsub.f32 %v2264, %v2288
  %v2345 = vsub.f32 %v2265, %v2289
  %v2346 = vsub.f32 %v2266, %v2290
  %v2347 = vsub.f32 %v2267, %v2291
  %v2348 = vsub.f32 %v2268, %v2292
  %v2349 = vsub.f32 %v2269, %v2293
  %v2350 = vsub.f32 %v2270, %v2294
  %v2351 = vsub.f32 %v2271, %v2295
  %v2352 = vadd.f32 %v2336, 1e-12
  %v2353 = vadd.f32 %v2337, 1e-12
  %v2354 = vadd.f32 %v2338, 1e-12
  %v2355 = vadd.f32 %v2339, 1e-12
  %v2356 = vadd.f32 %v2340, 1e-12
  %v2357 = vadd.f32 %v2341, 1e-12
  %v2358 = vadd.f32 %v2342, 1e-12
  %v2359 = vadd.f32 %v2343, 1e-12
  %v2360 = vrsqrt.pop %v2352
  %v2361 = vrsqrt.pop %v2353
  %v2362 = vrsqrt.pop %v2354
  %v2363 = vrsqrt.pop %v2355
  %v2364 = vrsqrt.pop %v2356
  %v2365 = vrsqrt.pop %v2357
  %v2366 = vrsqrt.pop %v2358
  %v2367 = vrsqrt.pop %v2359
  %v2368 = vmul.f32 %v2344, %v2360
  %v2369 = vmul.f32 %v2345, %v2361
  %v2370 = vmul.f32 %v2346, %v2362
  %v2371 = vmul.f32 %v2347, %v2363
  %v2372 = vmul.f32 %v2348, %v2364
  %v2373 = vmul.f32 %v2349, %v2365
  %v2374 = vmul.f32 %v2350, %v2366
  %v2375 = vmul.f32 %v2351, %v2367
  %v2376 = vld [vmem:[%s5 + $0x8] sm:$0x1]
  %v2377 = vlaneseq
  %v2378 = vshrl.u32 %v2377, 7
  %v2379 = vsub.s32 0, %v2378
  %v2380 = vrot.slane %v2376, %v2379
  %v2381 = vmul.f32 %v2368, %v2380
  %v2382 = vmul.f32 %v2369, %v2380
  %v2383 = vmul.f32 %v2370, %v2380
  %v2384 = vmul.f32 %v2371, %v2380
  %v2385 = vmul.f32 %v2372, %v2380
  %v2386 = vmul.f32 %v2373, %v2380
  %v2387 = vmul.f32 %v2374, %v2380
  %v2388 = vmul.f32 %v2375, %v2380
  %v2389 = vld [vmem:[%s5 + $0x9] sm:$0x1]
  %v2390 = vlaneseq
  %v2391 = vshrl.u32 %v2390, 7
  %v2392 = vsub.s32 0, %v2391
  %v2393 = vrot.slane %v2389, %v2392
  %v2394 = vadd.f32 %v2381, %v2393
  %v2395 = vadd.f32 %v2382, %v2393
  %v2396 = vadd.f32 %v2383, %v2393
  %v2397 = vadd.f32 %v2384, %v2393
  %v2398 = vadd.f32 %v2385, %v2393
  %v2399 = vadd.f32 %v2386, %v2393
  %v2400 = vadd.f32 %v2387, %v2393
  %v2401 = vadd.f32 %v2388, %v2393
  %v2402 = vlaneseq
  %v2403 = vshrl.u32 %v2402, 7
  %vm2404 = vcmp.eq.s32.totalorder %v2403, 0
  %v2405 = vsel %vm2404, %v2394, 0.0
  %v2406 = vsel %vm2404, %v2395, 0.0
  %v2407 = vsel %vm2404, %v2396, 0.0
  %v2408 = vsel %vm2404, %v2397, 0.0
  %v2409 = vsel %vm2404, %v2398, 0.0
  %v2410 = vsel %vm2404, %v2399, 0.0
  %v2411 = vsel %vm2404, %v2400, 0.0
  %v2412 = vsel %vm2404, %v2401, 0.0
  %v2413 = vrot.slane %v2405, 4
  %v2414 = vadd.f32 %v2405, %v2413
  %v2415 = vrot.slane %v2414, 2
  %v2416 = vadd.f32 %v2414, %v2415
  %v2417 = vrot.slane %v2416, 1
  %v2418 = vadd.f32 %v2416, %v2417
  %v2419 = vrot.slane %v2406, 4
  %v2420 = vadd.f32 %v2406, %v2419
  %v2421 = vrot.slane %v2420, 2
  %v2422 = vadd.f32 %v2420, %v2421
  %v2423 = vrot.slane %v2422, 1
  %v2424 = vadd.f32 %v2422, %v2423
  %v2425 = vrot.slane %v2407, 4
  %v2426 = vadd.f32 %v2407, %v2425
  %v2427 = vrot.slane %v2426, 2
  %v2428 = vadd.f32 %v2426, %v2427
  %v2429 = vrot.slane %v2428, 1
  %v2430 = vadd.f32 %v2428, %v2429
  %v2431 = vrot.slane %v2408, 4
  %v2432 = vadd.f32 %v2408, %v2431
  %v2433 = vrot.slane %v2432, 2
  %v2434 = vadd.f32 %v2432, %v2433
  %v2435 = vrot.slane %v2434, 1
  %v2436 = vadd.f32 %v2434, %v2435
  %v2437 = vrot.slane %v2409, 4
  %v2438 = vadd.f32 %v2409, %v2437
  %v2439 = vrot.slane %v2438, 2
  %v2440 = vadd.f32 %v2438, %v2439
  %v2441 = vrot.slane %v2440, 1
  %v2442 = vadd.f32 %v2440, %v2441
  %v2443 = vrot.slane %v2410, 4
  %v2444 = vadd.f32 %v2410, %v2443
  %v2445 = vrot.slane %v2444, 2
  %v2446 = vadd.f32 %v2444, %v2445
  %v2447 = vrot.slane %v2446, 1
  %v2448 = vadd.f32 %v2446, %v2447
  %v2449 = vrot.slane %v2411, 4
  %v2450 = vadd.f32 %v2411, %v2449
  %v2451 = vrot.slane %v2450, 2
  %v2452 = vadd.f32 %v2450, %v2451
  %v2453 = vrot.slane %v2452, 1
  %v2454 = vadd.f32 %v2452, %v2453
  %v2455 = vrot.slane %v2412, 4
  %v2456 = vadd.f32 %v2412, %v2455
  %v2457 = vrot.slane %v2456, 2
  %v2458 = vadd.f32 %v2456, %v2457
  %v2459 = vrot.slane %v2458, 1
  %v2460 = vadd.f32 %v2458, %v2459
  %vm2469 = vcmask 1041409
  %v2470 = vsel %vm2469, %v2424, %v2418
  %vm2471 = vcmask 1042434
  %v2472 = vsel %vm2471, %v2430, %v2470
  %vm2473 = vcmask 1043459
  %v2474 = vsel %vm2473, %v2436, %v2472
  %vm2475 = vcmask 1044484
  %v2476 = vsel %vm2475, %v2442, %v2474
  %vm2477 = vcmask 1045509
  %v2478 = vsel %vm2477, %v2448, %v2476
  %vm2479 = vcmask 1046534
  %v2480 = vsel %vm2479, %v2454, %v2478
  %vm2481 = vcmask 1047559
  %v2482 = vsel %vm2481, %v2460, %v2480
  %2484 = vst [vmem:[%s6] sm:$0xff] %v2482
  %s2485 = scalar_lea.vmem %s0, 64
  %v2486 = vld [vmem:[%s2485] sm:$0xff]
  %v2487 = vld [vmem:[%s2485 + $0x8] sm:$0xff]
  %v2488 = vld [vmem:[%s2485 + $0x10] sm:$0xff]
  %v2489 = vld [vmem:[%s2485 + $0x18] sm:$0xff]
  %v2490 = vld [vmem:[%s2485 + $0x20] sm:$0xff]
  %v2491 = vld [vmem:[%s2485 + $0x28] sm:$0xff]
  %v2492 = vld [vmem:[%s2485 + $0x30] sm:$0xff]
  %v2493 = vld [vmem:[%s2485 + $0x38] sm:$0xff]
  %s2494 = scalar_lea.vmem %s1, 384
  %v2495 = vld [vmem:[%s2494] sm:$0xff]
  %v2496 = vld [vmem:[%s2494 + $0x8] sm:$0xff]
  %v2497 = vld [vmem:[%s2494 + $0x10] sm:$0xff]
  %v2498 = vld [vmem:[%s2494 + $0x18] sm:$0xff]
  %v2499 = vld [vmem:[%s2494 + $0x20] sm:$0xff]
  %v2500 = vld [vmem:[%s2494 + $0x28] sm:$0xff]
  %v2501 = vld [vmem:[%s2494 + $0x30] sm:$0xff]
  %v2502 = vld [vmem:[%s2494 + $0x38] sm:$0xff]
  %v2503 = vld [vmem:[%s2494 + $0x40] sm:$0xff]
  %v2504 = vld [vmem:[%s2494 + $0x48] sm:$0xff]
  %v2505 = vld [vmem:[%s2494 + $0x50] sm:$0xff]
  %v2506 = vld [vmem:[%s2494 + $0x58] sm:$0xff]
  %v2507 = vld [vmem:[%s2494 + $0x60] sm:$0xff]
  %v2508 = vld [vmem:[%s2494 + $0x68] sm:$0xff]
  %v2509 = vld [vmem:[%s2494 + $0x70] sm:$0xff]
  %v2510 = vld [vmem:[%s2494 + $0x78] sm:$0xff]
  %v2511 = vld [vmem:[%s2494 + $0x80] sm:$0xff]
  %v2512 = vld [vmem:[%s2494 + $0x88] sm:$0xff]
  %v2513 = vld [vmem:[%s2494 + $0x90] sm:$0xff]
  %v2514 = vld [vmem:[%s2494 + $0x98] sm:$0xff]
  %v2515 = vld [vmem:[%s2494 + $0xa0] sm:$0xff]
  %v2516 = vld [vmem:[%s2494 + $0xa8] sm:$0xff]
  %v2517 = vld [vmem:[%s2494 + $0xb0] sm:$0xff]
  %v2518 = vld [vmem:[%s2494 + $0xb8] sm:$0xff]
  %v2519 = vld [vmem:[%s2494 + $0xc0] sm:$0xff]
  %v2520 = vld [vmem:[%s2494 + $0xc8] sm:$0xff]
  %v2521 = vld [vmem:[%s2494 + $0xd0] sm:$0xff]
  %v2522 = vld [vmem:[%s2494 + $0xd8] sm:$0xff]
  %v2523 = vld [vmem:[%s2494 + $0xe0] sm:$0xff]
  %v2524 = vld [vmem:[%s2494 + $0xe8] sm:$0xff]
  %v2525 = vld [vmem:[%s2494 + $0xf0] sm:$0xff]
  %v2526 = vld [vmem:[%s2494 + $0xf8] sm:$0xff]
  %v2527 = vld [vmem:[%s2494 + $0x100] sm:$0xff]
  %v2528 = vld [vmem:[%s2494 + $0x108] sm:$0xff]
  %v2529 = vld [vmem:[%s2494 + $0x110] sm:$0xff]
  %v2530 = vld [vmem:[%s2494 + $0x118] sm:$0xff]
  %v2531 = vld [vmem:[%s2494 + $0x120] sm:$0xff]
  %v2532 = vld [vmem:[%s2494 + $0x128] sm:$0xff]
  %v2533 = vld [vmem:[%s2494 + $0x130] sm:$0xff]
  %v2534 = vld [vmem:[%s2494 + $0x138] sm:$0xff]
  %v2535 = vld [vmem:[%s2494 + $0x140] sm:$0xff]
  %v2536 = vld [vmem:[%s2494 + $0x148] sm:$0xff]
  %v2537 = vld [vmem:[%s2494 + $0x150] sm:$0xff]
  %v2538 = vld [vmem:[%s2494 + $0x158] sm:$0xff]
  %v2539 = vld [vmem:[%s2494 + $0x160] sm:$0xff]
  %v2540 = vld [vmem:[%s2494 + $0x168] sm:$0xff]
  %v2541 = vld [vmem:[%s2494 + $0x170] sm:$0xff]
  %v2542 = vld [vmem:[%s2494 + $0x178] sm:$0xff]
  %2543 = vmatprep.subr.mxu0 %v2541
  %2544 = vmatpush1.msra.mxu0 %v2540
  %2545 = vmatprep.subr.mxu0 %v2538
  %2546 = vmatpush1.msra.mxu0 %v2537
  %2547 = vmatprep.subr.mxu0 %v2535
  %2548 = vmatpush1.msra.mxu0 %v2534
  %2549 = vmatprep.subr.mxu0 %v2532
  %2550 = vmatpush1.msra.mxu0 %v2531
  %2551 = vmatprep.subr.mxu0 %v2529
  %2552 = vmatpush1.msra.mxu0 %v2528
  %2553 = vmatprep.subr.mxu0 %v2526
  %2554 = vmatpush1.msra.mxu0 %v2525
  %2555 = vmatprep.subr.mxu0 %v2523
  %2556 = vmatpush1.msra.mxu0 %v2522
  %2557 = vmatprep.subr.mxu0 %v2520
  %2558 = vmatpush1.msra.mxu0 %v2519
  %2559 = vmatprep.subr.mxu0 %v2517
  %2560 = vmatpush1.msra.mxu0 %v2516
  %2561 = vmatprep.subr.mxu0 %v2514
  %2562 = vmatpush1.msra.mxu0 %v2513
  %2563 = vmatprep.subr.mxu0 %v2511
  %2564 = vmatpush1.msra.mxu0 %v2510
  %2565 = vmatprep.subr.mxu0 %v2508
  %2566 = vmatpush1.msra.mxu0 %v2507
  %2567 = vmatprep.subr.mxu0 %v2505
  %2568 = vmatpush1.msra.mxu0 %v2504
  %2569 = vmatprep.subr.mxu0 %v2502
  %2570 = vmatpush1.msra.mxu0 %v2501
  %2571 = vmatprep.subr.mxu0 %v2499
  %2572 = vmatpush1.msra.mxu0 %v2498
  %2573 = vmatprep.subr.mxu0 %v2496
  %2574 = vmatpush1.msra.mxu0 %v2495
  %2575 = vmatprep.subr.mxu0 0.0
  %2576 = vmatpush2.msra.mxu0 0.0
  %2577 = vmatprep.subr.mxu0 0.0
  %2578 = vmatpush2.msra.mxu0 0.0
  %2579 = vmatprep.subr.mxu0 0.0
  %2580 = vmatpush2.msra.mxu0 0.0
  %2581 = vmatprep.subr.mxu0 0.0
  %2582 = vmatpush2.msra.mxu0 0.0
  %2583 = vmatprep.subr.mxu0 0.0
  %2584 = vmatpush2.msra.mxu0 0.0
  %2585 = vmatprep.subr.mxu0 0.0
  %2586 = vmatpush2.msra.mxu0 0.0
  %2587 = vmatprep.subr.mxu0 0.0
  %2588 = vmatpush2.msra.mxu0 0.0
  %2589 = vmatprep.subr.mxu0 0.0
  %2590 = vmatpush2.msra.mxu0 0.0
  %2591 = vmatprep.subr.mxu0 0.0
  %2592 = vmatpush2.msra.mxu0 0.0
  %2593 = vmatprep.subr.mxu0 0.0
  %2594 = vmatpush2.msra.mxu0 0.0
  %2595 = vmatprep.subr.mxu0 0.0
  %2596 = vmatpush2.msra.mxu0 0.0
  %2597 = vmatprep.subr.mxu0 0.0
  %2598 = vmatpush2.msra.mxu0 0.0
  %2599 = vmatprep.subr.mxu0 0.0
  %2600 = vmatpush2.msra.mxu0 0.0
  %2601 = vmatprep.subr.mxu0 0.0
  %2602 = vmatpush2.msra.mxu0 0.0
  %2603 = vmatprep.subr.mxu0 0.0
  %2604 = vmatpush2.msra.mxu0 0.0
  %2605 = vmatprep.subr.mxu0 0.0
  %2606 = vmatpush2.msra.mxu0 0.0
  %2607 = vmatprep.mubr.f32.mxu0 0.0
  %2608 = vmatmul.mubr.f32.gmra.mxu0 %v2486
  %v2609 = vpop.f32.mrf.mxu0
  %v2610 = vadd.f32 0.0, %v2609
  %v2611 = vpop.f32.mrf.mxu0
  %v2612 = vadd.f32 0.0, %v2611
  %2613 = vmatprep.mubr.f32.mxu0 0.0
  %2614 = vmatmul.mubr.f32.gmra.mxu0 %v2487
  %v2615 = vpop.f32.mrf.mxu0
  %v2616 = vadd.f32 0.0, %v2615
  %v2617 = vpop.f32.mrf.mxu0
  %v2618 = vadd.f32 0.0, %v2617
  %2619 = vmatprep.mubr.f32.mxu0 0.0
  %2620 = vmatmul.mubr.f32.gmra.mxu0 %v2488
  %v2621 = vpop.f32.mrf.mxu0
  %v2622 = vadd.f32 0.0, %v2621
  %v2623 = vpop.f32.mrf.mxu0
  %v2624 = vadd.f32 0.0, %v2623
  %2625 = vmatprep.mubr.f32.mxu0 0.0
  %2626 = vmatmul.mubr.f32.gmra.mxu0 %v2489
  %v2627 = vpop.f32.mrf.mxu0
  %v2628 = vadd.f32 0.0, %v2627
  %v2629 = vpop.f32.mrf.mxu0
  %v2630 = vadd.f32 0.0, %v2629
  %2631 = vmatprep.mubr.f32.mxu0 0.0
  %2632 = vmatmul.mubr.f32.gmra.mxu0 %v2490
  %v2633 = vpop.f32.mrf.mxu0
  %v2634 = vadd.f32 0.0, %v2633
  %v2635 = vpop.f32.mrf.mxu0
  %v2636 = vadd.f32 0.0, %v2635
  %2637 = vmatprep.mubr.f32.mxu0 0.0
  %2638 = vmatmul.mubr.f32.gmra.mxu0 %v2491
  %v2639 = vpop.f32.mrf.mxu0
  %v2640 = vadd.f32 0.0, %v2639
  %v2641 = vpop.f32.mrf.mxu0
  %v2642 = vadd.f32 0.0, %v2641
  %2643 = vmatprep.mubr.f32.mxu0 0.0
  %2644 = vmatmul.mubr.f32.gmra.mxu0 %v2492
  %v2645 = vpop.f32.mrf.mxu0
  %v2646 = vadd.f32 0.0, %v2645
  %v2647 = vpop.f32.mrf.mxu0
  %v2648 = vadd.f32 0.0, %v2647
  %2649 = vmatprep.mubr.f32.mxu0 0.0
  %2650 = vmatmul.mubr.f32.gmra.mxu0 %v2493
  %v2651 = vpop.f32.mrf.mxu0
  %v2652 = vadd.f32 0.0, %v2651
  %v2653 = vpop.f32.mrf.mxu0
  %v2654 = vadd.f32 0.0, %v2653
  %2655 = vdwg.mxu0
  %2656 = vmatprep.subr.mxu0 0.0
  %2657 = vmatpush1.msra.mxu0 %v2542
  %2658 = vmatprep.subr.mxu0 0.0
  %2659 = vmatpush1.msra.mxu0 %v2539
  %2660 = vmatprep.subr.mxu0 0.0
  %2661 = vmatpush1.msra.mxu0 %v2536
  %2662 = vmatprep.subr.mxu0 0.0
  %2663 = vmatpush1.msra.mxu0 %v2533
  %2664 = vmatprep.subr.mxu0 0.0
  %2665 = vmatpush1.msra.mxu0 %v2530
  %2666 = vmatprep.subr.mxu0 0.0
  %2667 = vmatpush1.msra.mxu0 %v2527
  %2668 = vmatprep.subr.mxu0 0.0
  %2669 = vmatpush1.msra.mxu0 %v2524
  %2670 = vmatprep.subr.mxu0 0.0
  %2671 = vmatpush1.msra.mxu0 %v2521
  %2672 = vmatprep.subr.mxu0 0.0
  %2673 = vmatpush1.msra.mxu0 %v2518
  %2674 = vmatprep.subr.mxu0 0.0
  %2675 = vmatpush1.msra.mxu0 %v2515
  %2676 = vmatprep.subr.mxu0 0.0
  %2677 = vmatpush1.msra.mxu0 %v2512
  %2678 = vmatprep.subr.mxu0 0.0
  %2679 = vmatpush1.msra.mxu0 %v2509
  %2680 = vmatprep.subr.mxu0 0.0
  %2681 = vmatpush1.msra.mxu0 %v2506
  %2682 = vmatprep.subr.mxu0 0.0
  %2683 = vmatpush1.msra.mxu0 %v2503
  %2684 = vmatprep.subr.mxu0 0.0
  %2685 = vmatpush1.msra.mxu0 %v2500
  %2686 = vmatprep.subr.mxu0 0.0
  %2687 = vmatpush1.msra.mxu0 %v2497
  %2688 = vmatprep.subr.mxu0 0.0
  %2689 = vmatpush2.msra.mxu0 0.0
  %2690 = vmatprep.subr.mxu0 0.0
  %2691 = vmatpush2.msra.mxu0 0.0
  %2692 = vmatprep.subr.mxu0 0.0
  %2693 = vmatpush2.msra.mxu0 0.0
  %2694 = vmatprep.subr.mxu0 0.0
  %2695 = vmatpush2.msra.mxu0 0.0
  %2696 = vmatprep.subr.mxu0 0.0
  %2697 = vmatpush2.msra.mxu0 0.0
  %2698 = vmatprep.subr.mxu0 0.0
  %2699 = vmatpush2.msra.mxu0 0.0
  %2700 = vmatprep.subr.mxu0 0.0
  %2701 = vmatpush2.msra.mxu0 0.0
  %2702 = vmatprep.subr.mxu0 0.0
  %2703 = vmatpush2.msra.mxu0 0.0
  %2704 = vmatprep.subr.mxu0 0.0
  %2705 = vmatpush2.msra.mxu0 0.0
  %2706 = vmatprep.subr.mxu0 0.0
  %2707 = vmatpush2.msra.mxu0 0.0
  %2708 = vmatprep.subr.mxu0 0.0
  %2709 = vmatpush2.msra.mxu0 0.0
  %2710 = vmatprep.subr.mxu0 0.0
  %2711 = vmatpush2.msra.mxu0 0.0
  %2712 = vmatprep.subr.mxu0 0.0
  %2713 = vmatpush2.msra.mxu0 0.0
  %2714 = vmatprep.subr.mxu0 0.0
  %2715 = vmatpush2.msra.mxu0 0.0
  %2716 = vmatprep.subr.mxu0 0.0
  %2717 = vmatpush2.msra.mxu0 0.0
  %2718 = vmatprep.subr.mxu0 0.0
  %2719 = vmatpush2.msra.mxu0 0.0
  %2720 = vmatprep.mubr.f32.mxu0 0.0
  %2721 = vmatmul.mubr.f32.gmra.mxu0 %v2486
  %v2722 = vpop.f32.mrf.mxu0
  %v2723 = vadd.f32 0.0, %v2722
  %v2724 = vpop.f32.mrf.mxu0
  %2725 = vmatprep.mubr.f32.mxu0 0.0
  %2726 = vmatmul.mubr.f32.gmra.mxu0 %v2487
  %v2727 = vpop.f32.mrf.mxu0
  %v2728 = vadd.f32 0.0, %v2727
  %v2729 = vpop.f32.mrf.mxu0
  %2730 = vmatprep.mubr.f32.mxu0 0.0
  %2731 = vmatmul.mubr.f32.gmra.mxu0 %v2488
  %v2732 = vpop.f32.mrf.mxu0
  %v2733 = vadd.f32 0.0, %v2732
  %v2734 = vpop.f32.mrf.mxu0
  %2735 = vmatprep.mubr.f32.mxu0 0.0
  %2736 = vmatmul.mubr.f32.gmra.mxu0 %v2489
  %v2737 = vpop.f32.mrf.mxu0
  %v2738 = vadd.f32 0.0, %v2737
  %v2739 = vpop.f32.mrf.mxu0
  %2740 = vmatprep.mubr.f32.mxu0 0.0
  %2741 = vmatmul.mubr.f32.gmra.mxu0 %v2490
  %v2742 = vpop.f32.mrf.mxu0
  %v2743 = vadd.f32 0.0, %v2742
  %v2744 = vpop.f32.mrf.mxu0
  %2745 = vmatprep.mubr.f32.mxu0 0.0
  %2746 = vmatmul.mubr.f32.gmra.mxu0 %v2491
  %v2747 = vpop.f32.mrf.mxu0
  %v2748 = vadd.f32 0.0, %v2747
  %v2749 = vpop.f32.mrf.mxu0
  %2750 = vmatprep.mubr.f32.mxu0 0.0
  %2751 = vmatmul.mubr.f32.gmra.mxu0 %v2492
  %v2752 = vpop.f32.mrf.mxu0
  %v2753 = vadd.f32 0.0, %v2752
  %v2754 = vpop.f32.mrf.mxu0
  %2755 = vmatprep.mubr.f32.mxu0 0.0
  %2756 = vmatmul.mubr.f32.gmra.mxu0 %v2493
  %v2757 = vpop.f32.mrf.mxu0
  %v2758 = vadd.f32 0.0, %v2757
  %v2759 = vpop.f32.mrf.mxu0
  %2760 = vdwg.mxu0
  %s2761 = scalar_lea.vmem %s5, 24
  %v2762 = vld [vmem:[%s2761] sm:$0x1]
  %v2763 = vlaneseq
  %v2764 = vshrl.u32 %v2763, 7
  %v2765 = vsub.s32 0, %v2764
  %v2766 = vrot.slane %v2762, %v2765
  %v2767 = vadd.f32 %v2610, %v2766
  %v2768 = vadd.f32 %v2616, %v2766
  %v2769 = vadd.f32 %v2622, %v2766
  %v2770 = vadd.f32 %v2628, %v2766
  %v2771 = vadd.f32 %v2634, %v2766
  %v2772 = vadd.f32 %v2640, %v2766
  %v2773 = vadd.f32 %v2646, %v2766
  %v2774 = vadd.f32 %v2652, %v2766
  %v2775 = vld [vmem:[%s2761 + $0x1] sm:$0x1]
  %v2776 = vlaneseq
  %v2777 = vshrl.u32 %v2776, 7
  %v2778 = vsub.s32 0, %v2777
  %v2779 = vrot.slane %v2775, %v2778
  %v2780 = vadd.f32 %v2612, %v2779
  %v2781 = vadd.f32 %v2618, %v2779
  %v2782 = vadd.f32 %v2624, %v2779
  %v2783 = vadd.f32 %v2630, %v2779
  %v2784 = vadd.f32 %v2636, %v2779
  %v2785 = vadd.f32 %v2642, %v2779
  %v2786 = vadd.f32 %v2648, %v2779
  %v2787 = vadd.f32 %v2654, %v2779
  %v2788 = vld [vmem:[%s2761 + $0x2] sm:$0x1]
  %v2789 = vlaneseq
  %v2790 = vshrl.u32 %v2789, 7
  %v2791 = vsub.s32 0, %v2790
  %v2792 = vrot.slane %v2788, %v2791
  %v2793 = vadd.f32 %v2723, %v2792
  %v2794 = vadd.f32 %v2728, %v2792
  %v2795 = vadd.f32 %v2733, %v2792
  %v2796 = vadd.f32 %v2738, %v2792
  %v2797 = vadd.f32 %v2743, %v2792
  %v2798 = vadd.f32 %v2748, %v2792
  %v2799 = vadd.f32 %v2753, %v2792
  %v2800 = vadd.f32 %v2758, %v2792
  %2801 = vmatprep.subr.mxu0 0.0
  %2802 = vmatpush1.xpose.msra.mxu0 0.0
  %2803 = vmatprep.subr.mxu0 0.0
  %2804 = vmatpush1.xpose.msra.mxu0 0.0
  %2805 = vmatprep.subr.mxu0 0.0
  %2806 = vmatpush1.xpose.msra.mxu0 0.0
  %2807 = vmatprep.subr.mxu0 0.0
  %2808 = vmatpush1.xpose.msra.mxu0 0.0
  %2809 = vmatprep.subr.mxu0 0.0
  %2810 = vmatpush1.xpose.msra.mxu0 0.0
  %2811 = vmatprep.subr.mxu0 0.0
  %2812 = vmatpush1.xpose.msra.mxu0 0.0
  %2813 = vmatprep.subr.mxu0 0.0
  %2814 = vmatpush1.xpose.msra.mxu0 0.0
  %2815 = vmatprep.subr.mxu0 0.0
  %2816 = vmatpush1.xpose.msra.mxu0 0.0
  %2817 = vmatprep.subr.mxu0 0.0
  %2818 = vmatpush1.xpose.msra.mxu0 0.0
  %2819 = vmatprep.subr.mxu0 0.0
  %2820 = vmatpush1.xpose.msra.mxu0 0.0
  %2821 = vmatprep.subr.mxu0 0.0
  %2822 = vmatpush1.xpose.msra.mxu0 0.0
  %2823 = vmatprep.subr.mxu0 0.0
  %2824 = vmatpush1.xpose.msra.mxu0 0.0
  %2825 = vmatprep.subr.mxu0 0.0
  %2826 = vmatpush1.xpose.msra.mxu0 0.0
  %2827 = vmatprep.subr.mxu0 0.0
  %2828 = vmatpush1.xpose.msra.mxu0 0.0
  %2829 = vmatprep.subr.mxu0 0.0
  %2830 = vmatpush1.xpose.msra.mxu0 0.0
  %2831 = vmatprep.subr.mxu0 0.0
  %2832 = vmatpush1.xpose.msra.mxu0 %v2780
  %2833 = vmatprep.subr.mxu0 0.0
  %2834 = vmatpush2.xpose.msra.mxu0 0.0
  %2835 = vmatprep.subr.mxu0 0.0
  %2836 = vmatpush2.xpose.msra.mxu0 0.0
  %2837 = vmatprep.subr.mxu0 0.0
  %2838 = vmatpush2.xpose.msra.mxu0 0.0
  %2839 = vmatprep.subr.mxu0 0.0
  %2840 = vmatpush2.xpose.msra.mxu0 0.0
  %2841 = vmatprep.subr.mxu0 0.0
  %2842 = vmatpush2.xpose.msra.mxu0 0.0
  %2843 = vmatprep.subr.mxu0 0.0
  %2844 = vmatpush2.xpose.msra.mxu0 0.0
  %2845 = vmatprep.subr.mxu0 0.0
  %2846 = vmatpush2.xpose.msra.mxu0 0.0
  %2847 = vmatprep.subr.mxu0 0.0
  %2848 = vmatpush2.xpose.msra.mxu0 0.0
  %2849 = vmatprep.subr.mxu0 0.0
  %2850 = vmatpush2.xpose.msra.mxu0 0.0
  %2851 = vmatprep.subr.mxu0 0.0
  %2852 = vmatpush2.xpose.msra.mxu0 0.0
  %2853 = vmatprep.subr.mxu0 0.0
  %2854 = vmatpush2.xpose.msra.mxu0 0.0
  %2855 = vmatprep.subr.mxu0 0.0
  %2856 = vmatpush2.xpose.msra.mxu0 0.0
  %2857 = vmatprep.subr.mxu0 0.0
  %2858 = vmatpush2.xpose.msra.mxu0 0.0
  %2859 = vmatprep.subr.mxu0 0.0
  %2860 = vmatpush2.xpose.msra.mxu0 0.0
  %2861 = vmatprep.subr.mxu0 0.0
  %2862 = vmatpush2.xpose.msra.mxu0 0.0
  %2863 = vmatprep.subr.mxu0 0.0
  %2864 = vmatpush2.xpose.msra.mxu0 0.0
  %2865 = vmatprep.mubr.f32.mxu0 0.0
  %2866 = vmatmul.mubr.f32.gmra.mxu0 %v2767
  %v2867 = vpop.f32.mrf.mxu0
  %v2868 = vadd.f32 0.0, %v2867
  %v2869 = vpop.f32.mrf.mxu0
  %2870 = vdwg.mxu0
  %2871 = vmatprep.subr.mxu0 0.0
  %2872 = vmatpush1.xpose.msra.mxu0 0.0
  %2873 = vmatprep.subr.mxu0 0.0
  %2874 = vmatpush1.xpose.msra.mxu0 0.0
  %2875 = vmatprep.subr.mxu0 0.0
  %2876 = vmatpush1.xpose.msra.mxu0 0.0
  %2877 = vmatprep.subr.mxu0 0.0
  %2878 = vmatpush1.xpose.msra.mxu0 0.0
  %2879 = vmatprep.subr.mxu0 0.0
  %2880 = vmatpush1.xpose.msra.mxu0 0.0
  %2881 = vmatprep.subr.mxu0 0.0
  %2882 = vmatpush1.xpose.msra.mxu0 0.0
  %2883 = vmatprep.subr.mxu0 0.0
  %2884 = vmatpush1.xpose.msra.mxu0 0.0
  %2885 = vmatprep.subr.mxu0 0.0
  %2886 = vmatpush1.xpose.msra.mxu0 0.0
  %2887 = vmatprep.subr.mxu0 0.0
  %2888 = vmatpush1.xpose.msra.mxu0 0.0
  %2889 = vmatprep.subr.mxu0 0.0
  %2890 = vmatpush1.xpose.msra.mxu0 0.0
  %2891 = vmatprep.subr.mxu0 0.0
  %2892 = vmatpush1.xpose.msra.mxu0 0.0
  %2893 = vmatprep.subr.mxu0 0.0
  %2894 = vmatpush1.xpose.msra.mxu0 0.0
  %2895 = vmatprep.subr.mxu0 0.0
  %2896 = vmatpush1.xpose.msra.mxu0 0.0
  %2897 = vmatprep.subr.mxu0 0.0
  %2898 = vmatpush1.xpose.msra.mxu0 0.0
  %2899 = vmatprep.subr.mxu0 0.0
  %2900 = vmatpush1.xpose.msra.mxu0 0.0
  %2901 = vmatprep.subr.mxu0 0.0
  %2902 = vmatpush1.xpose.msra.mxu0 %v2781
  %2903 = vmatprep.subr.mxu0 0.0
  %2904 = vmatpush2.xpose.msra.mxu0 0.0
  %2905 = vmatprep.subr.mxu0 0.0
  %2906 = vmatpush2.xpose.msra.mxu0 0.0
  %2907 = vmatprep.subr.mxu0 0.0
  %2908 = vmatpush2.xpose.msra.mxu0 0.0
  %2909 = vmatprep.subr.mxu0 0.0
  %2910 = vmatpush2.xpose.msra.mxu0 0.0
  %2911 = vmatprep.subr.mxu0 0.0
  %2912 = vmatpush2.xpose.msra.mxu0 0.0
  %2913 = vmatprep.subr.mxu0 0.0
  %2914 = vmatpush2.xpose.msra.mxu0 0.0
  %2915 = vmatprep.subr.mxu0 0.0
  %2916 = vmatpush2.xpose.msra.mxu0 0.0
  %2917 = vmatprep.subr.mxu0 0.0
  %2918 = vmatpush2.xpose.msra.mxu0 0.0
  %2919 = vmatprep.subr.mxu0 0.0
  %2920 = vmatpush2.xpose.msra.mxu0 0.0
  %2921 = vmatprep.subr.mxu0 0.0
  %2922 = vmatpush2.xpose.msra.mxu0 0.0
  %2923 = vmatprep.subr.mxu0 0.0
  %2924 = vmatpush2.xpose.msra.mxu0 0.0
  %2925 = vmatprep.subr.mxu0 0.0
  %2926 = vmatpush2.xpose.msra.mxu0 0.0
  %2927 = vmatprep.subr.mxu0 0.0
  %2928 = vmatpush2.xpose.msra.mxu0 0.0
  %2929 = vmatprep.subr.mxu0 0.0
  %2930 = vmatpush2.xpose.msra.mxu0 0.0
  %2931 = vmatprep.subr.mxu0 0.0
  %2932 = vmatpush2.xpose.msra.mxu0 0.0
  %2933 = vmatprep.subr.mxu0 0.0
  %2934 = vmatpush2.xpose.msra.mxu0 0.0
  %2935 = vmatprep.mubr.f32.mxu0 0.0
  %2936 = vmatmul.mubr.f32.gmra.mxu0 %v2768
  %v2937 = vpop.f32.mrf.mxu0
  %v2938 = vadd.f32 0.0, %v2937
  %v2939 = vpop.f32.mrf.mxu0
  %2940 = vdwg.mxu0
  %2941 = vmatprep.subr.mxu0 0.0
  %2942 = vmatpush1.xpose.msra.mxu0 0.0
  %2943 = vmatprep.subr.mxu0 0.0
  %2944 = vmatpush1.xpose.msra.mxu0 0.0
  %2945 = vmatprep.subr.mxu0 0.0
  %2946 = vmatpush1.xpose.msra.mxu0 0.0
  %2947 = vmatprep.subr.mxu0 0.0
  %2948 = vmatpush1.xpose.msra.mxu0 0.0
  %2949 = vmatprep.subr.mxu0 0.0
  %2950 = vmatpush1.xpose.msra.mxu0 0.0
  %2951 = vmatprep.subr.mxu0 0.0
  %2952 = vmatpush1.xpose.msra.mxu0 0.0
  %2953 = vmatprep.subr.mxu0 0.0
  %2954 = vmatpush1.xpose.msra.mxu0 0.0
  %2955 = vmatprep.subr.mxu0 0.0
  %2956 = vmatpush1.xpose.msra.mxu0 0.0
  %2957 = vmatprep.subr.mxu0 0.0
  %2958 = vmatpush1.xpose.msra.mxu0 0.0
  %2959 = vmatprep.subr.mxu0 0.0
  %2960 = vmatpush1.xpose.msra.mxu0 0.0
  %2961 = vmatprep.subr.mxu0 0.0
  %2962 = vmatpush1.xpose.msra.mxu0 0.0
  %2963 = vmatprep.subr.mxu0 0.0
  %2964 = vmatpush1.xpose.msra.mxu0 0.0
  %2965 = vmatprep.subr.mxu0 0.0
  %2966 = vmatpush1.xpose.msra.mxu0 0.0
  %2967 = vmatprep.subr.mxu0 0.0
  %2968 = vmatpush1.xpose.msra.mxu0 0.0
  %2969 = vmatprep.subr.mxu0 0.0
  %2970 = vmatpush1.xpose.msra.mxu0 0.0
  %2971 = vmatprep.subr.mxu0 0.0
  %2972 = vmatpush1.xpose.msra.mxu0 %v2782
  %2973 = vmatprep.subr.mxu0 0.0
  %2974 = vmatpush2.xpose.msra.mxu0 0.0
  %2975 = vmatprep.subr.mxu0 0.0
  %2976 = vmatpush2.xpose.msra.mxu0 0.0
  %2977 = vmatprep.subr.mxu0 0.0
  %2978 = vmatpush2.xpose.msra.mxu0 0.0
  %2979 = vmatprep.subr.mxu0 0.0
  %2980 = vmatpush2.xpose.msra.mxu0 0.0
  %2981 = vmatprep.subr.mxu0 0.0
  %2982 = vmatpush2.xpose.msra.mxu0 0.0
  %2983 = vmatprep.subr.mxu0 0.0
  %2984 = vmatpush2.xpose.msra.mxu0 0.0
  %2985 = vmatprep.subr.mxu0 0.0
  %2986 = vmatpush2.xpose.msra.mxu0 0.0
  %2987 = vmatprep.subr.mxu0 0.0
  %2988 = vmatpush2.xpose.msra.mxu0 0.0
  %2989 = vmatprep.subr.mxu0 0.0
  %2990 = vmatpush2.xpose.msra.mxu0 0.0
  %2991 = vmatprep.subr.mxu0 0.0
  %2992 = vmatpush2.xpose.msra.mxu0 0.0
  %2993 = vmatprep.subr.mxu0 0.0
  %2994 = vmatpush2.xpose.msra.mxu0 0.0
  %2995 = vmatprep.subr.mxu0 0.0
  %2996 = vmatpush2.xpose.msra.mxu0 0.0
  %2997 = vmatprep.subr.mxu0 0.0
  %2998 = vmatpush2.xpose.msra.mxu0 0.0
  %2999 = vmatprep.subr.mxu0 0.0
  %3000 = vmatpush2.xpose.msra.mxu0 0.0
  %3001 = vmatprep.subr.mxu0 0.0
  %3002 = vmatpush2.xpose.msra.mxu0 0.0
  %3003 = vmatprep.subr.mxu0 0.0
  %3004 = vmatpush2.xpose.msra.mxu0 0.0
  %3005 = vmatprep.mubr.f32.mxu0 0.0
  %3006 = vmatmul.mubr.f32.gmra.mxu0 %v2769
  %v3007 = vpop.f32.mrf.mxu0
  %v3008 = vadd.f32 0.0, %v3007
  %v3009 = vpop.f32.mrf.mxu0
  %3010 = vdwg.mxu0
  %3011 = vmatprep.subr.mxu0 0.0
  %3012 = vmatpush1.xpose.msra.mxu0 0.0
  %3013 = vmatprep.subr.mxu0 0.0
  %3014 = vmatpush1.xpose.msra.mxu0 0.0
  %3015 = vmatprep.subr.mxu0 0.0
  %3016 = vmatpush1.xpose.msra.mxu0 0.0
  %3017 = vmatprep.subr.mxu0 0.0
  %3018 = vmatpush1.xpose.msra.mxu0 0.0
  %3019 = vmatprep.subr.mxu0 0.0
  %3020 = vmatpush1.xpose.msra.mxu0 0.0
  %3021 = vmatprep.subr.mxu0 0.0
  %3022 = vmatpush1.xpose.msra.mxu0 0.0
  %3023 = vmatprep.subr.mxu0 0.0
  %3024 = vmatpush1.xpose.msra.mxu0 0.0
  %3025 = vmatprep.subr.mxu0 0.0
  %3026 = vmatpush1.xpose.msra.mxu0 0.0
  %3027 = vmatprep.subr.mxu0 0.0
  %3028 = vmatpush1.xpose.msra.mxu0 0.0
  %3029 = vmatprep.subr.mxu0 0.0
  %3030 = vmatpush1.xpose.msra.mxu0 0.0
  %3031 = vmatprep.subr.mxu0 0.0
  %3032 = vmatpush1.xpose.msra.mxu0 0.0
  %3033 = vmatprep.subr.mxu0 0.0
  %3034 = vmatpush1.xpose.msra.mxu0 0.0
  %3035 = vmatprep.subr.mxu0 0.0
  %3036 = vmatpush1.xpose.msra.mxu0 0.0
  %3037 = vmatprep.subr.mxu0 0.0
  %3038 = vmatpush1.xpose.msra.mxu0 0.0
  %3039 = vmatprep.subr.mxu0 0.0
  %3040 = vmatpush1.xpose.msra.mxu0 0.0
  %3041 = vmatprep.subr.mxu0 0.0
  %3042 = vmatpush1.xpose.msra.mxu0 %v2783
  %3043 = vmatprep.subr.mxu0 0.0
  %3044 = vmatpush2.xpose.msra.mxu0 0.0
  %3045 = vmatprep.subr.mxu0 0.0
  %3046 = vmatpush2.xpose.msra.mxu0 0.0
  %3047 = vmatprep.subr.mxu0 0.0
  %3048 = vmatpush2.xpose.msra.mxu0 0.0
  %3049 = vmatprep.subr.mxu0 0.0
  %3050 = vmatpush2.xpose.msra.mxu0 0.0
  %3051 = vmatprep.subr.mxu0 0.0
  %3052 = vmatpush2.xpose.msra.mxu0 0.0
  %3053 = vmatprep.subr.mxu0 0.0
  %3054 = vmatpush2.xpose.msra.mxu0 0.0
  %3055 = vmatprep.subr.mxu0 0.0
  %3056 = vmatpush2.xpose.msra.mxu0 0.0
  %3057 = vmatprep.subr.mxu0 0.0
  %3058 = vmatpush2.xpose.msra.mxu0 0.0
  %3059 = vmatprep.subr.mxu0 0.0
  %3060 = vmatpush2.xpose.msra.mxu0 0.0
  %3061 = vmatprep.subr.mxu0 0.0
  %3062 = vmatpush2.xpose.msra.mxu0 0.0
  %3063 = vmatprep.subr.mxu0 0.0
  %3064 = vmatpush2.xpose.msra.mxu0 0.0
  %3065 = vmatprep.subr.mxu0 0.0
  %3066 = vmatpush2.xpose.msra.mxu0 0.0
  %3067 = vmatprep.subr.mxu0 0.0
  %3068 = vmatpush2.xpose.msra.mxu0 0.0
  %3069 = vmatprep.subr.mxu0 0.0
  %3070 = vmatpush2.xpose.msra.mxu0 0.0
  %3071 = vmatprep.subr.mxu0 0.0
  %3072 = vmatpush2.xpose.msra.mxu0 0.0
  %3073 = vmatprep.subr.mxu0 0.0
  %3074 = vmatpush2.xpose.msra.mxu0 0.0
  %3075 = vmatprep.mubr.f32.mxu0 0.0
  %3076 = vmatmul.mubr.f32.gmra.mxu0 %v2770
  %v3077 = vpop.f32.mrf.mxu0
  %v3078 = vadd.f32 0.0, %v3077
  %v3079 = vpop.f32.mrf.mxu0
  %3080 = vdwg.mxu0
  %3081 = vmatprep.subr.mxu0 0.0
  %3082 = vmatpush1.xpose.msra.mxu0 0.0
  %3083 = vmatprep.subr.mxu0 0.0
  %3084 = vmatpush1.xpose.msra.mxu0 0.0
  %3085 = vmatprep.subr.mxu0 0.0
  %3086 = vmatpush1.xpose.msra.mxu0 0.0
  %3087 = vmatprep.subr.mxu0 0.0
  %3088 = vmatpush1.xpose.msra.mxu0 0.0
  %3089 = vmatprep.subr.mxu0 0.0
  %3090 = vmatpush1.xpose.msra.mxu0 0.0
  %3091 = vmatprep.subr.mxu0 0.0
  %3092 = vmatpush1.xpose.msra.mxu0 0.0
  %3093 = vmatprep.subr.mxu0 0.0
  %3094 = vmatpush1.xpose.msra.mxu0 0.0
  %3095 = vmatprep.subr.mxu0 0.0
  %3096 = vmatpush1.xpose.msra.mxu0 0.0
  %3097 = vmatprep.subr.mxu0 0.0
  %3098 = vmatpush1.xpose.msra.mxu0 0.0
  %3099 = vmatprep.subr.mxu0 0.0
  %3100 = vmatpush1.xpose.msra.mxu0 0.0
  %3101 = vmatprep.subr.mxu0 0.0
  %3102 = vmatpush1.xpose.msra.mxu0 0.0
  %3103 = vmatprep.subr.mxu0 0.0
  %3104 = vmatpush1.xpose.msra.mxu0 0.0
  %3105 = vmatprep.subr.mxu0 0.0
  %3106 = vmatpush1.xpose.msra.mxu0 0.0
  %3107 = vmatprep.subr.mxu0 0.0
  %3108 = vmatpush1.xpose.msra.mxu0 0.0
  %3109 = vmatprep.subr.mxu0 0.0
  %3110 = vmatpush1.xpose.msra.mxu0 0.0
  %3111 = vmatprep.subr.mxu0 0.0
  %3112 = vmatpush1.xpose.msra.mxu0 %v2784
  %3113 = vmatprep.subr.mxu0 0.0
  %3114 = vmatpush2.xpose.msra.mxu0 0.0
  %3115 = vmatprep.subr.mxu0 0.0
  %3116 = vmatpush2.xpose.msra.mxu0 0.0
  %3117 = vmatprep.subr.mxu0 0.0
  %3118 = vmatpush2.xpose.msra.mxu0 0.0
  %3119 = vmatprep.subr.mxu0 0.0
  %3120 = vmatpush2.xpose.msra.mxu0 0.0
  %3121 = vmatprep.subr.mxu0 0.0
  %3122 = vmatpush2.xpose.msra.mxu0 0.0
  %3123 = vmatprep.subr.mxu0 0.0
  %3124 = vmatpush2.xpose.msra.mxu0 0.0
  %3125 = vmatprep.subr.mxu0 0.0
  %3126 = vmatpush2.xpose.msra.mxu0 0.0
  %3127 = vmatprep.subr.mxu0 0.0
  %3128 = vmatpush2.xpose.msra.mxu0 0.0
  %3129 = vmatprep.subr.mxu0 0.0
  %3130 = vmatpush2.xpose.msra.mxu0 0.0
  %3131 = vmatprep.subr.mxu0 0.0
  %3132 = vmatpush2.xpose.msra.mxu0 0.0
  %3133 = vmatprep.subr.mxu0 0.0
  %3134 = vmatpush2.xpose.msra.mxu0 0.0
  %3135 = vmatprep.subr.mxu0 0.0
  %3136 = vmatpush2.xpose.msra.mxu0 0.0
  %3137 = vmatprep.subr.mxu0 0.0
  %3138 = vmatpush2.xpose.msra.mxu0 0.0
  %3139 = vmatprep.subr.mxu0 0.0
  %3140 = vmatpush2.xpose.msra.mxu0 0.0
  %3141 = vmatprep.subr.mxu0 0.0
  %3142 = vmatpush2.xpose.msra.mxu0 0.0
  %3143 = vmatprep.subr.mxu0 0.0
  %3144 = vmatpush2.xpose.msra.mxu0 0.0
  %3145 = vmatprep.mubr.f32.mxu0 0.0
  %3146 = vmatmul.mubr.f32.gmra.mxu0 %v2771
  %v3147 = vpop.f32.mrf.mxu0
  %v3148 = vadd.f32 0.0, %v3147
  %v3149 = vpop.f32.mrf.mxu0
  %3150 = vdwg.mxu0
  %3151 = vmatprep.subr.mxu0 0.0
  %3152 = vmatpush1.xpose.msra.mxu0 0.0
  %3153 = vmatprep.subr.mxu0 0.0
  %3154 = vmatpush1.xpose.msra.mxu0 0.0
  %3155 = vmatprep.subr.mxu0 0.0
  %3156 = vmatpush1.xpose.msra.mxu0 0.0
  %3157 = vmatprep.subr.mxu0 0.0
  %3158 = vmatpush1.xpose.msra.mxu0 0.0
  %3159 = vmatprep.subr.mxu0 0.0
  %3160 = vmatpush1.xpose.msra.mxu0 0.0
  %3161 = vmatprep.subr.mxu0 0.0
  %3162 = vmatpush1.xpose.msra.mxu0 0.0
  %3163 = vmatprep.subr.mxu0 0.0
  %3164 = vmatpush1.xpose.msra.mxu0 0.0
  %3165 = vmatprep.subr.mxu0 0.0
  %3166 = vmatpush1.xpose.msra.mxu0 0.0
  %3167 = vmatprep.subr.mxu0 0.0
  %3168 = vmatpush1.xpose.msra.mxu0 0.0
  %3169 = vmatprep.subr.mxu0 0.0
  %3170 = vmatpush1.xpose.msra.mxu0 0.0
  %3171 = vmatprep.subr.mxu0 0.0
  %3172 = vmatpush1.xpose.msra.mxu0 0.0
  %3173 = vmatprep.subr.mxu0 0.0
  %3174 = vmatpush1.xpose.msra.mxu0 0.0
  %3175 = vmatprep.subr.mxu0 0.0
  %3176 = vmatpush1.xpose.msra.mxu0 0.0
  %3177 = vmatprep.subr.mxu0 0.0
  %3178 = vmatpush1.xpose.msra.mxu0 0.0
  %3179 = vmatprep.subr.mxu0 0.0
  %3180 = vmatpush1.xpose.msra.mxu0 0.0
  %3181 = vmatprep.subr.mxu0 0.0
  %3182 = vmatpush1.xpose.msra.mxu0 %v2785
  %3183 = vmatprep.subr.mxu0 0.0
  %3184 = vmatpush2.xpose.msra.mxu0 0.0
  %3185 = vmatprep.subr.mxu0 0.0
  %3186 = vmatpush2.xpose.msra.mxu0 0.0
  %3187 = vmatprep.subr.mxu0 0.0
  %3188 = vmatpush2.xpose.msra.mxu0 0.0
  %3189 = vmatprep.subr.mxu0 0.0
  %3190 = vmatpush2.xpose.msra.mxu0 0.0
  %3191 = vmatprep.subr.mxu0 0.0
  %3192 = vmatpush2.xpose.msra.mxu0 0.0
  %3193 = vmatprep.subr.mxu0 0.0
  %3194 = vmatpush2.xpose.msra.mxu0 0.0
  %3195 = vmatprep.subr.mxu0 0.0
  %3196 = vmatpush2.xpose.msra.mxu0 0.0
  %3197 = vmatprep.subr.mxu0 0.0
  %3198 = vmatpush2.xpose.msra.mxu0 0.0
  %3199 = vmatprep.subr.mxu0 0.0
  %3200 = vmatpush2.xpose.msra.mxu0 0.0
  %3201 = vmatprep.subr.mxu0 0.0
  %3202 = vmatpush2.xpose.msra.mxu0 0.0
  %3203 = vmatprep.subr.mxu0 0.0
  %3204 = vmatpush2.xpose.msra.mxu0 0.0
  %3205 = vmatprep.subr.mxu0 0.0
  %3206 = vmatpush2.xpose.msra.mxu0 0.0
  %3207 = vmatprep.subr.mxu0 0.0
  %3208 = vmatpush2.xpose.msra.mxu0 0.0
  %3209 = vmatprep.subr.mxu0 0.0
  %3210 = vmatpush2.xpose.msra.mxu0 0.0
  %3211 = vmatprep.subr.mxu0 0.0
  %3212 = vmatpush2.xpose.msra.mxu0 0.0
  %3213 = vmatprep.subr.mxu0 0.0
  %3214 = vmatpush2.xpose.msra.mxu0 0.0
  %3215 = vmatprep.mubr.f32.mxu0 0.0
  %3216 = vmatmul.mubr.f32.gmra.mxu0 %v2772
  %v3217 = vpop.f32.mrf.mxu0
  %v3218 = vadd.f32 0.0, %v3217
  %v3219 = vpop.f32.mrf.mxu0
  %3220 = vdwg.mxu0
  %3221 = vmatprep.subr.mxu0 0.0
  %3222 = vmatpush1.xpose.msra.mxu0 0.0
  %3223 = vmatprep.subr.mxu0 0.0
  %3224 = vmatpush1.xpose.msra.mxu0 0.0
  %3225 = vmatprep.subr.mxu0 0.0
  %3226 = vmatpush1.xpose.msra.mxu0 0.0
  %3227 = vmatprep.subr.mxu0 0.0
  %3228 = vmatpush1.xpose.msra.mxu0 0.0
  %3229 = vmatprep.subr.mxu0 0.0
  %3230 = vmatpush1.xpose.msra.mxu0 0.0
  %3231 = vmatprep.subr.mxu0 0.0
  %3232 = vmatpush1.xpose.msra.mxu0 0.0
  %3233 = vmatprep.subr.mxu0 0.0
  %3234 = vmatpush1.xpose.msra.mxu0 0.0
  %3235 = vmatprep.subr.mxu0 0.0
  %3236 = vmatpush1.xpose.msra.mxu0 0.0
  %3237 = vmatprep.subr.mxu0 0.0
  %3238 = vmatpush1.xpose.msra.mxu0 0.0
  %3239 = vmatprep.subr.mxu0 0.0
  %3240 = vmatpush1.xpose.msra.mxu0 0.0
  %3241 = vmatprep.subr.mxu0 0.0
  %3242 = vmatpush1.xpose.msra.mxu0 0.0
  %3243 = vmatprep.subr.mxu0 0.0
  %3244 = vmatpush1.xpose.msra.mxu0 0.0
  %3245 = vmatprep.subr.mxu0 0.0
  %3246 = vmatpush1.xpose.msra.mxu0 0.0
  %3247 = vmatprep.subr.mxu0 0.0
  %3248 = vmatpush1.xpose.msra.mxu0 0.0
  %3249 = vmatprep.subr.mxu0 0.0
  %3250 = vmatpush1.xpose.msra.mxu0 0.0
  %3251 = vmatprep.subr.mxu0 0.0
  %3252 = vmatpush1.xpose.msra.mxu0 %v2786
  %3253 = vmatprep.subr.mxu0 0.0
  %3254 = vmatpush2.xpose.msra.mxu0 0.0
  %3255 = vmatprep.subr.mxu0 0.0
  %3256 = vmatpush2.xpose.msra.mxu0 0.0
  %3257 = vmatprep.subr.mxu0 0.0
  %3258 = vmatpush2.xpose.msra.mxu0 0.0
  %3259 = vmatprep.subr.mxu0 0.0
  %3260 = vmatpush2.xpose.msra.mxu0 0.0
  %3261 = vmatprep.subr.mxu0 0.0
  %3262 = vmatpush2.xpose.msra.mxu0 0.0
  %3263 = vmatprep.subr.mxu0 0.0
  %3264 = vmatpush2.xpose.msra.mxu0 0.0
  %3265 = vmatprep.subr.mxu0 0.0
  %3266 = vmatpush2.xpose.msra.mxu0 0.0
  %3267 = vmatprep.subr.mxu0 0.0
  %3268 = vmatpush2.xpose.msra.mxu0 0.0
  %3269 = vmatprep.subr.mxu0 0.0
  %3270 = vmatpush2.xpose.msra.mxu0 0.0
  %3271 = vmatprep.subr.mxu0 0.0
  %3272 = vmatpush2.xpose.msra.mxu0 0.0
  %3273 = vmatprep.subr.mxu0 0.0
  %3274 = vmatpush2.xpose.msra.mxu0 0.0
  %3275 = vmatprep.subr.mxu0 0.0
  %3276 = vmatpush2.xpose.msra.mxu0 0.0
  %3277 = vmatprep.subr.mxu0 0.0
  %3278 = vmatpush2.xpose.msra.mxu0 0.0
  %3279 = vmatprep.subr.mxu0 0.0
  %3280 = vmatpush2.xpose.msra.mxu0 0.0
  %3281 = vmatprep.subr.mxu0 0.0
  %3282 = vmatpush2.xpose.msra.mxu0 0.0
  %3283 = vmatprep.subr.mxu0 0.0
  %3284 = vmatpush2.xpose.msra.mxu0 0.0
  %3285 = vmatprep.mubr.f32.mxu0 0.0
  %3286 = vmatmul.mubr.f32.gmra.mxu0 %v2773
  %v3287 = vpop.f32.mrf.mxu0
  %v3288 = vadd.f32 0.0, %v3287
  %v3289 = vpop.f32.mrf.mxu0
  %3290 = vdwg.mxu0
  %3291 = vmatprep.subr.mxu0 0.0
  %3292 = vmatpush1.xpose.msra.mxu0 0.0
  %3293 = vmatprep.subr.mxu0 0.0
  %3294 = vmatpush1.xpose.msra.mxu0 0.0
  %3295 = vmatprep.subr.mxu0 0.0
  %3296 = vmatpush1.xpose.msra.mxu0 0.0
  %3297 = vmatprep.subr.mxu0 0.0
  %3298 = vmatpush1.xpose.msra.mxu0 0.0
  %3299 = vmatprep.subr.mxu0 0.0
  %3300 = vmatpush1.xpose.msra.mxu0 0.0
  %3301 = vmatprep.subr.mxu0 0.0
  %3302 = vmatpush1.xpose.msra.mxu0 0.0
  %3303 = vmatprep.subr.mxu0 0.0
  %3304 = vmatpush1.xpose.msra.mxu0 0.0
  %3305 = vmatprep.subr.mxu0 0.0
  %3306 = vmatpush1.xpose.msra.mxu0 0.0
  %3307 = vmatprep.subr.mxu0 0.0
  %3308 = vmatpush1.xpose.msra.mxu0 0.0
  %3309 = vmatprep.subr.mxu0 0.0
  %3310 = vmatpush1.xpose.msra.mxu0 0.0
  %3311 = vmatprep.subr.mxu0 0.0
  %3312 = vmatpush1.xpose.msra.mxu0 0.0
  %3313 = vmatprep.subr.mxu0 0.0
  %3314 = vmatpush1.xpose.msra.mxu0 0.0
  %3315 = vmatprep.subr.mxu0 0.0
  %3316 = vmatpush1.xpose.msra.mxu0 0.0
  %3317 = vmatprep.subr.mxu0 0.0
  %3318 = vmatpush1.xpose.msra.mxu0 0.0
  %3319 = vmatprep.subr.mxu0 0.0
  %3320 = vmatpush1.xpose.msra.mxu0 0.0
  %3321 = vmatprep.subr.mxu0 0.0
  %3322 = vmatpush1.xpose.msra.mxu0 %v2787
  %3323 = vmatprep.subr.mxu0 0.0
  %3324 = vmatpush2.xpose.msra.mxu0 0.0
  %3325 = vmatprep.subr.mxu0 0.0
  %3326 = vmatpush2.xpose.msra.mxu0 0.0
  %3327 = vmatprep.subr.mxu0 0.0
  %3328 = vmatpush2.xpose.msra.mxu0 0.0
  %3329 = vmatprep.subr.mxu0 0.0
  %3330 = vmatpush2.xpose.msra.mxu0 0.0
  %3331 = vmatprep.subr.mxu0 0.0
  %3332 = vmatpush2.xpose.msra.mxu0 0.0
  %3333 = vmatprep.subr.mxu0 0.0
  %3334 = vmatpush2.xpose.msra.mxu0 0.0
  %3335 = vmatprep.subr.mxu0 0.0
  %3336 = vmatpush2.xpose.msra.mxu0 0.0
  %3337 = vmatprep.subr.mxu0 0.0
  %3338 = vmatpush2.xpose.msra.mxu0 0.0
  %3339 = vmatprep.subr.mxu0 0.0
  %3340 = vmatpush2.xpose.msra.mxu0 0.0
  %3341 = vmatprep.subr.mxu0 0.0
  %3342 = vmatpush2.xpose.msra.mxu0 0.0
  %3343 = vmatprep.subr.mxu0 0.0
  %3344 = vmatpush2.xpose.msra.mxu0 0.0
  %3345 = vmatprep.subr.mxu0 0.0
  %3346 = vmatpush2.xpose.msra.mxu0 0.0
  %3347 = vmatprep.subr.mxu0 0.0
  %3348 = vmatpush2.xpose.msra.mxu0 0.0
  %3349 = vmatprep.subr.mxu0 0.0
  %3350 = vmatpush2.xpose.msra.mxu0 0.0
  %3351 = vmatprep.subr.mxu0 0.0
  %3352 = vmatpush2.xpose.msra.mxu0 0.0
  %3353 = vmatprep.subr.mxu0 0.0
  %3354 = vmatpush2.xpose.msra.mxu0 0.0
  %3355 = vmatprep.mubr.f32.mxu0 0.0
  %3356 = vmatmul.mubr.f32.gmra.mxu0 %v2774
  %v3357 = vpop.f32.mrf.mxu0
  %v3358 = vadd.f32 0.0, %v3357
  %v3359 = vpop.f32.mrf.mxu0
  %3360 = vdwg.mxu0
  %v3361 = vmul.f32 %v2868, 0.17677669
  %v3362 = vmul.f32 %v2938, 0.17677669
  %v3363 = vmul.f32 %v3008, 0.17677669
  %v3364 = vmul.f32 %v3078, 0.17677669
  %v3365 = vmul.f32 %v3148, 0.17677669
  %v3366 = vmul.f32 %v3218, 0.17677669
  %v3367 = vmul.f32 %v3288, 0.17677669
  %v3368 = vmul.f32 %v3358, 0.17677669
  %v3369 = vld [vmem:[%s2761 + $0x10] sm:$0xff]
  %v3371 = vcombine.high %v3369, %v3369
  %v3373 = vunpack.c.l.s4 1966171168
  %v3374 = vunpack.c.0.s8 %v3373
  %v3375 = vlaneseq
  %v3376 = vshrl.u32 %v3375, 7
  %v3377 = vsub.s32 %v3374, %v3376
  %v3378 = vrot.slane %v3369, %v3377
  %v3380 = vunpack.c.l.s4 1966171168
  %v3381 = vunpack.c.0.s8 %v3380
  %v3382 = vlaneseq
  %v3383 = vshrl.u32 %v3382, 7
  %v3384 = vsub.s32 %v3381, %v3383
  %v3385 = vrot.slane %v3371, %v3384
  %v3386 = vcombine.high %v3378, %v3378
  %v3387 = vcombine.high %v3385, %v3385
  %v3389 = vunpack.c.l.s4 1966171168
  %v3390 = vunpack.c.0.s8 %v3389
  %v3391 = vlaneseq
  %v3392 = vshrl.u32 %v3391, 7
  %v3393 = vsub.s32 %v3390, %v3392
  %v3394 = vrot.slane %v3378, %v3393
  %v3396 = vunpack.c.l.s4 1966171168
  %v3397 = vunpack.c.0.s8 %v3396
  %v3398 = vlaneseq
  %v3399 = vshrl.u32 %v3398, 7
  %v3400 = vsub.s32 %v3397, %v3399
  %v3401 = vrot.slane %v3385, %v3400
  %v3403 = vunpack.c.l.s4 1966171168
  %v3404 = vunpack.c.0.s8 %v3403
  %v3405 = vlaneseq
  %v3406 = vshrl.u32 %v3405, 7
  %v3407 = vsub.s32 %v3404, %v3406
  %v3408 = vrot.slane %v3386, %v3407
  %v3410 = vunpack.c.l.s4 1966171168
  %v3411 = vunpack.c.0.s8 %v3410
  %v3412 = vlaneseq
  %v3413 = vshrl.u32 %v3412, 7
  %v3414 = vsub.s32 %v3411, %v3413
  %v3415 = vrot.slane %v3387, %v3414
  %v3416 = vcombine.high %v3394, %v3394
  %v3417 = vcombine.high %v3401, %v3401
  %v3418 = vcombine.high %v3408, %v3408
  %v3419 = vcombine.high %v3415, %v3415
  %v3420 = vlaneseq
  %v3421 = vshrl.u32 %v3420, 7
  %v3422 = vsub.s32 0, %v3421
  %v3423 = vrot.slane %v3394, %v3422
  %v3424 = vlaneseq
  %v3425 = vshrl.u32 %v3424, 7
  %v3426 = vsub.s32 0, %v3425
  %v3427 = vrot.slane %v3408, %v3426
  %v3428 = vlaneseq
  %v3429 = vshrl.u32 %v3428, 7
  %v3430 = vsub.s32 0, %v3429
  %v3431 = vrot.slane %v3416, %v3430
  %v3432 = vlaneseq
  %v3433 = vshrl.u32 %v3432, 7
  %v3434 = vsub.s32 0, %v3433
  %v3435 = vrot.slane %v3418, %v3434
  %v3436 = vlaneseq
  %v3437 = vshrl.u32 %v3436, 7
  %v3438 = vsub.s32 0, %v3437
  %v3439 = vrot.slane %v3401, %v3438
  %v3440 = vlaneseq
  %v3441 = vshrl.u32 %v3440, 7
  %v3442 = vsub.s32 0, %v3441
  %v3443 = vrot.slane %v3415, %v3442
  %v3444 = vlaneseq
  %v3445 = vshrl.u32 %v3444, 7
  %v3446 = vsub.s32 0, %v3445
  %v3447 = vrot.slane %v3417, %v3446
  %v3448 = vlaneseq
  %v3449 = vshrl.u32 %v3448, 7
  %v3450 = vsub.s32 0, %v3449
  %v3451 = vrot.slane %v3419, %v3450
  %v3460 = vadd.f32 %v3361, %v3423
  %v3461 = vadd.f32 %v3362, %v3427
  %v3462 = vadd.f32 %v3363, %v3431
  %v3463 = vadd.f32 %v3364, %v3435
  %v3464 = vadd.f32 %v3365, %v3439
  %v3465 = vadd.f32 %v3366, %v3443
  %v3466 = vadd.f32 %v3367, %v3447
  %v3467 = vadd.f32 %v3368, %v3451
  %v3468 = vsel %vm1003, %v3460, -inf
  %3469 = vmax.xlane.f32.xlu0 %v3468
  %v3470 = vpop.xlane.xlu0 %3469
  %v3471 = vsel %vm1003, %v3461, -inf
  %3472 = vmax.xlane.f32.xlu0 %v3471
  %v3473 = vpop.xlane.xlu0 %3472
  %v3474 = vsel %vm1003, %v3462, -inf
  %3475 = vmax.xlane.f32.xlu0 %v3474
  %v3476 = vpop.xlane.xlu0 %3475
  %v3477 = vsel %vm1003, %v3463, -inf
  %3478 = vmax.xlane.f32.xlu0 %v3477
  %v3479 = vpop.xlane.xlu0 %3478
  %v3480 = vsel %vm1003, %v3464, -inf
  %3481 = vmax.xlane.f32.xlu0 %v3480
  %v3482 = vpop.xlane.xlu0 %3481
  %v3483 = vsel %vm1003, %v3465, -inf
  %3484 = vmax.xlane.f32.xlu0 %v3483
  %v3485 = vpop.xlane.xlu0 %3484
  %v3486 = vsel %vm1003, %v3466, -inf
  %3487 = vmax.xlane.f32.xlu0 %v3486
  %v3488 = vpop.xlane.xlu0 %3487
  %v3489 = vsel %vm1003, %v3467, -inf
  %3490 = vmax.xlane.f32.xlu0 %v3489
  %v3491 = vpop.xlane.xlu0 %3490
  %v3492 = vsub.f32 %v3460, %v3470
  %v3493 = vsub.f32 %v3461, %v3473
  %v3494 = vsub.f32 %v3462, %v3476
  %v3495 = vsub.f32 %v3463, %v3479
  %v3496 = vsub.f32 %v3464, %v3482
  %v3497 = vsub.f32 %v3465, %v3485
  %v3498 = vsub.f32 %v3466, %v3488
  %v3499 = vsub.f32 %v3467, %v3491
  %v3500 = vmul.f32 %v3492, 1.442695
  %v3501 = vpow.pop %v3500
  %v3502 = vmul.f32 %v3493, 1.442695
  %v3503 = vpow.pop %v3502
  %v3504 = vmul.f32 %v3494, 1.442695
  %v3505 = vpow.pop %v3504
  %v3506 = vmul.f32 %v3495, 1.442695
  %v3507 = vpow.pop %v3506
  %v3508 = vmul.f32 %v3496, 1.442695
  %v3509 = vpow.pop %v3508
  %v3510 = vmul.f32 %v3497, 1.442695
  %v3511 = vpow.pop %v3510
  %v3512 = vmul.f32 %v3498, 1.442695
  %v3513 = vpow.pop %v3512
  %v3514 = vmul.f32 %v3499, 1.442695
  %v3515 = vpow.pop %v3514
  %v3516 = vsel %vm1003, %v3501, 0.0
  %3517 = vadd.xlane.f32.xlu0 %v3516
  %v3518 = vpop.xlane.xlu0 %3517
  %v3519 = vsel %vm1003, %v3503, 0.0
  %3520 = vadd.xlane.f32.xlu0 %v3519
  %v3521 = vpop.xlane.xlu0 %3520
  %v3522 = vsel %vm1003, %v3505, 0.0
  %3523 = vadd.xlane.f32.xlu0 %v3522
  %v3524 = vpop.xlane.xlu0 %3523
  %v3525 = vsel %vm1003, %v3507, 0.0
  %3526 = vadd.xlane.f32.xlu0 %v3525
  %v3527 = vpop.xlane.xlu0 %3526
  %v3528 = vsel %vm1003, %v3509, 0.0
  %3529 = vadd.xlane.f32.xlu0 %v3528
  %v3530 = vpop.xlane.xlu0 %3529
  %v3531 = vsel %vm1003, %v3511, 0.0
  %3532 = vadd.xlane.f32.xlu0 %v3531
  %v3533 = vpop.xlane.xlu0 %3532
  %v3534 = vsel %vm1003, %v3513, 0.0
  %3535 = vadd.xlane.f32.xlu0 %v3534
  %v3536 = vpop.xlane.xlu0 %3535
  %v3537 = vsel %vm1003, %v3515, 0.0
  %3538 = vadd.xlane.f32.xlu0 %v3537
  %v3539 = vpop.xlane.xlu0 %3538
  %v3540 = vrcp.pop %v3518
  %v3541 = vmul.f32 %v3501, %v3540
  %v3542 = vrcp.pop %v3521
  %v3543 = vmul.f32 %v3503, %v3542
  %v3544 = vrcp.pop %v3524
  %v3545 = vmul.f32 %v3505, %v3544
  %v3546 = vrcp.pop %v3527
  %v3547 = vmul.f32 %v3507, %v3546
  %v3548 = vrcp.pop %v3530
  %v3549 = vmul.f32 %v3509, %v3548
  %v3550 = vrcp.pop %v3533
  %v3551 = vmul.f32 %v3511, %v3550
  %v3552 = vrcp.pop %v3536
  %v3553 = vmul.f32 %v3513, %v3552
  %v3554 = vrcp.pop %v3539
  %v3555 = vmul.f32 %v3515, %v3554
  %v3557 = vsel %vm1003, %v3541, 0
  %3559 = vmatprep.subr.mxu0 0.0
  %3560 = vmatpush1.msra.mxu0 0.0
  %3561 = vmatprep.subr.mxu0 0.0
  %3562 = vmatpush1.msra.mxu0 0.0
  %3563 = vmatprep.subr.mxu0 0.0
  %3564 = vmatpush1.msra.mxu0 0.0
  %3565 = vmatprep.subr.mxu0 0.0
  %3566 = vmatpush1.msra.mxu0 0.0
  %3567 = vmatprep.subr.mxu0 0.0
  %3568 = vmatpush1.msra.mxu0 0.0
  %3569 = vmatprep.subr.mxu0 0.0
  %3570 = vmatpush1.msra.mxu0 0.0
  %3571 = vmatprep.subr.mxu0 0.0
  %3572 = vmatpush1.msra.mxu0 0.0
  %3573 = vmatprep.subr.mxu0 0.0
  %3574 = vmatpush1.msra.mxu0 0.0
  %3575 = vmatprep.subr.mxu0 0.0
  %3576 = vmatpush1.msra.mxu0 0.0
  %3577 = vmatprep.subr.mxu0 0.0
  %3578 = vmatpush1.msra.mxu0 0.0
  %3579 = vmatprep.subr.mxu0 0.0
  %3580 = vmatpush1.msra.mxu0 0.0
  %3581 = vmatprep.subr.mxu0 0.0
  %3582 = vmatpush1.msra.mxu0 0.0
  %3583 = vmatprep.subr.mxu0 0.0
  %3584 = vmatpush1.msra.mxu0 0.0
  %3585 = vmatprep.subr.mxu0 0.0
  %3586 = vmatpush1.msra.mxu0 0.0
  %3587 = vmatprep.subr.mxu0 0.0
  %3588 = vmatpush1.msra.mxu0 0.0
  %3589 = vmatprep.subr.mxu0 0.0
  %3590 = vmatpush1.msra.mxu0 %v2793
  %3591 = vmatprep.subr.mxu0 0.0
  %3592 = vmatpush2.msra.mxu0 0.0
  %3593 = vmatprep.subr.mxu0 0.0
  %3594 = vmatpush2.msra.mxu0 0.0
  %3595 = vmatprep.subr.mxu0 0.0
  %3596 = vmatpush2.msra.mxu0 0.0
  %3597 = vmatprep.subr.mxu0 0.0
  %3598 = vmatpush2.msra.mxu0 0.0
  %3599 = vmatprep.subr.mxu0 0.0
  %3600 = vmatpush2.msra.mxu0 0.0
  %3601 = vmatprep.subr.mxu0 0.0
  %3602 = vmatpush2.msra.mxu0 0.0
  %3603 = vmatprep.subr.mxu0 0.0
  %3604 = vmatpush2.msra.mxu0 0.0
  %3605 = vmatprep.subr.mxu0 0.0
  %3606 = vmatpush2.msra.mxu0 0.0
  %3607 = vmatprep.subr.mxu0 0.0
  %3608 = vmatpush2.msra.mxu0 0.0
  %3609 = vmatprep.subr.mxu0 0.0
  %3610 = vmatpush2.msra.mxu0 0.0
  %3611 = vmatprep.subr.mxu0 0.0
  %3612 = vmatpush2.msra.mxu0 0.0
  %3613 = vmatprep.subr.mxu0 0.0
  %3614 = vmatpush2.msra.mxu0 0.0
  %3615 = vmatprep.subr.mxu0 0.0
  %3616 = vmatpush2.msra.mxu0 0.0
  %3617 = vmatprep.subr.mxu0 0.0
  %3618 = vmatpush2.msra.mxu0 0.0
  %3619 = vmatprep.subr.mxu0 0.0
  %3620 = vmatpush2.msra.mxu0 0.0
  %3621 = vmatprep.subr.mxu0 0.0
  %3622 = vmatpush2.msra.mxu0 0.0
  %3623 = vmatprep.mubr.f32.mxu0 0.0
  %3624 = vmatmul.mubr.f32.gmra.mxu0 %v3557
  %v3625 = vpop.f32.mrf.mxu0
  %v3626 = vadd.f32 0.0, %v3625
  %v3627 = vpop.f32.mrf.mxu0
  %3628 = vdwg.mxu0
  %v3630 = vsel %vm1003, %v3543, 0
  %3632 = vmatprep.subr.mxu0 0.0
  %3633 = vmatpush1.msra.mxu0 0.0
  %3634 = vmatprep.subr.mxu0 0.0
  %3635 = vmatpush1.msra.mxu0 0.0
  %3636 = vmatprep.subr.mxu0 0.0
  %3637 = vmatpush1.msra.mxu0 0.0
  %3638 = vmatprep.subr.mxu0 0.0
  %3639 = vmatpush1.msra.mxu0 0.0
  %3640 = vmatprep.subr.mxu0 0.0
  %3641 = vmatpush1.msra.mxu0 0.0
  %3642 = vmatprep.subr.mxu0 0.0
  %3643 = vmatpush1.msra.mxu0 0.0
  %3644 = vmatprep.subr.mxu0 0.0
  %3645 = vmatpush1.msra.mxu0 0.0
  %3646 = vmatprep.subr.mxu0 0.0
  %3647 = vmatpush1.msra.mxu0 0.0
  %3648 = vmatprep.subr.mxu0 0.0
  %3649 = vmatpush1.msra.mxu0 0.0
  %3650 = vmatprep.subr.mxu0 0.0
  %3651 = vmatpush1.msra.mxu0 0.0
  %3652 = vmatprep.subr.mxu0 0.0
  %3653 = vmatpush1.msra.mxu0 0.0
  %3654 = vmatprep.subr.mxu0 0.0
  %3655 = vmatpush1.msra.mxu0 0.0
  %3656 = vmatprep.subr.mxu0 0.0
  %3657 = vmatpush1.msra.mxu0 0.0
  %3658 = vmatprep.subr.mxu0 0.0
  %3659 = vmatpush1.msra.mxu0 0.0
  %3660 = vmatprep.subr.mxu0 0.0
  %3661 = vmatpush1.msra.mxu0 0.0
  %3662 = vmatprep.subr.mxu0 0.0
  %3663 = vmatpush1.msra.mxu0 %v2794
  %3664 = vmatprep.subr.mxu0 0.0
  %3665 = vmatpush2.msra.mxu0 0.0
  %3666 = vmatprep.subr.mxu0 0.0
  %3667 = vmatpush2.msra.mxu0 0.0
  %3668 = vmatprep.subr.mxu0 0.0
  %3669 = vmatpush2.msra.mxu0 0.0
  %3670 = vmatprep.subr.mxu0 0.0
  %3671 = vmatpush2.msra.mxu0 0.0
  %3672 = vmatprep.subr.mxu0 0.0
  %3673 = vmatpush2.msra.mxu0 0.0
  %3674 = vmatprep.subr.mxu0 0.0
  %3675 = vmatpush2.msra.mxu0 0.0
  %3676 = vmatprep.subr.mxu0 0.0
  %3677 = vmatpush2.msra.mxu0 0.0
  %3678 = vmatprep.subr.mxu0 0.0
  %3679 = vmatpush2.msra.mxu0 0.0
  %3680 = vmatprep.subr.mxu0 0.0
  %3681 = vmatpush2.msra.mxu0 0.0
  %3682 = vmatprep.subr.mxu0 0.0
  %3683 = vmatpush2.msra.mxu0 0.0
  %3684 = vmatprep.subr.mxu0 0.0
  %3685 = vmatpush2.msra.mxu0 0.0
  %3686 = vmatprep.subr.mxu0 0.0
  %3687 = vmatpush2.msra.mxu0 0.0
  %3688 = vmatprep.subr.mxu0 0.0
  %3689 = vmatpush2.msra.mxu0 0.0
  %3690 = vmatprep.subr.mxu0 0.0
  %3691 = vmatpush2.msra.mxu0 0.0
  %3692 = vmatprep.subr.mxu0 0.0
  %3693 = vmatpush2.msra.mxu0 0.0
  %3694 = vmatprep.subr.mxu0 0.0
  %3695 = vmatpush2.msra.mxu0 0.0
  %3696 = vmatprep.mubr.f32.mxu0 0.0
  %3697 = vmatmul.mubr.f32.gmra.mxu0 %v3630
  %v3698 = vpop.f32.mrf.mxu0
  %v3699 = vadd.f32 0.0, %v3698
  %v3700 = vpop.f32.mrf.mxu0
  %3701 = vdwg.mxu0
  %v3703 = vsel %vm1003, %v3545, 0
  %3705 = vmatprep.subr.mxu0 0.0
  %3706 = vmatpush1.msra.mxu0 0.0
  %3707 = vmatprep.subr.mxu0 0.0
  %3708 = vmatpush1.msra.mxu0 0.0
  %3709 = vmatprep.subr.mxu0 0.0
  %3710 = vmatpush1.msra.mxu0 0.0
  %3711 = vmatprep.subr.mxu0 0.0
  %3712 = vmatpush1.msra.mxu0 0.0
  %3713 = vmatprep.subr.mxu0 0.0
  %3714 = vmatpush1.msra.mxu0 0.0
  %3715 = vmatprep.subr.mxu0 0.0
  %3716 = vmatpush1.msra.mxu0 0.0
  %3717 = vmatprep.subr.mxu0 0.0
  %3718 = vmatpush1.msra.mxu0 0.0
  %3719 = vmatprep.subr.mxu0 0.0
  %3720 = vmatpush1.msra.mxu0 0.0
  %3721 = vmatprep.subr.mxu0 0.0
  %3722 = vmatpush1.msra.mxu0 0.0
  %3723 = vmatprep.subr.mxu0 0.0
  %3724 = vmatpush1.msra.mxu0 0.0
  %3725 = vmatprep.subr.mxu0 0.0
  %3726 = vmatpush1.msra.mxu0 0.0
  %3727 = vmatprep.subr.mxu0 0.0
  %3728 = vmatpush1.msra.mxu0 0.0
  %3729 = vmatprep.subr.mxu0 0.0
  %3730 = vmatpush1.msra.mxu0 0.0
  %3731 = vmatprep.subr.mxu0 0.0
  %3732 = vmatpush1.msra.mxu0 0.0
  %3733 = vmatprep.subr.mxu0 0.0
  %3734 = vmatpush1.msra.mxu0 0.0
  %3735 = vmatprep.subr.mxu0 0.0
  %3736 = vmatpush1.msra.mxu0 %v2795
  %3737 = vmatprep.subr.mxu0 0.0
  %3738 = vmatpush2.msra.mxu0 0.0
  %3739 = vmatprep.subr.mxu0 0.0
  %3740 = vmatpush2.msra.mxu0 0.0
  %3741 = vmatprep.subr.mxu0 0.0
  %3742 = vmatpush2.msra.mxu0 0.0
  %3743 = vmatprep.subr.mxu0 0.0
  %3744 = vmatpush2.msra.mxu0 0.0
  %3745 = vmatprep.subr.mxu0 0.0
  %3746 = vmatpush2.msra.mxu0 0.0
  %3747 = vmatprep.subr.mxu0 0.0
  %3748 = vmatpush2.msra.mxu0 0.0
  %3749 = vmatprep.subr.mxu0 0.0
  %3750 = vmatpush2.msra.mxu0 0.0
  %3751 = vmatprep.subr.mxu0 0.0
  %3752 = vmatpush2.msra.mxu0 0.0
  %3753 = vmatprep.subr.mxu0 0.0
  %3754 = vmatpush2.msra.mxu0 0.0
  %3755 = vmatprep.subr.mxu0 0.0
  %3756 = vmatpush2.msra.mxu0 0.0
  %3757 = vmatprep.subr.mxu0 0.0
  %3758 = vmatpush2.msra.mxu0 0.0
  %3759 = vmatprep.subr.mxu0 0.0
  %3760 = vmatpush2.msra.mxu0 0.0
  %3761 = vmatprep.subr.mxu0 0.0
  %3762 = vmatpush2.msra.mxu0 0.0
  %3763 = vmatprep.subr.mxu0 0.0
  %3764 = vmatpush2.msra.mxu0 0.0
  %3765 = vmatprep.subr.mxu0 0.0
  %3766 = vmatpush2.msra.mxu0 0.0
  %3767 = vmatprep.subr.mxu0 0.0
  %3768 = vmatpush2.msra.mxu0 0.0
  %3769 = vmatprep.mubr.f32.mxu0 0.0
  %3770 = vmatmul.mubr.f32.gmra.mxu0 %v3703
  %v3771 = vpop.f32.mrf.mxu0
  %v3772 = vadd.f32 0.0, %v3771
  %v3773 = vpop.f32.mrf.mxu0
  %3774 = vdwg.mxu0
  %v3776 = vsel %vm1003, %v3547, 0
  %3778 = vmatprep.subr.mxu0 0.0
  %3779 = vmatpush1.msra.mxu0 0.0
  %3780 = vmatprep.subr.mxu0 0.0
  %3781 = vmatpush1.msra.mxu0 0.0
  %3782 = vmatprep.subr.mxu0 0.0
  %3783 = vmatpush1.msra.mxu0 0.0
  %3784 = vmatprep.subr.mxu0 0.0
  %3785 = vmatpush1.msra.mxu0 0.0
  %3786 = vmatprep.subr.mxu0 0.0
  %3787 = vmatpush1.msra.mxu0 0.0
  %3788 = vmatprep.subr.mxu0 0.0
  %3789 = vmatpush1.msra.mxu0 0.0
  %3790 = vmatprep.subr.mxu0 0.0
  %3791 = vmatpush1.msra.mxu0 0.0
  %3792 = vmatprep.subr.mxu0 0.0
  %3793 = vmatpush1.msra.mxu0 0.0
  %3794 = vmatprep.subr.mxu0 0.0
  %3795 = vmatpush1.msra.mxu0 0.0
  %3796 = vmatprep.subr.mxu0 0.0
  %3797 = vmatpush1.msra.mxu0 0.0
  %3798 = vmatprep.subr.mxu0 0.0
  %3799 = vmatpush1.msra.mxu0 0.0
  %3800 = vmatprep.subr.mxu0 0.0
  %3801 = vmatpush1.msra.mxu0 0.0
  %3802 = vmatprep.subr.mxu0 0.0
  %3803 = vmatpush1.msra.mxu0 0.0
  %3804 = vmatprep.subr.mxu0 0.0
  %3805 = vmatpush1.msra.mxu0 0.0
  %3806 = vmatprep.subr.mxu0 0.0
  %3807 = vmatpush1.msra.mxu0 0.0
  %3808 = vmatprep.subr.mxu0 0.0
  %3809 = vmatpush1.msra.mxu0 %v2796
  %3810 = vmatprep.subr.mxu0 0.0
  %3811 = vmatpush2.msra.mxu0 0.0
  %3812 = vmatprep.subr.mxu0 0.0
  %3813 = vmatpush2.msra.mxu0 0.0
  %3814 = vmatprep.subr.mxu0 0.0
  %3815 = vmatpush2.msra.mxu0 0.0
  %3816 = vmatprep.subr.mxu0 0.0
  %3817 = vmatpush2.msra.mxu0 0.0
  %3818 = vmatprep.subr.mxu0 0.0
  %3819 = vmatpush2.msra.mxu0 0.0
  %3820 = vmatprep.subr.mxu0 0.0
  %3821 = vmatpush2.msra.mxu0 0.0
  %3822 = vmatprep.subr.mxu0 0.0
  %3823 = vmatpush2.msra.mxu0 0.0
  %3824 = vmatprep.subr.mxu0 0.0
  %3825 = vmatpush2.msra.mxu0 0.0
  %3826 = vmatprep.subr.mxu0 0.0
  %3827 = vmatpush2.msra.mxu0 0.0
  %3828 = vmatprep.subr.mxu0 0.0
  %3829 = vmatpush2.msra.mxu0 0.0
  %3830 = vmatprep.subr.mxu0 0.0
  %3831 = vmatpush2.msra.mxu0 0.0
  %3832 = vmatprep.subr.mxu0 0.0
  %3833 = vmatpush2.msra.mxu0 0.0
  %3834 = vmatprep.subr.mxu0 0.0
  %3835 = vmatpush2.msra.mxu0 0.0
  %3836 = vmatprep.subr.mxu0 0.0
  %3837 = vmatpush2.msra.mxu0 0.0
  %3838 = vmatprep.subr.mxu0 0.0
  %3839 = vmatpush2.msra.mxu0 0.0
  %3840 = vmatprep.subr.mxu0 0.0
  %3841 = vmatpush2.msra.mxu0 0.0
  %3842 = vmatprep.mubr.f32.mxu0 0.0
  %3843 = vmatmul.mubr.f32.gmra.mxu0 %v3776
  %v3844 = vpop.f32.mrf.mxu0
  %v3845 = vadd.f32 0.0, %v3844
  %v3846 = vpop.f32.mrf.mxu0
  %3847 = vdwg.mxu0
  %v3849 = vsel %vm1003, %v3549, 0
  %3851 = vmatprep.subr.mxu0 0.0
  %3852 = vmatpush1.msra.mxu0 0.0
  %3853 = vmatprep.subr.mxu0 0.0
  %3854 = vmatpush1.msra.mxu0 0.0
  %3855 = vmatprep.subr.mxu0 0.0
  %3856 = vmatpush1.msra.mxu0 0.0
  %3857 = vmatprep.subr.mxu0 0.0
  %3858 = vmatpush1.msra.mxu0 0.0
  %3859 = vmatprep.subr.mxu0 0.0
  %3860 = vmatpush1.msra.mxu0 0.0
  %3861 = vmatprep.subr.mxu0 0.0
  %3862 = vmatpush1.msra.mxu0 0.0
  %3863 = vmatprep.subr.mxu0 0.0
  %3864 = vmatpush1.msra.mxu0 0.0
  %3865 = vmatprep.subr.mxu0 0.0
  %3866 = vmatpush1.msra.mxu0 0.0
  %3867 = vmatprep.subr.mxu0 0.0
  %3868 = vmatpush1.msra.mxu0 0.0
  %3869 = vmatprep.subr.mxu0 0.0
  %3870 = vmatpush1.msra.mxu0 0.0
  %3871 = vmatprep.subr.mxu0 0.0
  %3872 = vmatpush1.msra.mxu0 0.0
  %3873 = vmatprep.subr.mxu0 0.0
  %3874 = vmatpush1.msra.mxu0 0.0
  %3875 = vmatprep.subr.mxu0 0.0
  %3876 = vmatpush1.msra.mxu0 0.0
  %3877 = vmatprep.subr.mxu0 0.0
  %3878 = vmatpush1.msra.mxu0 0.0
  %3879 = vmatprep.subr.mxu0 0.0
  %3880 = vmatpush1.msra.mxu0 0.0
  %3881 = vmatprep.subr.mxu0 0.0
  %3882 = vmatpush1.msra.mxu0 %v2797
  %3883 = vmatprep.subr.mxu0 0.0
  %3884 = vmatpush2.msra.mxu0 0.0
  %3885 = vmatprep.subr.mxu0 0.0
  %3886 = vmatpush2.msra.mxu0 0.0
  %3887 = vmatprep.subr.mxu0 0.0
  %3888 = vmatpush2.msra.mxu0 0.0
  %3889 = vmatprep.subr.mxu0 0.0
  %3890 = vmatpush2.msra.mxu0 0.0
  %3891 = vmatprep.subr.mxu0 0.0
  %3892 = vmatpush2.msra.mxu0 0.0
  %3893 = vmatprep.subr.mxu0 0.0
  %3894 = vmatpush2.msra.mxu0 0.0
  %3895 = vmatprep.subr.mxu0 0.0
  %3896 = vmatpush2.msra.mxu0 0.0
  %3897 = vmatprep.subr.mxu0 0.0
  %3898 = vmatpush2.msra.mxu0 0.0
  %3899 = vmatprep.subr.mxu0 0.0
  %3900 = vmatpush2.msra.mxu0 0.0
  %3901 = vmatprep.subr.mxu0 0.0
  %3902 = vmatpush2.msra.mxu0 0.0
  %3903 = vmatprep.subr.mxu0 0.0
  %3904 = vmatpush2.msra.mxu0 0.0
  %3905 = vmatprep.subr.mxu0 0.0
  %3906 = vmatpush2.msra.mxu0 0.0
  %3907 = vmatprep.subr.mxu0 0.0
  %3908 = vmatpush2.msra.mxu0 0.0
  %3909 = vmatprep.subr.mxu0 0.0
  %3910 = vmatpush2.msra.mxu0 0.0
  %3911 = vmatprep.subr.mxu0 0.0
  %3912 = vmatpush2.msra.mxu0 0.0
  %3913 = vmatprep.subr.mxu0 0.0
  %3914 = vmatpush2.msra.mxu0 0.0
  %3915 = vmatprep.mubr.f32.mxu0 0.0
  %3916 = vmatmul.mubr.f32.gmra.mxu0 %v3849
  %v3917 = vpop.f32.mrf.mxu0
  %v3918 = vadd.f32 0.0, %v3917
  %v3919 = vpop.f32.mrf.mxu0
  %3920 = vdwg.mxu0
  %v3922 = vsel %vm1003, %v3551, 0
  %3924 = vmatprep.subr.mxu0 0.0
  %3925 = vmatpush1.msra.mxu0 0.0
  %3926 = vmatprep.subr.mxu0 0.0
  %3927 = vmatpush1.msra.mxu0 0.0
  %3928 = vmatprep.subr.mxu0 0.0
  %3929 = vmatpush1.msra.mxu0 0.0
  %3930 = vmatprep.subr.mxu0 0.0
  %3931 = vmatpush1.msra.mxu0 0.0
  %3932 = vmatprep.subr.mxu0 0.0
  %3933 = vmatpush1.msra.mxu0 0.0
  %3934 = vmatprep.subr.mxu0 0.0
  %3935 = vmatpush1.msra.mxu0 0.0
  %3936 = vmatprep.subr.mxu0 0.0
  %3937 = vmatpush1.msra.mxu0 0.0
  %3938 = vmatprep.subr.mxu0 0.0
  %3939 = vmatpush1.msra.mxu0 0.0
  %3940 = vmatprep.subr.mxu0 0.0
  %3941 = vmatpush1.msra.mxu0 0.0
  %3942 = vmatprep.subr.mxu0 0.0
  %3943 = vmatpush1.msra.mxu0 0.0
  %3944 = vmatprep.subr.mxu0 0.0
  %3945 = vmatpush1.msra.mxu0 0.0
  %3946 = vmatprep.subr.mxu0 0.0
  %3947 = vmatpush1.msra.mxu0 0.0
  %3948 = vmatprep.subr.mxu0 0.0
  %3949 = vmatpush1.msra.mxu0 0.0
  %3950 = vmatprep.subr.mxu0 0.0
  %3951 = vmatpush1.msra.mxu0 0.0
  %3952 = vmatprep.subr.mxu0 0.0
  %3953 = vmatpush1.msra.mxu0 0.0
  %3954 = vmatprep.subr.mxu0 0.0
  %3955 = vmatpush1.msra.mxu0 %v2798
  %3956 = vmatprep.subr.mxu0 0.0
  %3957 = vmatpush2.msra.mxu0 0.0
  %3958 = vmatprep.subr.mxu0 0.0
  %3959 = vmatpush2.msra.mxu0 0.0
  %3960 = vmatprep.subr.mxu0 0.0
  %3961 = vmatpush2.msra.mxu0 0.0
  %3962 = vmatprep.subr.mxu0 0.0
  %3963 = vmatpush2.msra.mxu0 0.0
  %3964 = vmatprep.subr.mxu0 0.0
  %3965 = vmatpush2.msra.mxu0 0.0
  %3966 = vmatprep.subr.mxu0 0.0
  %3967 = vmatpush2.msra.mxu0 0.0
  %3968 = vmatprep.subr.mxu0 0.0
  %3969 = vmatpush2.msra.mxu0 0.0
  %3970 = vmatprep.subr.mxu0 0.0
  %3971 = vmatpush2.msra.mxu0 0.0
  %3972 = vmatprep.subr.mxu0 0.0
  %3973 = vmatpush2.msra.mxu0 0.0
  %3974 = vmatprep.subr.mxu0 0.0
  %3975 = vmatpush2.msra.mxu0 0.0
  %3976 = vmatprep.subr.mxu0 0.0
  %3977 = vmatpush2.msra.mxu0 0.0
  %3978 = vmatprep.subr.mxu0 0.0
  %3979 = vmatpush2.msra.mxu0 0.0
  %3980 = vmatprep.subr.mxu0 0.0
  %3981 = vmatpush2.msra.mxu0 0.0
  %3982 = vmatprep.subr.mxu0 0.0
  %3983 = vmatpush2.msra.mxu0 0.0
  %3984 = vmatprep.subr.mxu0 0.0
  %3985 = vmatpush2.msra.mxu0 0.0
  %3986 = vmatprep.subr.mxu0 0.0
  %3987 = vmatpush2.msra.mxu0 0.0
  %3988 = vmatprep.mubr.f32.mxu0 0.0
  %3989 = vmatmul.mubr.f32.gmra.mxu0 %v3922
  %v3990 = vpop.f32.mrf.mxu0
  %v3991 = vadd.f32 0.0, %v3990
  %v3992 = vpop.f32.mrf.mxu0
  %3993 = vdwg.mxu0
  %v3995 = vsel %vm1003, %v3553, 0
  %3997 = vmatprep.subr.mxu0 0.0
  %3998 = vmatpush1.msra.mxu0 0.0
  %3999 = vmatprep.subr.mxu0 0.0
  %4000 = vmatpush1.msra.mxu0 0.0
  %4001 = vmatprep.subr.mxu0 0.0
  %4002 = vmatpush1.msra.mxu0 0.0
  %4003 = vmatprep.subr.mxu0 0.0
  %4004 = vmatpush1.msra.mxu0 0.0
  %4005 = vmatprep.subr.mxu0 0.0
  %4006 = vmatpush1.msra.mxu0 0.0
  %4007 = vmatprep.subr.mxu0 0.0
  %4008 = vmatpush1.msra.mxu0 0.0
  %4009 = vmatprep.subr.mxu0 0.0
  %4010 = vmatpush1.msra.mxu0 0.0
  %4011 = vmatprep.subr.mxu0 0.0
  %4012 = vmatpush1.msra.mxu0 0.0
  %4013 = vmatprep.subr.mxu0 0.0
  %4014 = vmatpush1.msra.mxu0 0.0
  %4015 = vmatprep.subr.mxu0 0.0
  %4016 = vmatpush1.msra.mxu0 0.0
  %4017 = vmatprep.subr.mxu0 0.0
  %4018 = vmatpush1.msra.mxu0 0.0
  %4019 = vmatprep.subr.mxu0 0.0
  %4020 = vmatpush1.msra.mxu0 0.0
  %4021 = vmatprep.subr.mxu0 0.0
  %4022 = vmatpush1.msra.mxu0 0.0
  %4023 = vmatprep.subr.mxu0 0.0
  %4024 = vmatpush1.msra.mxu0 0.0
  %4025 = vmatprep.subr.mxu0 0.0
  %4026 = vmatpush1.msra.mxu0 0.0
  %4027 = vmatprep.subr.mxu0 0.0
  %4028 = vmatpush1.msra.mxu0 %v2799
  %4029 = vmatprep.subr.mxu0 0.0
  %4030 = vmatpush2.msra.mxu0 0.0
  %4031 = vmatprep.subr.mxu0 0.0
  %4032 = vmatpush2.msra.mxu0 0.0
  %4033 = vmatprep.subr.mxu0 0.0
  %4034 = vmatpush2.msra.mxu0 0.0
  %4035 = vmatprep.subr.mxu0 0.0
  %4036 = vmatpush2.msra.mxu0 0.0
  %4037 = vmatprep.subr.mxu0 0.0
  %4038 = vmatpush2.msra.mxu0 0.0
  %4039 = vmatprep.subr.mxu0 0.0
  %4040 = vmatpush2.msra.mxu0 0.0
  %4041 = vmatprep.subr.mxu0 0.0
  %4042 = vmatpush2.msra.mxu0 0.0
  %4043 = vmatprep.subr.mxu0 0.0
  %4044 = vmatpush2.msra.mxu0 0.0
  %4045 = vmatprep.subr.mxu0 0.0
  %4046 = vmatpush2.msra.mxu0 0.0
  %4047 = vmatprep.subr.mxu0 0.0
  %4048 = vmatpush2.msra.mxu0 0.0
  %4049 = vmatprep.subr.mxu0 0.0
  %4050 = vmatpush2.msra.mxu0 0.0
  %4051 = vmatprep.subr.mxu0 0.0
  %4052 = vmatpush2.msra.mxu0 0.0
  %4053 = vmatprep.subr.mxu0 0.0
  %4054 = vmatpush2.msra.mxu0 0.0
  %4055 = vmatprep.subr.mxu0 0.0
  %4056 = vmatpush2.msra.mxu0 0.0
  %4057 = vmatprep.subr.mxu0 0.0
  %4058 = vmatpush2.msra.mxu0 0.0
  %4059 = vmatprep.subr.mxu0 0.0
  %4060 = vmatpush2.msra.mxu0 0.0
  %4061 = vmatprep.mubr.f32.mxu0 0.0
  %4062 = vmatmul.mubr.f32.gmra.mxu0 %v3995
  %v4063 = vpop.f32.mrf.mxu0
  %v4064 = vadd.f32 0.0, %v4063
  %v4065 = vpop.f32.mrf.mxu0
  %4066 = vdwg.mxu0
  %v4068 = vsel %vm1003, %v3555, 0
  %4070 = vmatprep.subr.mxu0 0.0
  %4071 = vmatpush1.msra.mxu0 0.0
  %4072 = vmatprep.subr.mxu0 0.0
  %4073 = vmatpush1.msra.mxu0 0.0
  %4074 = vmatprep.subr.mxu0 0.0
  %4075 = vmatpush1.msra.mxu0 0.0
  %4076 = vmatprep.subr.mxu0 0.0
  %4077 = vmatpush1.msra.mxu0 0.0
  %4078 = vmatprep.subr.mxu0 0.0
  %4079 = vmatpush1.msra.mxu0 0.0
  %4080 = vmatprep.subr.mxu0 0.0
  %4081 = vmatpush1.msra.mxu0 0.0
  %4082 = vmatprep.subr.mxu0 0.0
  %4083 = vmatpush1.msra.mxu0 0.0
  %4084 = vmatprep.subr.mxu0 0.0
  %4085 = vmatpush1.msra.mxu0 0.0
  %4086 = vmatprep.subr.mxu0 0.0
  %4087 = vmatpush1.msra.mxu0 0.0
  %4088 = vmatprep.subr.mxu0 0.0
  %4089 = vmatpush1.msra.mxu0 0.0
  %4090 = vmatprep.subr.mxu0 0.0
  %4091 = vmatpush1.msra.mxu0 0.0
  %4092 = vmatprep.subr.mxu0 0.0
  %4093 = vmatpush1.msra.mxu0 0.0
  %4094 = vmatprep.subr.mxu0 0.0
  %4095 = vmatpush1.msra.mxu0 0.0
  %4096 = vmatprep.subr.mxu0 0.0
  %4097 = vmatpush1.msra.mxu0 0.0
  %4098 = vmatprep.subr.mxu0 0.0
  %4099 = vmatpush1.msra.mxu0 0.0
  %4100 = vmatprep.subr.mxu0 0.0
  %4101 = vmatpush1.msra.mxu0 %v2800
  %4102 = vmatprep.subr.mxu0 0.0
  %4103 = vmatpush2.msra.mxu0 0.0
  %4104 = vmatprep.subr.mxu0 0.0
  %4105 = vmatpush2.msra.mxu0 0.0
  %4106 = vmatprep.subr.mxu0 0.0
  %4107 = vmatpush2.msra.mxu0 0.0
  %4108 = vmatprep.subr.mxu0 0.0
  %4109 = vmatpush2.msra.mxu0 0.0
  %4110 = vmatprep.subr.mxu0 0.0
  %4111 = vmatpush2.msra.mxu0 0.0
  %4112 = vmatprep.subr.mxu0 0.0
  %4113 = vmatpush2.msra.mxu0 0.0
  %4114 = vmatprep.subr.mxu0 0.0
  %4115 = vmatpush2.msra.mxu0 0.0
  %4116 = vmatprep.subr.mxu0 0.0
  %4117 = vmatpush2.msra.mxu0 0.0
  %4118 = vmatprep.subr.mxu0 0.0
  %4119 = vmatpush2.msra.mxu0 0.0
  %4120 = vmatprep.subr.mxu0 0.0
  %4121 = vmatpush2.msra.mxu0 0.0
  %4122 = vmatprep.subr.mxu0 0.0
  %4123 = vmatpush2.msra.mxu0 0.0
  %4124 = vmatprep.subr.mxu0 0.0
  %4125 = vmatpush2.msra.mxu0 0.0
  %4126 = vmatprep.subr.mxu0 0.0
  %4127 = vmatpush2.msra.mxu0 0.0
  %4128 = vmatprep.subr.mxu0 0.0
  %4129 = vmatpush2.msra.mxu0 0.0
  %4130 = vmatprep.subr.mxu0 0.0
  %4131 = vmatpush2.msra.mxu0 0.0
  %4132 = vmatprep.subr.mxu0 0.0
  %4133 = vmatpush2.msra.mxu0 0.0
  %4134 = vmatprep.mubr.f32.mxu0 0.0
  %4135 = vmatmul.mubr.f32.gmra.mxu0 %v4068
  %v4136 = vpop.f32.mrf.mxu0
  %v4137 = vadd.f32 0.0, %v4136
  %v4138 = vpop.f32.mrf.mxu0
  %4139 = vdwg.mxu0
  %s4140 = scalar_lea.vmem %s2, 128
  %v4141 = vld [vmem:[%s4140] sm:$0xff]
  %v4142 = vld [vmem:[%s4140 + $0x8] sm:$0xff]
  %v4143 = vld [vmem:[%s4140 + $0x10] sm:$0xff]
  %v4144 = vld [vmem:[%s4140 + $0x18] sm:$0xff]
  %v4145 = vld [vmem:[%s4140 + $0x20] sm:$0xff]
  %v4146 = vld [vmem:[%s4140 + $0x28] sm:$0xff]
  %v4147 = vld [vmem:[%s4140 + $0x30] sm:$0xff]
  %v4148 = vld [vmem:[%s4140 + $0x38] sm:$0xff]
  %v4149 = vld [vmem:[%s4140 + $0x40] sm:$0xff]
  %v4150 = vld [vmem:[%s4140 + $0x48] sm:$0xff]
  %v4151 = vld [vmem:[%s4140 + $0x50] sm:$0xff]
  %v4152 = vld [vmem:[%s4140 + $0x58] sm:$0xff]
  %v4153 = vld [vmem:[%s4140 + $0x60] sm:$0xff]
  %v4154 = vld [vmem:[%s4140 + $0x68] sm:$0xff]
  %v4155 = vld [vmem:[%s4140 + $0x70] sm:$0xff]
  %v4156 = vld [vmem:[%s4140 + $0x78] sm:$0xff]
  %v4157 = vld [vmem:[%s2761 + $0x3] sm:$0x1]
  %v4158 = vlaneseq
  %v4159 = vshrl.u32 %v4158, 7
  %v4160 = vsub.s32 0, %v4159
  %v4161 = vrot.slane %v4157, %v4160
  %4162 = vmatprep.subr.mxu0 0.0
  %4163 = vmatpush1.msra.mxu0 %v4156
  %4164 = vmatprep.subr.mxu0 0.0
  %4165 = vmatpush1.msra.mxu0 %v4155
  %4166 = vmatprep.subr.mxu0 0.0
  %4167 = vmatpush1.msra.mxu0 %v4154
  %4168 = vmatprep.subr.mxu0 0.0
  %4169 = vmatpush1.msra.mxu0 %v4153
  %4170 = vmatprep.subr.mxu0 0.0
  %4171 = vmatpush1.msra.mxu0 %v4152
  %4172 = vmatprep.subr.mxu0 0.0
  %4173 = vmatpush1.msra.mxu0 %v4151
  %4174 = vmatprep.subr.mxu0 0.0
  %4175 = vmatpush1.msra.mxu0 %v4150
  %4176 = vmatprep.subr.mxu0 0.0
  %4177 = vmatpush1.msra.mxu0 %v4149
  %4178 = vmatprep.subr.mxu0 0.0
  %4179 = vmatpush1.msra.mxu0 %v4148
  %4180 = vmatprep.subr.mxu0 0.0
  %4181 = vmatpush1.msra.mxu0 %v4147
  %4182 = vmatprep.subr.mxu0 0.0
  %4183 = vmatpush1.msra.mxu0 %v4146
  %4184 = vmatprep.subr.mxu0 0.0
  %4185 = vmatpush1.msra.mxu0 %v4145
  %4186 = vmatprep.subr.mxu0 0.0
  %4187 = vmatpush1.msra.mxu0 %v4144
  %4188 = vmatprep.subr.mxu0 0.0
  %4189 = vmatpush1.msra.mxu0 %v4143
  %4190 = vmatprep.subr.mxu0 0.0
  %4191 = vmatpush1.msra.mxu0 %v4142
  %4192 = vmatprep.subr.mxu0 0.0
  %4193 = vmatpush1.msra.mxu0 %v4141
  %4194 = vmatprep.subr.mxu0 0.0
  %4195 = vmatpush2.msra.mxu0 0.0
  %4196 = vmatprep.subr.mxu0 0.0
  %4197 = vmatpush2.msra.mxu0 0.0
  %4198 = vmatprep.subr.mxu0 0.0
  %4199 = vmatpush2.msra.mxu0 0.0
  %4200 = vmatprep.subr.mxu0 0.0
  %4201 = vmatpush2.msra.mxu0 0.0
  %4202 = vmatprep.subr.mxu0 0.0
  %4203 = vmatpush2.msra.mxu0 0.0
  %4204 = vmatprep.subr.mxu0 0.0
  %4205 = vmatpush2.msra.mxu0 0.0
  %4206 = vmatprep.subr.mxu0 0.0
  %4207 = vmatpush2.msra.mxu0 0.0
  %4208 = vmatprep.subr.mxu0 0.0
  %4209 = vmatpush2.msra.mxu0 0.0
  %4210 = vmatprep.subr.mxu0 0.0
  %4211 = vmatpush2.msra.mxu0 0.0
  %4212 = vmatprep.subr.mxu0 0.0
  %4213 = vmatpush2.msra.mxu0 0.0
  %4214 = vmatprep.subr.mxu0 0.0
  %4215 = vmatpush2.msra.mxu0 0.0
  %4216 = vmatprep.subr.mxu0 0.0
  %4217 = vmatpush2.msra.mxu0 0.0
  %4218 = vmatprep.subr.mxu0 0.0
  %4219 = vmatpush2.msra.mxu0 0.0
  %4220 = vmatprep.subr.mxu0 0.0
  %4221 = vmatpush2.msra.mxu0 0.0
  %4222 = vmatprep.subr.mxu0 0.0
  %4223 = vmatpush2.msra.mxu0 0.0
  %4224 = vmatprep.subr.mxu0 0.0
  %4225 = vmatpush2.msra.mxu0 0.0
  %4226 = vmatprep.mubr.f32.mxu0 0.0
  %4227 = vmatmul.mubr.f32.gmra.mxu0 %v3626
  %v4228 = vpop.f32.mrf.mxu0
  %v4229 = vadd.f32 %v4161, %v4228
  %v4230 = vpop.f32.mrf.mxu0
  %4231 = vmatprep.mubr.f32.mxu0 0.0
  %4232 = vmatmul.mubr.f32.gmra.mxu0 %v3699
  %v4233 = vpop.f32.mrf.mxu0
  %v4234 = vadd.f32 %v4161, %v4233
  %v4235 = vpop.f32.mrf.mxu0
  %4236 = vmatprep.mubr.f32.mxu0 0.0
  %4237 = vmatmul.mubr.f32.gmra.mxu0 %v3772
  %v4238 = vpop.f32.mrf.mxu0
  %v4239 = vadd.f32 %v4161, %v4238
  %v4240 = vpop.f32.mrf.mxu0
  %4241 = vmatprep.mubr.f32.mxu0 0.0
  %4242 = vmatmul.mubr.f32.gmra.mxu0 %v3845
  %v4243 = vpop.f32.mrf.mxu0
  %v4244 = vadd.f32 %v4161, %v4243
  %v4245 = vpop.f32.mrf.mxu0
  %4246 = vmatprep.mubr.f32.mxu0 0.0
  %4247 = vmatmul.mubr.f32.gmra.mxu0 %v3918
  %v4248 = vpop.f32.mrf.mxu0
  %v4249 = vadd.f32 %v4161, %v4248
  %v4250 = vpop.f32.mrf.mxu0
  %4251 = vmatprep.mubr.f32.mxu0 0.0
  %4252 = vmatmul.mubr.f32.gmra.mxu0 %v3991
  %v4253 = vpop.f32.mrf.mxu0
  %v4254 = vadd.f32 %v4161, %v4253
  %v4255 = vpop.f32.mrf.mxu0
  %4256 = vmatprep.mubr.f32.mxu0 0.0
  %4257 = vmatmul.mubr.f32.gmra.mxu0 %v4064
  %v4258 = vpop.f32.mrf.mxu0
  %v4259 = vadd.f32 %v4161, %v4258
  %v4260 = vpop.f32.mrf.mxu0
  %4261 = vmatprep.mubr.f32.mxu0 0.0
  %4262 = vmatmul.mubr.f32.gmra.mxu0 %v4137
  %v4263 = vpop.f32.mrf.mxu0
  %v4264 = vadd.f32 %v4161, %v4263
  %v4265 = vpop.f32.mrf.mxu0
  %4266 = vdwg.mxu0
  %v4267 = vadd.f32 %v2486, %v4229
  %v4268 = vadd.f32 %v2487, %v4234
  %v4269 = vadd.f32 %v2488, %v4239
  %v4270 = vadd.f32 %v2489, %v4244
  %v4271 = vadd.f32 %v2490, %v4249
  %v4272 = vadd.f32 %v2491, %v4254
  %v4273 = vadd.f32 %v2492, %v4259
  %v4274 = vadd.f32 %v2493, %v4264
  %4275 = vadd.xlane.f32.xlu0 %v4267
  %v4276 = vpop.xlane.xlu0 %4275
  %4277 = vadd.xlane.f32.xlu0 %v4268
  %v4278 = vpop.xlane.xlu0 %4277
  %4279 = vadd.xlane.f32.xlu0 %v4269
  %v4280 = vpop.xlane.xlu0 %4279
  %4281 = vadd.xlane.f32.xlu0 %v4270
  %v4282 = vpop.xlane.xlu0 %4281
  %4283 = vadd.xlane.f32.xlu0 %v4271
  %v4284 = vpop.xlane.xlu0 %4283
  %4285 = vadd.xlane.f32.xlu0 %v4272
  %v4286 = vpop.xlane.xlu0 %4285
  %4287 = vadd.xlane.f32.xlu0 %v4273
  %v4288 = vpop.xlane.xlu0 %4287
  %4289 = vadd.xlane.f32.xlu0 %v4274
  %v4290 = vpop.xlane.xlu0 %4289
  %v4291 = vmul.f32 %v4276, 0.03125
  %v4292 = vmul.f32 %v4278, 0.03125
  %v4293 = vmul.f32 %v4280, 0.03125
  %v4294 = vmul.f32 %v4282, 0.03125
  %v4295 = vmul.f32 %v4284, 0.03125
  %v4296 = vmul.f32 %v4286, 0.03125
  %v4297 = vmul.f32 %v4288, 0.03125
  %v4298 = vmul.f32 %v4290, 0.03125
  %v4299 = vmul.f32 %v4267, %v4267
  %v4300 = vmul.f32 %v4268, %v4268
  %v4301 = vmul.f32 %v4269, %v4269
  %v4302 = vmul.f32 %v4270, %v4270
  %v4303 = vmul.f32 %v4271, %v4271
  %v4304 = vmul.f32 %v4272, %v4272
  %v4305 = vmul.f32 %v4273, %v4273
  %v4306 = vmul.f32 %v4274, %v4274
  %4307 = vadd.xlane.f32.xlu0 %v4299
  %v4308 = vpop.xlane.xlu0 %4307
  %4309 = vadd.xlane.f32.xlu0 %v4300
  %v4310 = vpop.xlane.xlu0 %4309
  %4311 = vadd.xlane.f32.xlu0 %v4301
  %v4312 = vpop.xlane.xlu0 %4311
  %4313 = vadd.xlane.f32.xlu0 %v4302
  %v4314 = vpop.xlane.xlu0 %4313
  %4315 = vadd.xlane.f32.xlu0 %v4303
  %v4316 = vpop.xlane.xlu0 %4315
  %4317 = vadd.xlane.f32.xlu0 %v4304
  %v4318 = vpop.xlane.xlu0 %4317
  %4319 = vadd.xlane.f32.xlu0 %v4305
  %v4320 = vpop.xlane.xlu0 %4319
  %4321 = vadd.xlane.f32.xlu0 %v4306
  %v4322 = vpop.xlane.xlu0 %4321
  %v4323 = vmul.f32 %v4308, 0.03125
  %v4324 = vmul.f32 %v4310, 0.03125
  %v4325 = vmul.f32 %v4312, 0.03125
  %v4326 = vmul.f32 %v4314, 0.03125
  %v4327 = vmul.f32 %v4316, 0.03125
  %v4328 = vmul.f32 %v4318, 0.03125
  %v4329 = vmul.f32 %v4320, 0.03125
  %v4330 = vmul.f32 %v4322, 0.03125
  %v4331 = vmul.f32 %v4291, %v4291
  %v4332 = vmul.f32 %v4292, %v4292
  %v4333 = vmul.f32 %v4293, %v4293
  %v4334 = vmul.f32 %v4294, %v4294
  %v4335 = vmul.f32 %v4295, %v4295
  %v4336 = vmul.f32 %v4296, %v4296
  %v4337 = vmul.f32 %v4297, %v4297
  %v4338 = vmul.f32 %v4298, %v4298
  %v4339 = vsub.f32 %v4323, %v4331
  %v4340 = vsub.f32 %v4324, %v4332
  %v4341 = vsub.f32 %v4325, %v4333
  %v4342 = vsub.f32 %v4326, %v4334
  %v4343 = vsub.f32 %v4327, %v4335
  %v4344 = vsub.f32 %v4328, %v4336
  %v4345 = vsub.f32 %v4329, %v4337
  %v4346 = vsub.f32 %v4330, %v4338
  %v4347 = vsub.f32 %v4267, %v4291
  %v4348 = vsub.f32 %v4268, %v4292
  %v4349 = vsub.f32 %v4269, %v4293
  %v4350 = vsub.f32 %v4270, %v4294
  %v4351 = vsub.f32 %v4271, %v4295
  %v4352 = vsub.f32 %v4272, %v4296
  %v4353 = vsub.f32 %v4273, %v4297
  %v4354 = vsub.f32 %v4274, %v4298
  %v4355 = vadd.f32 %v4339, 1e-12
  %v4356 = vadd.f32 %v4340, 1e-12
  %v4357 = vadd.f32 %v4341, 1e-12
  %v4358 = vadd.f32 %v4342, 1e-12
  %v4359 = vadd.f32 %v4343, 1e-12
  %v4360 = vadd.f32 %v4344, 1e-12
  %v4361 = vadd.f32 %v4345, 1e-12
  %v4362 = vadd.f32 %v4346, 1e-12
  %v4363 = vrsqrt.pop %v4355
  %v4364 = vrsqrt.pop %v4356
  %v4365 = vrsqrt.pop %v4357
  %v4366 = vrsqrt.pop %v4358
  %v4367 = vrsqrt.pop %v4359
  %v4368 = vrsqrt.pop %v4360
  %v4369 = vrsqrt.pop %v4361
  %v4370 = vrsqrt.pop %v4362
  %v4371 = vmul.f32 %v4347, %v4363
  %v4372 = vmul.f32 %v4348, %v4364
  %v4373 = vmul.f32 %v4349, %v4365
  %v4374 = vmul.f32 %v4350, %v4366
  %v4375 = vmul.f32 %v4351, %v4367
  %v4376 = vmul.f32 %v4352, %v4368
  %v4377 = vmul.f32 %v4353, %v4369
  %v4378 = vmul.f32 %v4354, %v4370
  %v4379 = vld [vmem:[%s2761 + $0x4] sm:$0x1]
  %v4380 = vlaneseq
  %v4381 = vshrl.u32 %v4380, 7
  %v4382 = vsub.s32 0, %v4381
  %v4383 = vrot.slane %v4379, %v4382
  %v4384 = vmul.f32 %v4371, %v4383
  %v4385 = vmul.f32 %v4372, %v4383
  %v4386 = vmul.f32 %v4373, %v4383
  %v4387 = vmul.f32 %v4374, %v4383
  %v4388 = vmul.f32 %v4375, %v4383
  %v4389 = vmul.f32 %v4376, %v4383
  %v4390 = vmul.f32 %v4377, %v4383
  %v4391 = vmul.f32 %v4378, %v4383
  %v4392 = vld [vmem:[%s2761 + $0x5] sm:$0x1]
  %v4393 = vlaneseq
  %v4394 = vshrl.u32 %v4393, 7
  %v4395 = vsub.s32 0, %v4394
  %v4396 = vrot.slane %v4392, %v4395
  %v4397 = vadd.f32 %v4384, %v4396
  %v4398 = vadd.f32 %v4385, %v4396
  %v4399 = vadd.f32 %v4386, %v4396
  %v4400 = vadd.f32 %v4387, %v4396
  %v4401 = vadd.f32 %v4388, %v4396
  %v4402 = vadd.f32 %v4389, %v4396
  %v4403 = vadd.f32 %v4390, %v4396
  %v4404 = vadd.f32 %v4391, %v4396
  %s4405 = scalar_lea.vmem %s3, 128
  %v4406 = vld [vmem:[%s4405] sm:$0xff]
  %v4407 = vld [vmem:[%s4405 + $0x8] sm:$0xff]
  %v4408 = vld [vmem:[%s4405 + $0x10] sm:$0xff]
  %v4409 = vld [vmem:[%s4405 + $0x18] sm:$0xff]
  %v4410 = vld [vmem:[%s4405 + $0x20] sm:$0xff]
  %v4411 = vld [vmem:[%s4405 + $0x28] sm:$0xff]
  %v4412 = vld [vmem:[%s4405 + $0x30] sm:$0xff]
  %v4413 = vld [vmem:[%s4405 + $0x38] sm:$0xff]
  %v4414 = vld [vmem:[%s4405 + $0x40] sm:$0xff]
  %v4415 = vld [vmem:[%s4405 + $0x48] sm:$0xff]
  %v4416 = vld [vmem:[%s4405 + $0x50] sm:$0xff]
  %v4417 = vld [vmem:[%s4405 + $0x58] sm:$0xff]
  %v4418 = vld [vmem:[%s4405 + $0x60] sm:$0xff]
  %v4419 = vld [vmem:[%s4405 + $0x68] sm:$0xff]
  %v4420 = vld [vmem:[%s4405 + $0x70] sm:$0xff]
  %v4421 = vld [vmem:[%s4405 + $0x78] sm:$0xff]
  %v4422 = vld [vmem:[%s2761 + $0x6] sm:$0x1]
  %v4423 = vlaneseq
  %v4424 = vshrl.u32 %v4423, 7
  %v4425 = vsub.s32 0, %v4424
  %v4426 = vrot.slane %v4422, %v4425
  %4427 = vmatprep.subr.mxu0 0.0
  %4428 = vmatpush1.msra.mxu0 %v4421
  %4429 = vmatprep.subr.mxu0 0.0
  %4430 = vmatpush1.msra.mxu0 %v4420
  %4431 = vmatprep.subr.mxu0 0.0
  %4432 = vmatpush1.msra.mxu0 %v4419
  %4433 = vmatprep.subr.mxu0 0.0
  %4434 = vmatpush1.msra.mxu0 %v4418
  %4435 = vmatprep.subr.mxu0 0.0
  %4436 = vmatpush1.msra.mxu0 %v4417
  %4437 = vmatprep.subr.mxu0 0.0
  %4438 = vmatpush1.msra.mxu0 %v4416
  %4439 = vmatprep.subr.mxu0 0.0
  %4440 = vmatpush1.msra.mxu0 %v4415
  %4441 = vmatprep.subr.mxu0 0.0
  %4442 = vmatpush1.msra.mxu0 %v4414
  %4443 = vmatprep.subr.mxu0 0.0
  %4444 = vmatpush1.msra.mxu0 %v4413
  %4445 = vmatprep.subr.mxu0 0.0
  %4446 = vmatpush1.msra.mxu0 %v4412
  %4447 = vmatprep.subr.mxu0 0.0
  %4448 = vmatpush1.msra.mxu0 %v4411
  %4449 = vmatprep.subr.mxu0 0.0
  %4450 = vmatpush1.msra.mxu0 %v4410
  %4451 = vmatprep.subr.mxu0 0.0
  %4452 = vmatpush1.msra.mxu0 %v4409
  %4453 = vmatprep.subr.mxu0 0.0
  %4454 = vmatpush1.msra.mxu0 %v4408
  %4455 = vmatprep.subr.mxu0 0.0
  %4456 = vmatpush1.msra.mxu0 %v4407
  %4457 = vmatprep.subr.mxu0 0.0
  %4458 = vmatpush1.msra.mxu0 %v4406
  %4459 = vmatprep.subr.mxu0 0.0
  %4460 = vmatpush2.msra.mxu0 0.0
  %4461 = vmatprep.subr.mxu0 0.0
  %4462 = vmatpush2.msra.mxu0 0.0
  %4463 = vmatprep.subr.mxu0 0.0
  %4464 = vmatpush2.msra.mxu0 0.0
  %4465 = vmatprep.subr.mxu0 0.0
  %4466 = vmatpush2.msra.mxu0 0.0
  %4467 = vmatprep.subr.mxu0 0.0
  %4468 = vmatpush2.msra.mxu0 0.0
  %4469 = vmatprep.subr.mxu0 0.0
  %4470 = vmatpush2.msra.mxu0 0.0
  %4471 = vmatprep.subr.mxu0 0.0
  %4472 = vmatpush2.msra.mxu0 0.0
  %4473 = vmatprep.subr.mxu0 0.0
  %4474 = vmatpush2.msra.mxu0 0.0
  %4475 = vmatprep.subr.mxu0 0.0
  %4476 = vmatpush2.msra.mxu0 0.0
  %4477 = vmatprep.subr.mxu0 0.0
  %4478 = vmatpush2.msra.mxu0 0.0
  %4479 = vmatprep.subr.mxu0 0.0
  %4480 = vmatpush2.msra.mxu0 0.0
  %4481 = vmatprep.subr.mxu0 0.0
  %4482 = vmatpush2.msra.mxu0 0.0
  %4483 = vmatprep.subr.mxu0 0.0
  %4484 = vmatpush2.msra.mxu0 0.0
  %4485 = vmatprep.subr.mxu0 0.0
  %4486 = vmatpush2.msra.mxu0 0.0
  %4487 = vmatprep.subr.mxu0 0.0
  %4488 = vmatpush2.msra.mxu0 0.0
  %4489 = vmatprep.subr.mxu0 0.0
  %4490 = vmatpush2.msra.mxu0 0.0
  %4491 = vmatprep.mubr.f32.mxu0 0.0
  %4492 = vmatmul.mubr.f32.gmra.mxu0 %v4397
  %v4493 = vpop.f32.mrf.mxu0
  %v4494 = vadd.f32 %v4426, %v4493
  %v4495 = vpop.f32.mrf.mxu0
  %4496 = vmatprep.mubr.f32.mxu0 0.0
  %4497 = vmatmul.mubr.f32.gmra.mxu0 %v4398
  %v4498 = vpop.f32.mrf.mxu0
  %v4499 = vadd.f32 %v4426, %v4498
  %v4500 = vpop.f32.mrf.mxu0
  %4501 = vmatprep.mubr.f32.mxu0 0.0
  %4502 = vmatmul.mubr.f32.gmra.mxu0 %v4399
  %v4503 = vpop.f32.mrf.mxu0
  %v4504 = vadd.f32 %v4426, %v4503
  %v4505 = vpop.f32.mrf.mxu0
  %4506 = vmatprep.mubr.f32.mxu0 0.0
  %4507 = vmatmul.mubr.f32.gmra.mxu0 %v4400
  %v4508 = vpop.f32.mrf.mxu0
  %v4509 = vadd.f32 %v4426, %v4508
  %v4510 = vpop.f32.mrf.mxu0
  %4511 = vmatprep.mubr.f32.mxu0 0.0
  %4512 = vmatmul.mubr.f32.gmra.mxu0 %v4401
  %v4513 = vpop.f32.mrf.mxu0
  %v4514 = vadd.f32 %v4426, %v4513
  %v4515 = vpop.f32.mrf.mxu0
  %4516 = vmatprep.mubr.f32.mxu0 0.0
  %4517 = vmatmul.mubr.f32.gmra.mxu0 %v4402
  %v4518 = vpop.f32.mrf.mxu0
  %v4519 = vadd.f32 %v4426, %v4518
  %v4520 = vpop.f32.mrf.mxu0
  %4521 = vmatprep.mubr.f32.mxu0 0.0
  %4522 = vmatmul.mubr.f32.gmra.mxu0 %v4403
  %v4523 = vpop.f32.mrf.mxu0
  %v4524 = vadd.f32 %v4426, %v4523
  %v4525 = vpop.f32.mrf.mxu0
  %4526 = vmatprep.mubr.f32.mxu0 0.0
  %4527 = vmatmul.mubr.f32.gmra.mxu0 %v4404
  %v4528 = vpop.f32.mrf.mxu0
  %v4529 = vadd.f32 %v4426, %v4528
  %v4530 = vpop.f32.mrf.mxu0
  %4531 = vdwg.mxu0
  %v4532 = vmul.f32 %v4494, %v4494
  %v4533 = vmul.f32 %v4499, %v4499
  %v4534 = vmul.f32 %v4504, %v4504
  %v4535 = vmul.f32 %v4509, %v4509
  %v4536 = vmul.f32 %v4514, %v4514
  %v4537 = vmul.f32 %v4519, %v4519
  %v4538 = vmul.f32 %v4524, %v4524
  %v4539 = vmul.f32 %v4529, %v4529
  %v4540 = vmul.f32 %v4494, %v4532
  %v4541 = vmul.f32 %v4499, %v4533
  %v4542 = vmul.f32 %v4504, %v4534
  %v4543 = vmul.f32 %v4509, %v4535
  %v4544 = vmul.f32 %v4514, %v4536
  %v4545 = vmul.f32 %v4519, %v4537
  %v4546 = vmul.f32 %v4524, %v4538
  %v4547 = vmul.f32 %v4529, %v4539
  %v4548 = vmul.f32 %v4540, 0.044715
  %v4549 = vmul.f32 %v4541, 0.044715
  %v4550 = vmul.f32 %v4542, 0.044715
  %v4551 = vmul.f32 %v4543, 0.044715
  %v4552 = vmul.f32 %v4544, 0.044715
  %v4553 = vmul.f32 %v4545, 0.044715
  %v4554 = vmul.f32 %v4546, 0.044715
  %v4555 = vmul.f32 %v4547, 0.044715
  %v4556 = vadd.f32 %v4494, %v4548
  %v4557 = vadd.f32 %v4499, %v4549
  %v4558 = vadd.f32 %v4504, %v4550
  %v4559 = vadd.f32 %v4509, %v4551
  %v4560 = vadd.f32 %v4514, %v4552
  %v4561 = vadd.f32 %v4519, %v4553
  %v4562 = vadd.f32 %v4524, %v4554
  %v4563 = vadd.f32 %v4529, %v4555
  %v4564 = vmul.f32 %v4556, 0.7978846
  %v4565 = vmul.f32 %v4557, 0.7978846
  %v4566 = vmul.f32 %v4558, 0.7978846
  %v4567 = vmul.f32 %v4559, 0.7978846
  %v4568 = vmul.f32 %v4560, 0.7978846
  %v4569 = vmul.f32 %v4561, 0.7978846
  %v4570 = vmul.f32 %v4562, 0.7978846
  %v4571 = vmul.f32 %v4563, 0.7978846
  %v4572 = vtanh.pop %v4564
  %v4573 = vtanh.pop %v4565
  %v4574 = vtanh.pop %v4566
  %v4575 = vtanh.pop %v4567
  %v4576 = vtanh.pop %v4568
  %v4577 = vtanh.pop %v4569
  %v4578 = vtanh.pop %v4570
  %v4579 = vtanh.pop %v4571
  %v4580 = vadd.f32 %v4572, 1.0
  %v4581 = vadd.f32 %v4573, 1.0
  %v4582 = vadd.f32 %v4574, 1.0
  %v4583 = vadd.f32 %v4575, 1.0
  %v4584 = vadd.f32 %v4576, 1.0
  %v4585 = vadd.f32 %v4577, 1.0
  %v4586 = vadd.f32 %v4578, 1.0
  %v4587 = vadd.f32 %v4579, 1.0
  %v4588 = vmul.f32 %v4580, 0.5
  %v4589 = vmul.f32 %v4581, 0.5
  %v4590 = vmul.f32 %v4582, 0.5
  %v4591 = vmul.f32 %v4583, 0.5
  %v4592 = vmul.f32 %v4584, 0.5
  %v4593 = vmul.f32 %v4585, 0.5
  %v4594 = vmul.f32 %v4586, 0.5
  %v4595 = vmul.f32 %v4587, 0.5
  %v4596 = vmul.f32 %v4494, %v4588
  %v4597 = vmul.f32 %v4499, %v4589
  %v4598 = vmul.f32 %v4504, %v4590
  %v4599 = vmul.f32 %v4509, %v4591
  %v4600 = vmul.f32 %v4514, %v4592
  %v4601 = vmul.f32 %v4519, %v4593
  %v4602 = vmul.f32 %v4524, %v4594
  %v4603 = vmul.f32 %v4529, %v4595
  %s4604 = scalar_lea.vmem %s4, 128
  %v4605 = vld [vmem:[%s4604] sm:$0xff]
  %v4606 = vld [vmem:[%s4604 + $0x8] sm:$0xff]
  %v4607 = vld [vmem:[%s4604 + $0x10] sm:$0xff]
  %v4608 = vld [vmem:[%s4604 + $0x18] sm:$0xff]
  %v4609 = vld [vmem:[%s4604 + $0x20] sm:$0xff]
  %v4610 = vld [vmem:[%s4604 + $0x28] sm:$0xff]
  %v4611 = vld [vmem:[%s4604 + $0x30] sm:$0xff]
  %v4612 = vld [vmem:[%s4604 + $0x38] sm:$0xff]
  %v4613 = vld [vmem:[%s4604 + $0x40] sm:$0xff]
  %v4614 = vld [vmem:[%s4604 + $0x48] sm:$0xff]
  %v4615 = vld [vmem:[%s4604 + $0x50] sm:$0xff]
  %v4616 = vld [vmem:[%s4604 + $0x58] sm:$0xff]
  %v4617 = vld [vmem:[%s4604 + $0x60] sm:$0xff]
  %v4618 = vld [vmem:[%s4604 + $0x68] sm:$0xff]
  %v4619 = vld [vmem:[%s4604 + $0x70] sm:$0xff]
  %v4620 = vld [vmem:[%s4604 + $0x78] sm:$0xff]
  %v4621 = vld [vmem:[%s2761 + $0x7] sm:$0x1]
  %v4622 = vlaneseq
  %v4623 = vshrl.u32 %v4622, 7
  %v4624 = vsub.s32 0, %v4623
  %v4625 = vrot.slane %v4621, %v4624
  %4626 = vmatprep.subr.mxu0 0.0
  %4627 = vmatpush1.msra.mxu0 %v4620
  %4628 = vmatprep.subr.mxu0 0.0
  %4629 = vmatpush1.msra.mxu0 %v4619
  %4630 = vmatprep.subr.mxu0 0.0
  %4631 = vmatpush1.msra.mxu0 %v4618
  %4632 = vmatprep.subr.mxu0 0.0
  %4633 = vmatpush1.msra.mxu0 %v4617
  %4634 = vmatprep.subr.mxu0 0.0
  %4635 = vmatpush1.msra.mxu0 %v4616
  %4636 = vmatprep.subr.mxu0 0.0
  %4637 = vmatpush1.msra.mxu0 %v4615
  %4638 = vmatprep.subr.mxu0 0.0
  %4639 = vmatpush1.msra.mxu0 %v4614
  %4640 = vmatprep.subr.mxu0 0.0
  %4641 = vmatpush1.msra.mxu0 %v4613
  %4642 = vmatprep.subr.mxu0 0.0
  %4643 = vmatpush1.msra.mxu0 %v4612
  %4644 = vmatprep.subr.mxu0 0.0
  %4645 = vmatpush1.msra.mxu0 %v4611
  %4646 = vmatprep.subr.mxu0 0.0
  %4647 = vmatpush1.msra.mxu0 %v4610
  %4648 = vmatprep.subr.mxu0 0.0
  %4649 = vmatpush1.msra.mxu0 %v4609
  %4650 = vmatprep.subr.mxu0 0.0
  %4651 = vmatpush1.msra.mxu0 %v4608
  %4652 = vmatprep.subr.mxu0 0.0
  %4653 = vmatpush1.msra.mxu0 %v4607
  %4654 = vmatprep.subr.mxu0 0.0
  %4655 = vmatpush1.msra.mxu0 %v4606
  %4656 = vmatprep.subr.mxu0 0.0
  %4657 = vmatpush1.msra.mxu0 %v4605
  %4658 = vmatprep.subr.mxu0 0.0
  %4659 = vmatpush2.msra.mxu0 0.0
  %4660 = vmatprep.subr.mxu0 0.0
  %4661 = vmatpush2.msra.mxu0 0.0
  %4662 = vmatprep.subr.mxu0 0.0
  %4663 = vmatpush2.msra.mxu0 0.0
  %4664 = vmatprep.subr.mxu0 0.0
  %4665 = vmatpush2.msra.mxu0 0.0
  %4666 = vmatprep.subr.mxu0 0.0
  %4667 = vmatpush2.msra.mxu0 0.0
  %4668 = vmatprep.subr.mxu0 0.0
  %4669 = vmatpush2.msra.mxu0 0.0
  %4670 = vmatprep.subr.mxu0 0.0
  %4671 = vmatpush2.msra.mxu0 0.0
  %4672 = vmatprep.subr.mxu0 0.0
  %4673 = vmatpush2.msra.mxu0 0.0
  %4674 = vmatprep.subr.mxu0 0.0
  %4675 = vmatpush2.msra.mxu0 0.0
  %4676 = vmatprep.subr.mxu0 0.0
  %4677 = vmatpush2.msra.mxu0 0.0
  %4678 = vmatprep.subr.mxu0 0.0
  %4679 = vmatpush2.msra.mxu0 0.0
  %4680 = vmatprep.subr.mxu0 0.0
  %4681 = vmatpush2.msra.mxu0 0.0
  %4682 = vmatprep.subr.mxu0 0.0
  %4683 = vmatpush2.msra.mxu0 0.0
  %4684 = vmatprep.subr.mxu0 0.0
  %4685 = vmatpush2.msra.mxu0 0.0
  %4686 = vmatprep.subr.mxu0 0.0
  %4687 = vmatpush2.msra.mxu0 0.0
  %4688 = vmatprep.subr.mxu0 0.0
  %4689 = vmatpush2.msra.mxu0 0.0
  %4690 = vmatprep.mubr.f32.mxu0 0.0
  %4691 = vmatmul.mubr.f32.gmra.mxu0 %v4596
  %v4692 = vpop.f32.mrf.mxu0
  %v4693 = vadd.f32 %v4625, %v4692
  %v4694 = vpop.f32.mrf.mxu0
  %4695 = vmatprep.mubr.f32.mxu0 0.0
  %4696 = vmatmul.mubr.f32.gmra.mxu0 %v4597
  %v4697 = vpop.f32.mrf.mxu0
  %v4698 = vadd.f32 %v4625, %v4697
  %v4699 = vpop.f32.mrf.mxu0
  %4700 = vmatprep.mubr.f32.mxu0 0.0
  %4701 = vmatmul.mubr.f32.gmra.mxu0 %v4598
  %v4702 = vpop.f32.mrf.mxu0
  %v4703 = vadd.f32 %v4625, %v4702
  %v4704 = vpop.f32.mrf.mxu0
  %4705 = vmatprep.mubr.f32.mxu0 0.0
  %4706 = vmatmul.mubr.f32.gmra.mxu0 %v4599
  %v4707 = vpop.f32.mrf.mxu0
  %v4708 = vadd.f32 %v4625, %v4707
  %v4709 = vpop.f32.mrf.mxu0
  %4710 = vmatprep.mubr.f32.mxu0 0.0
  %4711 = vmatmul.mubr.f32.gmra.mxu0 %v4600
  %v4712 = vpop.f32.mrf.mxu0
  %v4713 = vadd.f32 %v4625, %v4712
  %v4714 = vpop.f32.mrf.mxu0
  %4715 = vmatprep.mubr.f32.mxu0 0.0
  %4716 = vmatmul.mubr.f32.gmra.mxu0 %v4601
  %v4717 = vpop.f32.mrf.mxu0
  %v4718 = vadd.f32 %v4625, %v4717
  %v4719 = vpop.f32.mrf.mxu0
  %4720 = vmatprep.mubr.f32.mxu0 0.0
  %4721 = vmatmul.mubr.f32.gmra.mxu0 %v4602
  %v4722 = vpop.f32.mrf.mxu0
  %v4723 = vadd.f32 %v4625, %v4722
  %v4724 = vpop.f32.mrf.mxu0
  %4725 = vmatprep.mubr.f32.mxu0 0.0
  %4726 = vmatmul.mubr.f32.gmra.mxu0 %v4603
  %v4727 = vpop.f32.mrf.mxu0
  %v4728 = vadd.f32 %v4625, %v4727
  %v4729 = vpop.f32.mrf.mxu0
  %4730 = vdwg.mxu0
  %v4731 = vadd.f32 %v4397, %v4693
  %v4732 = vadd.f32 %v4398, %v4698
  %v4733 = vadd.f32 %v4399, %v4703
  %v4734 = vadd.f32 %v4400, %v4708
  %v4735 = vadd.f32 %v4401, %v4713
  %v4736 = vadd.f32 %v4402, %v4718
  %v4737 = vadd.f32 %v4403, %v4723
  %v4738 = vadd.f32 %v4404, %v4728
  %4739 = vadd.xlane.f32.xlu0 %v4731
  %v4740 = vpop.xlane.xlu0 %4739
  %4741 = vadd.xlane.f32.xlu0 %v4732
  %v4742 = vpop.xlane.xlu0 %4741
  %4743 = vadd.xlane.f32.xlu0 %v4733
  %v4744 = vpop.xlane.xlu0 %4743
  %4745 = vadd.xlane.f32.xlu0 %v4734
  %v4746 = vpop.xlane.xlu0 %4745
  %4747 = vadd.xlane.f32.xlu0 %v4735
  %v4748 = vpop.xlane.xlu0 %4747
  %4749 = vadd.xlane.f32.xlu0 %v4736
  %v4750 = vpop.xlane.xlu0 %4749
  %4751 = vadd.xlane.f32.xlu0 %v4737
  %v4752 = vpop.xlane.xlu0 %4751
  %4753 = vadd.xlane.f32.xlu0 %v4738
  %v4754 = vpop.xlane.xlu0 %4753
  %v4755 = vmul.f32 %v4740, 0.03125
  %v4756 = vmul.f32 %v4742, 0.03125
  %v4757 = vmul.f32 %v4744, 0.03125
  %v4758 = vmul.f32 %v4746, 0.03125
  %v4759 = vmul.f32 %v4748, 0.03125
  %v4760 = vmul.f32 %v4750, 0.03125
  %v4761 = vmul.f32 %v4752, 0.03125
  %v4762 = vmul.f32 %v4754, 0.03125
  %v4763 = vmul.f32 %v4731, %v4731
  %v4764 = vmul.f32 %v4732, %v4732
  %v4765 = vmul.f32 %v4733, %v4733
  %v4766 = vmul.f32 %v4734, %v4734
  %v4767 = vmul.f32 %v4735, %v4735
  %v4768 = vmul.f32 %v4736, %v4736
  %v4769 = vmul.f32 %v4737, %v4737
  %v4770 = vmul.f32 %v4738, %v4738
  %4771 = vadd.xlane.f32.xlu0 %v4763
  %v4772 = vpop.xlane.xlu0 %4771
  %4773 = vadd.xlane.f32.xlu0 %v4764
  %v4774 = vpop.xlane.xlu0 %4773
  %4775 = vadd.xlane.f32.xlu0 %v4765
  %v4776 = vpop.xlane.xlu0 %4775
  %4777 = vadd.xlane.f32.xlu0 %v4766
  %v4778 = vpop.xlane.xlu0 %4777
  %4779 = vadd.xlane.f32.xlu0 %v4767
  %v4780 = vpop.xlane.xlu0 %4779
  %4781 = vadd.xlane.f32.xlu0 %v4768
  %v4782 = vpop.xlane.xlu0 %4781
  %4783 = vadd.xlane.f32.xlu0 %v4769
  %v4784 = vpop.xlane.xlu0 %4783
  %4785 = vadd.xlane.f32.xlu0 %v4770
  %v4786 = vpop.xlane.xlu0 %4785
  %v4787 = vmul.f32 %v4772, 0.03125
  %v4788 = vmul.f32 %v4774, 0.03125
  %v4789 = vmul.f32 %v4776, 0.03125
  %v4790 = vmul.f32 %v4778, 0.03125
  %v4791 = vmul.f32 %v4780, 0.03125
  %v4792 = vmul.f32 %v4782, 0.03125
  %v4793 = vmul.f32 %v4784, 0.03125
  %v4794 = vmul.f32 %v4786, 0.03125
  %v4795 = vmul.f32 %v4755, %v4755
  %v4796 = vmul.f32 %v4756, %v4756
  %v4797 = vmul.f32 %v4757, %v4757
  %v4798 = vmul.f32 %v4758, %v4758
  %v4799 = vmul.f32 %v4759, %v4759
  %v4800 = vmul.f32 %v4760, %v4760
  %v4801 = vmul.f32 %v4761, %v4761
  %v4802 = vmul.f32 %v4762, %v4762
  %v4803 = vsub.f32 %v4787, %v4795
  %v4804 = vsub.f32 %v4788, %v4796
  %v4805 = vsub.f32 %v4789, %v4797
  %v4806 = vsub.f32 %v4790, %v4798
  %v4807 = vsub.f32 %v4791, %v4799
  %v4808 = vsub.f32 %v4792, %v4800
  %v4809 = vsub.f32 %v4793, %v4801
  %v4810 = vsub.f32 %v4794, %v4802
  %v4811 = vsub.f32 %v4731, %v4755
  %v4812 = vsub.f32 %v4732, %v4756
  %v4813 = vsub.f32 %v4733, %v4757
  %v4814 = vsub.f32 %v4734, %v4758
  %v4815 = vsub.f32 %v4735, %v4759
  %v4816 = vsub.f32 %v4736, %v4760
  %v4817 = vsub.f32 %v4737, %v4761
  %v4818 = vsub.f32 %v4738, %v4762
  %v4819 = vadd.f32 %v4803, 1e-12
  %v4820 = vadd.f32 %v4804, 1e-12
  %v4821 = vadd.f32 %v4805, 1e-12
  %v4822 = vadd.f32 %v4806, 1e-12
  %v4823 = vadd.f32 %v4807, 1e-12
  %v4824 = vadd.f32 %v4808, 1e-12
  %v4825 = vadd.f32 %v4809, 1e-12
  %v4826 = vadd.f32 %v4810, 1e-12
  %v4827 = vrsqrt.pop %v4819
  %v4828 = vrsqrt.pop %v4820
  %v4829 = vrsqrt.pop %v4821
  %v4830 = vrsqrt.pop %v4822
  %v4831 = vrsqrt.pop %v4823
  %v4832 = vrsqrt.pop %v4824
  %v4833 = vrsqrt.pop %v4825
  %v4834 = vrsqrt.pop %v4826
  %v4835 = vmul.f32 %v4811, %v4827
  %v4836 = vmul.f32 %v4812, %v4828
  %v4837 = vmul.f32 %v4813, %v4829
  %v4838 = vmul.f32 %v4814, %v4830
  %v4839 = vmul.f32 %v4815, %v4831
  %v4840 = vmul.f32 %v4816, %v4832
  %v4841 = vmul.f32 %v4817, %v4833
  %v4842 = vmul.f32 %v4818, %v4834
  %v4843 = vld [vmem:[%s2761 + $0x8] sm:$0x1]
  %v4844 = vlaneseq
  %v4845 = vshrl.u32 %v4844, 7
  %v4846 = vsub.s32 0, %v4845
  %v4847 = vrot.slane %v4843, %v4846
  %v4848 = vmul.f32 %v4835, %v4847
  %v4849 = vmul.f32 %v4836, %v4847
  %v4850 = vmul.f32 %v4837, %v4847
  %v4851 = vmul.f32 %v4838, %v4847
  %v4852 = vmul.f32 %v4839, %v4847
  %v4853 = vmul.f32 %v4840, %v4847
  %v4854 = vmul.f32 %v4841, %v4847
  %v4855 = vmul.f32 %v4842, %v4847
  %v4856 = vld [vmem:[%s2761 + $0x9] sm:$0x1]
  %v4857 = vlaneseq
  %v4858 = vshrl.u32 %v4857, 7
  %v4859 = vsub.s32 0, %v4858
  %v4860 = vrot.slane %v4856, %v4859
  %v4861 = vadd.f32 %v4848, %v4860
  %v4862 = vadd.f32 %v4849, %v4860
  %v4863 = vadd.f32 %v4850, %v4860
  %v4864 = vadd.f32 %v4851, %v4860
  %v4865 = vadd.f32 %v4852, %v4860
  %v4866 = vadd.f32 %v4853, %v4860
  %v4867 = vadd.f32 %v4854, %v4860
  %v4868 = vadd.f32 %v4855, %v4860
  %v4869 = vsel %vm2404, %v4861, 0.0
  %v4870 = vsel %vm2404, %v4862, 0.0
  %v4871 = vsel %vm2404, %v4863, 0.0
  %v4872 = vsel %vm2404, %v4864, 0.0
  %v4873 = vsel %vm2404, %v4865, 0.0
  %v4874 = vsel %vm2404, %v4866, 0.0
  %v4875 = vsel %vm2404, %v4867, 0.0
  %v4876 = vsel %vm2404, %v4868, 0.0
  %v4877 = vrot.slane %v4869, 4
  %v4878 = vadd.f32 %v4869, %v4877
  %v4879 = vrot.slane %v4878, 2
  %v4880 = vadd.f32 %v4878, %v4879
  %v4881 = vrot.slane %v4880, 1
  %v4882 = vadd.f32 %v4880, %v4881
  %v4883 = vrot.slane %v4870, 4
  %v4884 = vadd.f32 %v4870, %v4883
  %v4885 = vrot.slane %v4884, 2
  %v4886 = vadd.f32 %v4884, %v4885
  %v4887 = vrot.slane %v4886, 1
  %v4888 = vadd.f32 %v4886, %v4887
  %v4889 = vrot.slane %v4871, 4
  %v4890 = vadd.f32 %v4871, %v4889
  %v4891 = vrot.slane %v4890, 2
  %v4892 = vadd.f32 %v4890, %v4891
  %v4893 = vrot.slane %v4892, 1
  %v4894 = vadd.f32 %v4892, %v4893
  %v4895 = vrot.slane %v4872, 4
  %v4896 = vadd.f32 %v4872, %v4895
  %v4897 = vrot.slane %v4896, 2
  %v4898 = vadd.f32 %v4896, %v4897
  %v4899 = vrot.slane %v4898, 1
  %v4900 = vadd.f32 %v4898, %v4899
  %v4901 = vrot.slane %v4873, 4
  %v4902 = vadd.f32 %v4873, %v4901
  %v4903 = vrot.slane %v4902, 2
  %v4904 = vadd.f32 %v4902, %v4903
  %v4905 = vrot.slane %v4904, 1
  %v4906 = vadd.f32 %v4904, %v4905
  %v4907 = vrot.slane %v4874, 4
  %v4908 = vadd.f32 %v4874, %v4907
  %v4909 = vrot.slane %v4908, 2
  %v4910 = vadd.f32 %v4908, %v4909
  %v4911 = vrot.slane %v4910, 1
  %v4912 = vadd.f32 %v4910, %v4911
  %v4913 = vrot.slane %v4875, 4
  %v4914 = vadd.f32 %v4875, %v4913
  %v4915 = vrot.slane %v4914, 2
  %v4916 = vadd.f32 %v4914, %v4915
  %v4917 = vrot.slane %v4916, 1
  %v4918 = vadd.f32 %v4916, %v4917
  %v4919 = vrot.slane %v4876, 4
  %v4920 = vadd.f32 %v4876, %v4919
  %v4921 = vrot.slane %v4920, 2
  %v4922 = vadd.f32 %v4920, %v4921
  %v4923 = vrot.slane %v4922, 1
  %v4924 = vadd.f32 %v4922, %v4923
  %v4933 = vsel %vm2469, %v4888, %v4882
  %v4934 = vsel %vm2471, %v4894, %v4933
  %v4935 = vsel %vm2473, %v4900, %v4934
  %v4936 = vsel %vm2475, %v4906, %v4935
  %v4937 = vsel %vm2477, %v4912, %v4936
  %v4938 = vsel %vm2479, %v4918, %v4937
  %v4939 = vsel %vm2481, %v4924, %v4938
  %s4941 = scalar_lea.vmem %s6, 8
  %4942 = vst [vmem:[%s4941] sm:$0xff] %v4939
  // Predicated region
  $region26: #{_biencoder_forward.1} parent=0 // pred_check
    _
  $region27: #{_biencoder_forward.1} parent=0 // pred_check_branch
    %4944 = sbr.rel (0) target = $region29
  $region28: #{_biencoder_forward.1} parent=0 // pred_region
    _
  $region29: #{_biencoder_forward.1} parent=0 // pred_fallthru
    _
  // Predicated region
  $region30: #{_biencoder_forward.1} parent=0 // pred_check
    _
  $region31: #{_biencoder_forward.1} parent=0 // pred_check_branch
    %4946 = sbr.rel (0) target = $region33
  $region32: #{_biencoder_forward.1} parent=0 // pred_region
    _
  $region33: #{_biencoder_forward.1} parent=0 // pred_fallthru
    _

</llo_original>
